<compile_context>
chip_gen: v5e
topology: v5e:2x2
jax: 0.10.0
libtpu: 0.0.40
codegen_flags: <defaults>
</compile_context>

<pallas_src>
import jax
import jax.numpy as jnp
from jax import lax
from jax.experimental import pallas as pl
from jax.experimental.pallas import tpu as pltpu
import numpy as np


# ----------------------------------------------------------------------------
# Kernel
# ----------------------------------------------------------------------------
def lstm_residual_kernel(x_ref, w_fused_ref, w_hh_ref, b_fused_ref,
                         out_ref, xg_scr, hs_scr, h_scr, c_scr):
    """Process one (batch-block, time-block) tile.

    x_ref      : (b_tile, t_tile, D)  input tile (batch-first)
    w_fused_ref: (D, 5H)              [W_ih | W_lin], gate order [i|f|o|g]
    w_hh_ref   : (H, 4H)              recurrent weight, gate order [i|f|o|g]
    b_fused_ref: (1, 5H)  f32         [b_ih + b_hh | b_lin]
    out_ref    : (b_tile, t_tile, H)  output tile
    xg_scr     : (t_tile, b_tile, 5H) f32   staged x-projection (time-major)
    hs_scr     : (t_tile, b_tile, H)  f32   per-step LSTM outputs (time-major)
    h_scr,c_scr: (b_tile, H) f32      LSTM state, persistent across time blocks
    """
    b_tile, t_tile, D = x_ref.shape
    H = h_scr.shape[-1]
    four_h = 4 * H
    mm_dtype = w_fused_ref.dtype          # bf16 (or f32) MXU inputs

    # Zero initial hidden / cell state at the first time block of each batch
    # block (PyTorch default when (h0, c0) is omitted).
    @pl.when(pl.program_id(1) == 0)
    def _init():
        h_scr[...] = jnp.zeros(h_scr.shape, h_scr.dtype)
        c_scr[...] = jnp.zeros(c_scr.shape, c_scr.dtype)

    # ---- hoisted x-projection: one MXU matmul for the whole tile -----------
    # (b_tile*t_tile, D) @ (D, 5H), f32 accumulation, fused bias added in f32.
    x2 = x_ref[...].astype(mm_dtype).reshape(b_tile * t_tile, D)
    xg = jnp.dot(x2, w_fused_ref[...], preferred_element_type=jnp.float32)
    xg = xg + b_fused_ref[...].astype(jnp.float32)
    xg = xg.reshape(b_tile, t_tile, 5 * H)

    # Stage into a time-major VMEM scratch so each recurrence step is a single
    # dense leading-axis load (prologue cost, off the serial critical path).
    for b in range(b_tile):               # static, small
        xg_scr[:, b, :] = xg[b]

    w_hh = w_hh_ref[...]                  # resident, reused every step
    # TODO(synk): for tiny batch, pin W_hh in the MXU weight registers via
    # pltpu.matmul_push_rhs / matmul_acc_lhs instead of re-streaming it.

    # ---- serial recurrence over the tile ------------------------------------
    def step(t, carry):
        h, c = carry
        row = xg_scr[t]                   # (b_tile, 5H) dense load
        gates = row[:, :four_h] + jnp.dot(
            h.astype(mm_dtype), w_hh, preferred_element_type=jnp.float32)
        # fused gate order [i | f | o | g]: one contiguous sigmoid stream.
        sig = jax.nn.sigmoid(gates[:, :3 * H])
        i_g = sig[:, 0 * H:1 * H]
        f_g = sig[:, 1 * H:2 * H]
        o_g = sig[:, 2 * H:3 * H]
        g_g = jnp.tanh(gates[:, 3 * H:four_h])
        c_new = f_g * c + i_g * g_g
        h_new = o_g * jnp.tanh(c_new)
        hs_scr[t] = h_new                 # dense (b_tile, H) slab store
        return h_new, c_new

    h, c = lax.fori_loop(0, t_tile, step, (h_scr[...], c_scr[...]),
                         unroll=min(t_tile, 8))
    h_scr[...] = h
    c_scr[...] = c

    # ---- epilogue: LSTM out + residual, dense (t_tile, H) stores ------------
    # Dropout is identity in eval mode.
    # TODO(synk): training-mode dropout (pltpu.prng_* Bernoulli mask) not implemented.
    for b in range(b_tile):               # static, small
        out_ref[b] = (hs_scr[:, b, :] + xg_scr[:, b, four_h:]).astype(out_ref.dtype)


# ----------------------------------------------------------------------------
# Wrapper helpers
# ----------------------------------------------------------------------------
def _reorder_gates(w):
    """Reorder gate columns [i|f|g|o] (PyTorch) -> [i|f|o|g] along last axis."""
    H = w.shape[-1] // 4
    return jnp.concatenate([w[..., :2 * H], w[..., 3 * H:], w[..., 2 * H:3 * H]],
                           axis=-1)


def _vmem_capacity_bytes():
    try:
        return int(pltpu.get_tpu_info().vmem_capacity_bytes)
    except Exception:
        return 64 * 1024 * 1024           # conservative (v7x per-core VMEM)


def _estimate_vmem_bytes(b_tile, t_tile, D, H, x_itemsize, mm_itemsize):
    tile_in = b_tile * t_tile * D * x_itemsize      # x tile
    tile_out = b_tile * t_tile * H * x_itemsize     # out tile
    weights = (D * 5 * H + H * 4 * H) * mm_itemsize + 5 * H * 4
    scratch = 4 * (t_tile * b_tile * 6 * H + 2 * b_tile * H)   # xg + hs + h + c
    return 2 * (tile_in + tile_out) + weights + scratch        # I/O double-buffered


def _choose_t_tile(T, cap, b_tile, D, H, x_itemsize, mm_itemsize, step, target):
    """Largest step-aligned tile dividing T that fits ~70% of VMEM."""
    budget = int(0.7 * cap)
    cands = {tt for tt in range(step, min(target, T) + 1, step) if T % tt == 0}
    if T <= target:
        cands.add(T)
    for tt in sorted(cands, reverse=True):
        if _estimate_vmem_bytes(b_tile, tt, D, H, x_itemsize, mm_itemsize) <= budget:
            return tt
    return min(cands) if cands else T


# ----------------------------------------------------------------------------
# Public forward
# ----------------------------------------------------------------------------
def lstm_residual_block(x, params, *, b_tile=None, t_tile=None,
                        matmul_dtype=jnp.bfloat16):
    """x: (B, T, D); returns (B, T, H). Eval-mode forward of LSTMResidualBlock."""
    B, T, D = x.shape
    H = params["w_hh"].shape[0]            # w_hh stored (H, 4H), pre-transposed

    cap = _vmem_capacity_bytes()
    x_itemsize = np.dtype(x.dtype).itemsize
    mm_itemsize = np.dtype(matmul_dtype).itemsize

    if b_tile is None:
        b_tile = B
    assert B % b_tile == 0, "batch tile must divide batch"

    if t_tile is None:
        # bigger time tiles on v5e/v6e (128 MiB VMEM), smaller on v7x (64 MiB)
        target = 128 if cap >= 96 * 1024 * 1024 else 64
        step = 16 if x.dtype == jnp.bfloat16 else 8
        t_tile = _choose_t_tile(T, cap, b_tile, D, H, x_itemsize, mm_itemsize,
                                step, target)
    assert T % t_tile == 0, "time tile must divide sequence length"

    # Fuse the two x-projections and all biases once, outside the kernel,
    # with gate columns reordered to [i|f|o|g].
    w_ih = _reorder_gates(params["w_ih"])
    w_hh = _reorder_gates(params["w_hh"]).astype(matmul_dtype)        # (H, 4H)
    b_lstm = _reorder_gates(params["b_ih"] + params["b_hh"])
    w_fused = jnp.concatenate([w_ih, params["w_lin"]], axis=1).astype(matmul_dtype)
    b_fused = jnp.concatenate([b_lstm, params["b_lin"]], axis=1).astype(jnp.float32)

    est = _estimate_vmem_bytes(b_tile, t_tile, D, H, x_itemsize, mm_itemsize)
    vmem_limit = int(max(32 * 1024 * 1024,
                         min(2 * est, int(0.85 * cap)),
                         est + (8 << 20)))

    grid = (B // b_tile, T // t_tile)

    def build_and_run(single_buffer_consts):
        def const_spec(shape):
            index_map = lambda b, t: (0,) * len(shape)
            if single_buffer_consts and hasattr(pl, "Buffered"):
                # grid-invariant operands: don't double-buffer them.
                return pl.BlockSpec(shape, index_map, pipeline_mode=pl.Buffered(1))
            return pl.BlockSpec(shape, index_map)

        call = pl.pallas_call(
            lstm_residual_kernel,
            out_shape=jax.ShapeDtypeStruct((B, T, H), x.dtype),
            grid_spec=pltpu.PrefetchScalarGridSpec(
                num_scalar_prefetch=0,
                grid=grid,
                in_specs=[
                    pl.BlockSpec((b_tile, t_tile, D), lambda b, t: (b, t, 0)),
                    const_spec((D, 5 * H)),          # [W_ih | W_lin]
                    const_spec((H, 4 * H)),          # W_hh
                    const_spec((1, 5 * H)),          # fused bias
                ],
                out_specs=pl.BlockSpec((b_tile, t_tile, H), lambda b, t: (b, t, 0)),
                scratch_shapes=[
                    pltpu.VMEM((t_tile, b_tile, 5 * H), jnp.float32),  # xg
                    pltpu.VMEM((t_tile, b_tile, H), jnp.float32),      # hs
                    pltpu.VMEM((b_tile, H), jnp.float32),              # h
                    pltpu.VMEM((b_tile, H), jnp.float32),              # c
                ],
            ),
            compiler_params=pltpu.CompilerParams(
                # batch is independent (megacore-parallel); time is a recurrence.
                dimension_semantics=("parallel", "arbitrary"),
                vmem_limit_bytes=vmem_limit,
            ),
        )
        return call(x, w_fused, w_hh, b_fused)

    try:
        return build_and_run(True)
    except Exception:
        # Fallback: some jax/Mosaic versions reject single-buffered pipeline_mode.
        return build_and_run(False)


# ----------------------------------------------------------------------------
# Parameter init + pure-JAX reference (PyTorch eval-mode semantics)
# ----------------------------------------------------------------------------
def init_params(key, input_size, hidden_size):
    """nn.LSTM / nn.Linear-shaped params, uniform(-k, k), stored pre-transposed
    for the x @ W layout. Gate column order here is PyTorch's [i|f|g|o]."""
    D, H = input_size, hidden_size
    k_lstm = 1.0 / np.sqrt(H)
    k_lin = 1.0 / np.sqrt(D)
    keys = jax.random.split(key, 6)
    w_ih = jax.random.uniform(keys[0], (D, 4 * H), jnp.float32, -k_lstm, k_lstm)
    w_hh = jax.random.uniform(keys[1], (H, 4 * H), jnp.float32, -k_lstm, k_lstm)
    b_ih = jax.random.uniform(keys[2], (1, 4 * H), jnp.float32, -k_lstm, k_lstm)
    b_hh = jax.random.uniform(keys[3], (1, 4 * H), jnp.float32, -k_lstm, k_lstm)
    w_lin = jax.random.uniform(keys[4], (D, H), jnp.float32, -k_lin, k_lin)
    b_lin = jax.random.uniform(keys[5], (1, H), jnp.float32, -k_lin, k_lin)
    return dict(w_ih=w_ih, w_hh=w_hh, b_ih=b_ih, b_hh=b_hh,
                w_lin=w_lin, b_lin=b_lin)


def reference_forward(x, params):
    """Pure-JAX reference of the PyTorch forward (eval mode, f32)."""
    B, T, D = x.shape
    H = params["w_hh"].shape[1] // 4

    def cell(carry, x_t):
        h, c = carry
        gates = (x_t @ params["w_ih"] + params["b_ih"]
                 + h @ params["w_hh"] + params["b_hh"])
        i = jax.nn.sigmoid(gates[:, 0 * H:1 * H])
        f = jax.nn.sigmoid(gates[:, 1 * H:2 * H])
        g = jnp.tanh(gates[:, 2 * H:3 * H])
        o = jax.nn.sigmoid(gates[:, 3 * H:4 * H])
        c_new = f * c + i * g
        h_new = o * jnp.tanh(c_new)
        return (h_new, c_new), h_new

    init = (jnp.zeros((B, H), jnp.float32), jnp.zeros((B, H), jnp.float32))
    _, hs = lax.scan(cell, init, jnp.transpose(x, (1, 0, 2)))
    lstm_out = jnp.transpose(hs, (1, 0, 2))               # (B, T, H)
    resid = x @ params["w_lin"] + params["b_lin"]          # (B, T, H)
    return lstm_out + resid


# ----------------------------------------------------------------------------
# Demo / self-test
# ----------------------------------------------------------------------------
if __name__ == "__main__":
    B, T, D, H = 8, 16, 16, 32     # grid (2 batch blocks x 2 time blocks)

    key = jax.random.PRNGKey(0)
    k_x, k_p = jax.random.split(key)
    x = jax.random.normal(k_x, (B, T, D), jnp.float32)
    params = init_params(k_p, D, H)

    ref = jax.block_until_ready(reference_forward(x, params))

    # f32 MXU path: tight check against the f32 reference.
    out_f32 = jax.block_until_ready(
        lstm_residual_block(x, params, b_tile=4, t_tile=8,
                            matmul_dtype=jnp.float32))
    assert out_f32.shape == (B, T, H)
    assert np.allclose(np.asarray(out_f32), np.asarray(ref),
                       atol=1e-4, rtol=1e-4), "f32 Pallas kernel mismatch"

    # bf16 MXU path (production default): looser tolerance (bf16 matmul inputs,
    # f32 accumulation / state).
    out_bf16 = jax.block_until_ready(
        lstm_residual_block(x, params, b_tile=4, t_tile=8))
    assert out_bf16.shape == (B, T, H)
    assert np.allclose(np.asarray(out_bf16, dtype=np.float32), np.asarray(ref),
                       atol=7e-2, rtol=7e-2), "bf16 Pallas kernel mismatch"

    print("KERNEL_OK")
</pallas_src>

<mosaic_0001>
module attributes {stable_mosaic.version = 11 : i64} {
  func.func @lstm_residual_kernel(%arg0: i32, %arg1: i32, %arg2: memref<4x8x16xf32, #tpu.memory_space<vmem>>, %arg3: memref<16x160xf32, #tpu.memory_space<vmem>>, %arg4: memref<32x128xf32, #tpu.memory_space<vmem>>, %arg5: memref<1x160xf32, #tpu.memory_space<vmem>>, %arg6: memref<4x8x32xf32, #tpu.memory_space<vmem>>, %arg7: memref<8x4x160xf32, #tpu.memory_space<vmem>>, %arg8: memref<8x4x32xf32, #tpu.memory_space<vmem>>, %arg9: memref<4x32xf32, #tpu.memory_space<vmem>>, %arg10: memref<4x32xf32, #tpu.memory_space<vmem>>) attributes {dimension_semantics = [#tpu.dimension_semantics<parallel>, #tpu.dimension_semantics<arbitrary>], iteration_bounds = array<i64: 2, 2>, scalar_prefetch = 0 : i64, scratch_operands = 4 : i64, tpu.core_type = #tpu.core_type<tc>, window_params = [{transform_indices = @transform_0, window_bounds = array<i64: 4, 8, 16>}, {pipeline_mode = #tpu.pipeline_mode<synchronous>, transform_indices = @transform_1, window_bounds = array<i64: 16, 160>}, {pipeline_mode = #tpu.pipeline_mode<synchronous>, transform_indices = @transform_2, window_bounds = array<i64: 32, 128>}, {pipeline_mode = #tpu.pipeline_mode<synchronous>, transform_indices = @transform_3, window_bounds = array<i64: 1, 160>}, {transform_indices = @transform_4, window_bounds = array<i64: 4, 8, 32>}]} {
    %c0_i32 = arith.constant 0 : i32
    %0 = arith.cmpi eq, %arg1, %c0_i32 : i32
    %1 = arith.extui %0 : i1 to i32
    %c0_i32_0 = arith.constant 0 : i32
    %2 = arith.cmpi ne, %1, %c0_i32_0 : i32
    scf.if %2 {
      %cst_110 = arith.constant 0.000000e+00 : f32
      %276 = vector.broadcast %cst_110 : f32 to vector<4x32xf32>
      %c0_111 = arith.constant 0 : index
      %c0_112 = arith.constant 0 : index
      %277 = vector.load %arg9[%c0_111, %c0_112] : memref<4x32xf32, #tpu.memory_space<vmem>>, vector<4x32xf32>
      tpu.vector_store %arg9[%c0_111, %c0_112], %276 {strides = array<i32>} : memref<4x32xf32, #tpu.memory_space<vmem>>, vector<4x32xf32>,
      %cst_113 = arith.constant 0.000000e+00 : f32
      %278 = vector.broadcast %cst_113 : f32 to vector<4x32xf32>
      %c0_114 = arith.constant 0 : index
      %c0_115 = arith.constant 0 : index
      %279 = vector.load %arg10[%c0_114, %c0_115] : memref<4x32xf32, #tpu.memory_space<vmem>>, vector<4x32xf32>
      tpu.vector_store %arg10[%c0_114, %c0_115], %278 {strides = array<i32>} : memref<4x32xf32, #tpu.memory_space<vmem>>, vector<4x32xf32>,
    } else {
    }
    %c0 = arith.constant 0 : index
    %c0_1 = arith.constant 0 : index
    %c0_2 = arith.constant 0 : index
    %3 = vector.load %arg2[%c0, %c0_1, %c0_2] : memref<4x8x16xf32, #tpu.memory_space<vmem>>, vector<4x8x16xf32>
    %4 = vector.shape_cast %3 : vector<4x8x16xf32> to vector<32x16xf32>
    %c0_3 = arith.constant 0 : index
    %c0_4 = arith.constant 0 : index
    %5 = vector.load %arg3[%c0_3, %c0_4] : memref<16x160xf32, #tpu.memory_space<vmem>>, vector<16x160xf32>
    %cst = arith.constant dense<0.000000e+00> : vector<32x160xf32>
    %6 = tpu.matmul %4, %5, %cst {dimension_numbers = #tpu.dot_dimension_numbers<[1], [0], [0], [1], [0, 0, 1, 1], [], []>} : vector<32x16xf32>, vector<16x160xf32>, vector<32x160xf32> -> vector<32x160xf32>
    %c0_5 = arith.constant 0 : index
    %c0_6 = arith.constant 0 : index
    %7 = vector.load %arg5[%c0_5, %c0_6] : memref<1x160xf32, #tpu.memory_space<vmem>>, vector<1x160xf32>
    %8 = vector.broadcast %7 : vector<1x160xf32> to vector<32x160xf32>
    %9 = arith.addf %6, %8 : vector<32x160xf32>
    %10 = vector.shape_cast %9 : vector<32x160xf32> to vector<4x8x160xf32>
    %11 = vector.extract_strided_slice %10 {offsets = [0, 0, 0], sizes = [1, 8, 160], strides = [1, 1, 1]} : vector<4x8x160xf32> to vector<1x8x160xf32>
    %12 = vector.shape_cast %11 : vector<1x8x160xf32> to vector<8x160xf32>
    %c0_7 = arith.constant 0 : index
    %c0_8 = arith.constant 0 : index
    %c0_9 = arith.constant 0 : index
    %13 = vector.load %arg7[%c0_7, %c0_8, %c0_9] : memref<8x4x160xf32, #tpu.memory_space<vmem>>, vector<8x1x160xf32>
    %14 = vector.shape_cast %13 : vector<8x1x160xf32> to vector<8x160xf32>
    %15 = vector.shape_cast %12 : vector<8x160xf32> to vector<8x1x160xf32>
    tpu.vector_store %arg7[%c0_7, %c0_8, %c0_9], %15 {strides = array<i32>} : memref<8x4x160xf32, #tpu.memory_space<vmem>>, vector<8x1x160xf32>,
    %16 = vector.extract_strided_slice %10 {offsets = [1, 0, 0], sizes = [1, 8, 160], strides = [1, 1, 1]} : vector<4x8x160xf32> to vector<1x8x160xf32>
    %17 = vector.shape_cast %16 : vector<1x8x160xf32> to vector<8x160xf32>
    %c0_10 = arith.constant 0 : index
    %c1 = arith.constant 1 : index
    %c0_11 = arith.constant 0 : index
    %18 = vector.load %arg7[%c0_10, %c1, %c0_11] : memref<8x4x160xf32, #tpu.memory_space<vmem>>, vector<8x1x160xf32>
    %19 = vector.shape_cast %18 : vector<8x1x160xf32> to vector<8x160xf32>
    %20 = vector.shape_cast %17 : vector<8x160xf32> to vector<8x1x160xf32>
    tpu.vector_store %arg7[%c0_10, %c1, %c0_11], %20 {strides = array<i32>} : memref<8x4x160xf32, #tpu.memory_space<vmem>>, vector<8x1x160xf32>,
    %21 = vector.extract_strided_slice %10 {offsets = [2, 0, 0], sizes = [1, 8, 160], strides = [1, 1, 1]} : vector<4x8x160xf32> to vector<1x8x160xf32>
    %22 = vector.shape_cast %21 : vector<1x8x160xf32> to vector<8x160xf32>
    %c0_12 = arith.constant 0 : index
    %c2 = arith.constant 2 : index
    %c0_13 = arith.constant 0 : index
    %23 = vector.load %arg7[%c0_12, %c2, %c0_13] : memref<8x4x160xf32, #tpu.memory_space<vmem>>, vector<8x1x160xf32>
    %24 = vector.shape_cast %23 : vector<8x1x160xf32> to vector<8x160xf32>
    %25 = vector.shape_cast %22 : vector<8x160xf32> to vector<8x1x160xf32>
    tpu.vector_store %arg7[%c0_12, %c2, %c0_13], %25 {strides = array<i32>} : memref<8x4x160xf32, #tpu.memory_space<vmem>>, vector<8x1x160xf32>,
    %26 = vector.extract_strided_slice %10 {offsets = [3, 0, 0], sizes = [1, 8, 160], strides = [1, 1, 1]} : vector<4x8x160xf32> to vector<1x8x160xf32>
    %27 = vector.shape_cast %26 : vector<1x8x160xf32> to vector<8x160xf32>
    %c0_14 = arith.constant 0 : index
    %c3 = arith.constant 3 : index
    %c0_15 = arith.constant 0 : index
    %28 = vector.load %arg7[%c0_14, %c3, %c0_15] : memref<8x4x160xf32, #tpu.memory_space<vmem>>, vector<8x1x160xf32>
    %29 = vector.shape_cast %28 : vector<8x1x160xf32> to vector<8x160xf32>
    %30 = vector.shape_cast %27 : vector<8x160xf32> to vector<8x1x160xf32>
    tpu.vector_store %arg7[%c0_14, %c3, %c0_15], %30 {strides = array<i32>} : memref<8x4x160xf32, #tpu.memory_space<vmem>>, vector<8x1x160xf32>,
    %c0_16 = arith.constant 0 : index
    %c0_17 = arith.constant 0 : index
    %31 = vector.load %arg4[%c0_16, %c0_17] : memref<32x128xf32, #tpu.memory_space<vmem>>, vector<32x128xf32>
    %c0_18 = arith.constant 0 : index
    %c0_19 = arith.constant 0 : index
    %32 = vector.load %arg9[%c0_18, %c0_19] : memref<4x32xf32, #tpu.memory_space<vmem>>, vector<4x32xf32>
    %c0_20 = arith.constant 0 : index
    %c0_21 = arith.constant 0 : index
    %33 = vector.load %arg10[%c0_20, %c0_21] : memref<4x32xf32, #tpu.memory_space<vmem>>, vector<4x32xf32>
    %c0_i32_22 = arith.constant 0 : i32
    %34 = arith.index_cast %c0_i32_22 : i32 to index
    %c0_23 = arith.constant 0 : index
    %c0_24 = arith.constant 0 : index
    %35 = vector.load %arg7[%34, %c0_23, %c0_24] : memref<8x4x160xf32, #tpu.memory_space<vmem>>, vector<1x4x160xf32>
    %36 = vector.shape_cast %35 : vector<1x4x160xf32> to vector<4x160xf32>
    %37 = vector.extract_strided_slice %36 {offsets = [0, 0], sizes = [4, 128], strides = [1, 1]} : vector<4x160xf32> to vector<4x128xf32>
    %cst_25 = arith.constant dense<0.000000e+00> : vector<4x128xf32>
    %38 = tpu.matmul %32, %31, %cst_25 {dimension_numbers = #tpu.dot_dimension_numbers<[1], [0], [0], [1], [0, 0, 1, 1], [], []>} : vector<4x32xf32>, vector<32x128xf32>, vector<4x128xf32> -> vector<4x128xf32>
    %39 = arith.addf %37, %38 : vector<4x128xf32>
    %40 = vector.extract_strided_slice %39 {offsets = [0, 0], sizes = [4, 96], strides = [1, 1]} : vector<4x128xf32> to vector<4x96xf32>
    %41 = arith.negf %40 : vector<4x96xf32>
    %42 = math.exp %41 : vector<4x96xf32>
    %cst_26 = arith.constant 1.000000e+00 : f32
    %43 = vector.broadcast %cst_26 : f32 to vector<4x96xf32>
    %44 = arith.addf %43, %42 : vector<4x96xf32>
    %45 = arith.divf %43, %44 : vector<4x96xf32>
    %46 = vector.extract_strided_slice %45 {offsets = [0, 0], sizes = [4, 32], strides = [1, 1]} : vector<4x96xf32> to vector<4x32xf32>
    %47 = vector.extract_strided_slice %45 {offsets = [0, 32], sizes = [4, 32], strides = [1, 1]} : vector<4x96xf32> to vector<4x32xf32>
    %48 = vector.extract_strided_slice %45 {offsets = [0, 64], sizes = [4, 32], strides = [1, 1]} : vector<4x96xf32> to vector<4x32xf32>
    %49 = vector.extract_strided_slice %39 {offsets = [0, 96], sizes = [4, 32], strides = [1, 1]} : vector<4x128xf32> to vector<4x32xf32>
    %50 = math.tanh %49 : vector<4x32xf32>
    %51 = arith.mulf %47, %33 : vector<4x32xf32>
    %52 = arith.mulf %46, %50 : vector<4x32xf32>
    %53 = arith.addf %51, %52 : vector<4x32xf32>
    %54 = math.tanh %53 : vector<4x32xf32>
    %55 = arith.mulf %48, %54 : vector<4x32xf32>
    %56 = arith.index_cast %c0_i32_22 : i32 to index
    %c0_27 = arith.constant 0 : index
    %c0_28 = arith.constant 0 : index
    %57 = vector.load %arg8[%56, %c0_27, %c0_28] : memref<8x4x32xf32, #tpu.memory_space<vmem>>, vector<1x4x32xf32>
    %58 = vector.shape_cast %57 : vector<1x4x32xf32> to vector<4x32xf32>
    %59 = vector.shape_cast %55 : vector<4x32xf32> to vector<1x4x32xf32>
    tpu.vector_store %arg8[%56, %c0_27, %c0_28], %59 {strides = array<i32>} : memref<8x4x32xf32, #tpu.memory_space<vmem>>, vector<1x4x32xf32>,
    %c1_i32 = arith.constant 1 : i32
    %60 = arith.index_cast %c1_i32 : i32 to index
    %c0_29 = arith.constant 0 : index
    %c0_30 = arith.constant 0 : index
    %61 = vector.load %arg7[%60, %c0_29, %c0_30] : memref<8x4x160xf32, #tpu.memory_space<vmem>>, vector<1x4x160xf32>
    %62 = vector.shape_cast %61 : vector<1x4x160xf32> to vector<4x160xf32>
    %63 = vector.extract_strided_slice %62 {offsets = [0, 0], sizes = [4, 128], strides = [1, 1]} : vector<4x160xf32> to vector<4x128xf32>
    %cst_31 = arith.constant dense<0.000000e+00> : vector<4x128xf32>
    %64 = tpu.matmul %55, %31, %cst_31 {dimension_numbers = #tpu.dot_dimension_numbers<[1], [0], [0], [1], [0, 0, 1, 1], [], []>} : vector<4x32xf32>, vector<32x128xf32>, vector<4x128xf32> -> vector<4x128xf32>
    %65 = arith.addf %63, %64 : vector<4x128xf32>
    %66 = vector.extract_strided_slice %65 {offsets = [0, 0], sizes = [4, 96], strides = [1, 1]} : vector<4x128xf32> to vector<4x96xf32>
    %67 = arith.negf %66 : vector<4x96xf32>
    %68 = math.exp %67 : vector<4x96xf32>
    %cst_32 = arith.constant 1.000000e+00 : f32
    %69 = vector.broadcast %cst_32 : f32 to vector<4x96xf32>
    %70 = arith.addf %69, %68 : vector<4x96xf32>
    %71 = arith.divf %69, %70 : vector<4x96xf32>
    %72 = vector.extract_strided_slice %71 {offsets = [0, 0], sizes = [4, 32], strides = [1, 1]} : vector<4x96xf32> to vector<4x32xf32>
    %73 = vector.extract_strided_slice %71 {offsets = [0, 32], sizes = [4, 32], strides = [1, 1]} : vector<4x96xf32> to vector<4x32xf32>
    %74 = vector.extract_strided_slice %71 {offsets = [0, 64], sizes = [4, 32], strides = [1, 1]} : vector<4x96xf32> to vector<4x32xf32>
    %75 = vector.extract_strided_slice %65 {offsets = [0, 96], sizes = [4, 32], strides = [1, 1]} : vector<4x128xf32> to vector<4x32xf32>
    %76 = math.tanh %75 : vector<4x32xf32>
    %77 = arith.mulf %73, %53 : vector<4x32xf32>
    %78 = arith.mulf %72, %76 : vector<4x32xf32>
    %79 = arith.addf %77, %78 : vector<4x32xf32>
    %80 = math.tanh %79 : vector<4x32xf32>
    %81 = arith.mulf %74, %80 : vector<4x32xf32>
    %82 = arith.index_cast %c1_i32 : i32 to index
    %c0_33 = arith.constant 0 : index
    %c0_34 = arith.constant 0 : index
    %83 = vector.load %arg8[%82, %c0_33, %c0_34] : memref<8x4x32xf32, #tpu.memory_space<vmem>>, vector<1x4x32xf32>
    %84 = vector.shape_cast %83 : vector<1x4x32xf32> to vector<4x32xf32>
    %85 = vector.shape_cast %81 : vector<4x32xf32> to vector<1x4x32xf32>
    tpu.vector_store %arg8[%82, %c0_33, %c0_34], %85 {strides = array<i32>} : memref<8x4x32xf32, #tpu.memory_space<vmem>>, vector<1x4x32xf32>,
    %c2_i32 = arith.constant 2 : i32
    %86 = arith.index_cast %c2_i32 : i32 to index
    %c0_35 = arith.constant 0 : index
    %c0_36 = arith.constant 0 : index
    %87 = vector.load %arg7[%86, %c0_35, %c0_36] : memref<8x4x160xf32, #tpu.memory_space<vmem>>, vector<1x4x160xf32>
    %88 = vector.shape_cast %87 : vector<1x4x160xf32> to vector<4x160xf32>
    %89 = vector.extract_strided_slice %88 {offsets = [0, 0], sizes = [4, 128], strides = [1, 1]} : vector<4x160xf32> to vector<4x128xf32>
    %cst_37 = arith.constant dense<0.000000e+00> : vector<4x128xf32>
    %90 = tpu.matmul %81, %31, %cst_37 {dimension_numbers = #tpu.dot_dimension_numbers<[1], [0], [0], [1], [0, 0, 1, 1], [], []>} : vector<4x32xf32>, vector<32x128xf32>, vector<4x128xf32> -> vector<4x128xf32>
    %91 = arith.addf %89, %90 : vector<4x128xf32>
    %92 = vector.extract_strided_slice %91 {offsets = [0, 0], sizes = [4, 96], strides = [1, 1]} : vector<4x128xf32> to vector<4x96xf32>
    %93 = arith.negf %92 : vector<4x96xf32>
    %94 = math.exp %93 : vector<4x96xf32>
    %cst_38 = arith.constant 1.000000e+00 : f32
    %95 = vector.broadcast %cst_38 : f32 to vector<4x96xf32>
    %96 = arith.addf %95, %94 : vector<4x96xf32>
    %97 = arith.divf %95, %96 : vector<4x96xf32>
    %98 = vector.extract_strided_slice %97 {offsets = [0, 0], sizes = [4, 32], strides = [1, 1]} : vector<4x96xf32> to vector<4x32xf32>
    %99 = vector.extract_strided_slice %97 {offsets = [0, 32], sizes = [4, 32], strides = [1, 1]} : vector<4x96xf32> to vector<4x32xf32>
    %100 = vector.extract_strided_slice %97 {offsets = [0, 64], sizes = [4, 32], strides = [1, 1]} : vector<4x96xf32> to vector<4x32xf32>
    %101 = vector.extract_strided_slice %91 {offsets = [0, 96], sizes = [4, 32], strides = [1, 1]} : vector<4x128xf32> to vector<4x32xf32>
    %102 = math.tanh %101 : vector<4x32xf32>
    %103 = arith.mulf %99, %79 : vector<4x32xf32>
    %104 = arith.mulf %98, %102 : vector<4x32xf32>
    %105 = arith.addf %103, %104 : vector<4x32xf32>
    %106 = math.tanh %105 : vector<4x32xf32>
    %107 = arith.mulf %100, %106 : vector<4x32xf32>
    %108 = arith.index_cast %c2_i32 : i32 to index
    %c0_39 = arith.constant 0 : index
    %c0_40 = arith.constant 0 : index
    %109 = vector.load %arg8[%108, %c0_39, %c0_40] : memref<8x4x32xf32, #tpu.memory_space<vmem>>, vector<1x4x32xf32>
    %110 = vector.shape_cast %109 : vector<1x4x32xf32> to vector<4x32xf32>
    %111 = vector.shape_cast %107 : vector<4x32xf32> to vector<1x4x32xf32>
    tpu.vector_store %arg8[%108, %c0_39, %c0_40], %111 {strides = array<i32>} : memref<8x4x32xf32, #tpu.memory_space<vmem>>, vector<1x4x32xf32>,
    %c3_i32 = arith.constant 3 : i32
    %112 = arith.index_cast %c3_i32 : i32 to index
    %c0_41 = arith.constant 0 : index
    %c0_42 = arith.constant 0 : index
    %113 = vector.load %arg7[%112, %c0_41, %c0_42] : memref<8x4x160xf32, #tpu.memory_space<vmem>>, vector<1x4x160xf32>
    %114 = vector.shape_cast %113 : vector<1x4x160xf32> to vector<4x160xf32>
    %115 = vector.extract_strided_slice %114 {offsets = [0, 0], sizes = [4, 128], strides = [1, 1]} : vector<4x160xf32> to vector<4x128xf32>
    %cst_43 = arith.constant dense<0.000000e+00> : vector<4x128xf32>
    %116 = tpu.matmul %107, %31, %cst_43 {dimension_numbers = #tpu.dot_dimension_numbers<[1], [0], [0], [1], [0, 0, 1, 1], [], []>} : vector<4x32xf32>, vector<32x128xf32>, vector<4x128xf32> -> vector<4x128xf32>
    %117 = arith.addf %115, %116 : vector<4x128xf32>
    %118 = vector.extract_strided_slice %117 {offsets = [0, 0], sizes = [4, 96], strides = [1, 1]} : vector<4x128xf32> to vector<4x96xf32>
    %119 = arith.negf %118 : vector<4x96xf32>
    %120 = math.exp %119 : vector<4x96xf32>
    %cst_44 = arith.constant 1.000000e+00 : f32
    %121 = vector.broadcast %cst_44 : f32 to vector<4x96xf32>
    %122 = arith.addf %121, %120 : vector<4x96xf32>
    %123 = arith.divf %121, %122 : vector<4x96xf32>
    %124 = vector.extract_strided_slice %123 {offsets = [0, 0], sizes = [4, 32], strides = [1, 1]} : vector<4x96xf32> to vector<4x32xf32>
    %125 = vector.extract_strided_slice %123 {offsets = [0, 32], sizes = [4, 32], strides = [1, 1]} : vector<4x96xf32> to vector<4x32xf32>
    %126 = vector.extract_strided_slice %123 {offsets = [0, 64], sizes = [4, 32], strides = [1, 1]} : vector<4x96xf32> to vector<4x32xf32>
    %127 = vector.extract_strided_slice %117 {offsets = [0, 96], sizes = [4, 32], strides = [1, 1]} : vector<4x128xf32> to vector<4x32xf32>
    %128 = math.tanh %127 : vector<4x32xf32>
    %129 = arith.mulf %125, %105 : vector<4x32xf32>
    %130 = arith.mulf %124, %128 : vector<4x32xf32>
    %131 = arith.addf %129, %130 : vector<4x32xf32>
    %132 = math.tanh %131 : vector<4x32xf32>
    %133 = arith.mulf %126, %132 : vector<4x32xf32>
    %134 = arith.index_cast %c3_i32 : i32 to index
    %c0_45 = arith.constant 0 : index
    %c0_46 = arith.constant 0 : index
    %135 = vector.load %arg8[%134, %c0_45, %c0_46] : memref<8x4x32xf32, #tpu.memory_space<vmem>>, vector<1x4x32xf32>
    %136 = vector.shape_cast %135 : vector<1x4x32xf32> to vector<4x32xf32>
    %137 = vector.shape_cast %133 : vector<4x32xf32> to vector<1x4x32xf32>
    tpu.vector_store %arg8[%134, %c0_45, %c0_46], %137 {strides = array<i32>} : memref<8x4x32xf32, #tpu.memory_space<vmem>>, vector<1x4x32xf32>,
    %c4_i32 = arith.constant 4 : i32
    %138 = arith.index_cast %c4_i32 : i32 to index
    %c0_47 = arith.constant 0 : index
    %c0_48 = arith.constant 0 : index
    %139 = vector.load %arg7[%138, %c0_47, %c0_48] : memref<8x4x160xf32, #tpu.memory_space<vmem>>, vector<1x4x160xf32>
    %140 = vector.shape_cast %139 : vector<1x4x160xf32> to vector<4x160xf32>
    %141 = vector.extract_strided_slice %140 {offsets = [0, 0], sizes = [4, 128], strides = [1, 1]} : vector<4x160xf32> to vector<4x128xf32>
    %cst_49 = arith.constant dense<0.000000e+00> : vector<4x128xf32>
    %142 = tpu.matmul %133, %31, %cst_49 {dimension_numbers = #tpu.dot_dimension_numbers<[1], [0], [0], [1], [0, 0, 1, 1], [], []>} : vector<4x32xf32>, vector<32x128xf32>, vector<4x128xf32> -> vector<4x128xf32>
    %143 = arith.addf %141, %142 : vector<4x128xf32>
    %144 = vector.extract_strided_slice %143 {offsets = [0, 0], sizes = [4, 96], strides = [1, 1]} : vector<4x128xf32> to vector<4x96xf32>
    %145 = arith.negf %144 : vector<4x96xf32>
    %146 = math.exp %145 : vector<4x96xf32>
    %cst_50 = arith.constant 1.000000e+00 : f32
    %147 = vector.broadcast %cst_50 : f32 to vector<4x96xf32>
    %148 = arith.addf %147, %146 : vector<4x96xf32>
    %149 = arith.divf %147, %148 : vector<4x96xf32>
    %150 = vector.extract_strided_slice %149 {offsets = [0, 0], sizes = [4, 32], strides = [1, 1]} : vector<4x96xf32> to vector<4x32xf32>
    %151 = vector.extract_strided_slice %149 {offsets = [0, 32], sizes = [4, 32], strides = [1, 1]} : vector<4x96xf32> to vector<4x32xf32>
    %152 = vector.extract_strided_slice %149 {offsets = [0, 64], sizes = [4, 32], strides = [1, 1]} : vector<4x96xf32> to vector<4x32xf32>
    %153 = vector.extract_strided_slice %143 {offsets = [0, 96], sizes = [4, 32], strides = [1, 1]} : vector<4x128xf32> to vector<4x32xf32>
    %154 = math.tanh %153 : vector<4x32xf32>
    %155 = arith.mulf %151, %131 : vector<4x32xf32>
    %156 = arith.mulf %150, %154 : vector<4x32xf32>
    %157 = arith.addf %155, %156 : vector<4x32xf32>
    %158 = math.tanh %157 : vector<4x32xf32>
    %159 = arith.mulf %152, %158 : vector<4x32xf32>
    %160 = arith.index_cast %c4_i32 : i32 to index
    %c0_51 = arith.constant 0 : index
    %c0_52 = arith.constant 0 : index
    %161 = vector.load %arg8[%160, %c0_51, %c0_52] : memref<8x4x32xf32, #tpu.memory_space<vmem>>, vector<1x4x32xf32>
    %162 = vector.shape_cast %161 : vector<1x4x32xf32> to vector<4x32xf32>
    %163 = vector.shape_cast %159 : vector<4x32xf32> to vector<1x4x32xf32>
    tpu.vector_store %arg8[%160, %c0_51, %c0_52], %163 {strides = array<i32>} : memref<8x4x32xf32, #tpu.memory_space<vmem>>, vector<1x4x32xf32>,
    %c5_i32 = arith.constant 5 : i32
    %164 = arith.index_cast %c5_i32 : i32 to index
    %c0_53 = arith.constant 0 : index
    %c0_54 = arith.constant 0 : index
    %165 = vector.load %arg7[%164, %c0_53, %c0_54] : memref<8x4x160xf32, #tpu.memory_space<vmem>>, vector<1x4x160xf32>
    %166 = vector.shape_cast %165 : vector<1x4x160xf32> to vector<4x160xf32>
    %167 = vector.extract_strided_slice %166 {offsets = [0, 0], sizes = [4, 128], strides = [1, 1]} : vector<4x160xf32> to vector<4x128xf32>
    %cst_55 = arith.constant dense<0.000000e+00> : vector<4x128xf32>
    %168 = tpu.matmul %159, %31, %cst_55 {dimension_numbers = #tpu.dot_dimension_numbers<[1], [0], [0], [1], [0, 0, 1, 1], [], []>} : vector<4x32xf32>, vector<32x128xf32>, vector<4x128xf32> -> vector<4x128xf32>
    %169 = arith.addf %167, %168 : vector<4x128xf32>
    %170 = vector.extract_strided_slice %169 {offsets = [0, 0], sizes = [4, 96], strides = [1, 1]} : vector<4x128xf32> to vector<4x96xf32>
    %171 = arith.negf %170 : vector<4x96xf32>
    %172 = math.exp %171 : vector<4x96xf32>
    %cst_56 = arith.constant 1.000000e+00 : f32
    %173 = vector.broadcast %cst_56 : f32 to vector<4x96xf32>
    %174 = arith.addf %173, %172 : vector<4x96xf32>
    %175 = arith.divf %173, %174 : vector<4x96xf32>
    %176 = vector.extract_strided_slice %175 {offsets = [0, 0], sizes = [4, 32], strides = [1, 1]} : vector<4x96xf32> to vector<4x32xf32>
    %177 = vector.extract_strided_slice %175 {offsets = [0, 32], sizes = [4, 32], strides = [1, 1]} : vector<4x96xf32> to vector<4x32xf32>
    %178 = vector.extract_strided_slice %175 {offsets = [0, 64], sizes = [4, 32], strides = [1, 1]} : vector<4x96xf32> to vector<4x32xf32>
    %179 = vector.extract_strided_slice %169 {offsets = [0, 96], sizes = [4, 32], strides = [1, 1]} : vector<4x128xf32> to vector<4x32xf32>
    %180 = math.tanh %179 : vector<4x32xf32>
    %181 = arith.mulf %177, %157 : vector<4x32xf32>
    %182 = arith.mulf %176, %180 : vector<4x32xf32>
    %183 = arith.addf %181, %182 : vector<4x32xf32>
    %184 = math.tanh %183 : vector<4x32xf32>
    %185 = arith.mulf %178, %184 : vector<4x32xf32>
    %186 = arith.index_cast %c5_i32 : i32 to index
    %c0_57 = arith.constant 0 : index
    %c0_58 = arith.constant 0 : index
    %187 = vector.load %arg8[%186, %c0_57, %c0_58] : memref<8x4x32xf32, #tpu.memory_space<vmem>>, vector<1x4x32xf32>
    %188 = vector.shape_cast %187 : vector<1x4x32xf32> to vector<4x32xf32>
    %189 = vector.shape_cast %185 : vector<4x32xf32> to vector<1x4x32xf32>
    tpu.vector_store %arg8[%186, %c0_57, %c0_58], %189 {strides = array<i32>} : memref<8x4x32xf32, #tpu.memory_space<vmem>>, vector<1x4x32xf32>,
    %c6_i32 = arith.constant 6 : i32
    %190 = arith.index_cast %c6_i32 : i32 to index
    %c0_59 = arith.constant 0 : index
    %c0_60 = arith.constant 0 : index
    %191 = vector.load %arg7[%190, %c0_59, %c0_60] : memref<8x4x160xf32, #tpu.memory_space<vmem>>, vector<1x4x160xf32>
    %192 = vector.shape_cast %191 : vector<1x4x160xf32> to vector<4x160xf32>
    %193 = vector.extract_strided_slice %192 {offsets = [0, 0], sizes = [4, 128], strides = [1, 1]} : vector<4x160xf32> to vector<4x128xf32>
    %cst_61 = arith.constant dense<0.000000e+00> : vector<4x128xf32>
    %194 = tpu.matmul %185, %31, %cst_61 {dimension_numbers = #tpu.dot_dimension_numbers<[1], [0], [0], [1], [0, 0, 1, 1], [], []>} : vector<4x32xf32>, vector<32x128xf32>, vector<4x128xf32> -> vector<4x128xf32>
    %195 = arith.addf %193, %194 : vector<4x128xf32>
    %196 = vector.extract_strided_slice %195 {offsets = [0, 0], sizes = [4, 96], strides = [1, 1]} : vector<4x128xf32> to vector<4x96xf32>
    %197 = arith.negf %196 : vector<4x96xf32>
    %198 = math.exp %197 : vector<4x96xf32>
    %cst_62 = arith.constant 1.000000e+00 : f32
    %199 = vector.broadcast %cst_62 : f32 to vector<4x96xf32>
    %200 = arith.addf %199, %198 : vector<4x96xf32>
    %201 = arith.divf %199, %200 : vector<4x96xf32>
    %202 = vector.extract_strided_slice %201 {offsets = [0, 0], sizes = [4, 32], strides = [1, 1]} : vector<4x96xf32> to vector<4x32xf32>
    %203 = vector.extract_strided_slice %201 {offsets = [0, 32], sizes = [4, 32], strides = [1, 1]} : vector<4x96xf32> to vector<4x32xf32>
    %204 = vector.extract_strided_slice %201 {offsets = [0, 64], sizes = [4, 32], strides = [1, 1]} : vector<4x96xf32> to vector<4x32xf32>
    %205 = vector.extract_strided_slice %195 {offsets = [0, 96], sizes = [4, 32], strides = [1, 1]} : vector<4x128xf32> to vector<4x32xf32>
    %206 = math.tanh %205 : vector<4x32xf32>
    %207 = arith.mulf %203, %183 : vector<4x32xf32>
    %208 = arith.mulf %202, %206 : vector<4x32xf32>
    %209 = arith.addf %207, %208 : vector<4x32xf32>
    %210 = math.tanh %209 : vector<4x32xf32>
    %211 = arith.mulf %204, %210 : vector<4x32xf32>
    %212 = arith.index_cast %c6_i32 : i32 to index
    %c0_63 = arith.constant 0 : index
    %c0_64 = arith.constant 0 : index
    %213 = vector.load %arg8[%212, %c0_63, %c0_64] : memref<8x4x32xf32, #tpu.memory_space<vmem>>, vector<1x4x32xf32>
    %214 = vector.shape_cast %213 : vector<1x4x32xf32> to vector<4x32xf32>
    %215 = vector.shape_cast %211 : vector<4x32xf32> to vector<1x4x32xf32>
    tpu.vector_store %arg8[%212, %c0_63, %c0_64], %215 {strides = array<i32>} : memref<8x4x32xf32, #tpu.memory_space<vmem>>, vector<1x4x32xf32>,
    %c7_i32 = arith.constant 7 : i32
    %216 = arith.index_cast %c7_i32 : i32 to index
    %c0_65 = arith.constant 0 : index
    %c0_66 = arith.constant 0 : index
    %217 = vector.load %arg7[%216, %c0_65, %c0_66] : memref<8x4x160xf32, #tpu.memory_space<vmem>>, vector<1x4x160xf32>
    %218 = vector.shape_cast %217 : vector<1x4x160xf32> to vector<4x160xf32>
    %219 = vector.extract_strided_slice %218 {offsets = [0, 0], sizes = [4, 128], strides = [1, 1]} : vector<4x160xf32> to vector<4x128xf32>
    %cst_67 = arith.constant dense<0.000000e+00> : vector<4x128xf32>
    %220 = tpu.matmul %211, %31, %cst_67 {dimension_numbers = #tpu.dot_dimension_numbers<[1], [0], [0], [1], [0, 0, 1, 1], [], []>} : vector<4x32xf32>, vector<32x128xf32>, vector<4x128xf32> -> vector<4x128xf32>
    %221 = arith.addf %219, %220 : vector<4x128xf32>
    %222 = vector.extract_strided_slice %221 {offsets = [0, 0], sizes = [4, 96], strides = [1, 1]} : vector<4x128xf32> to vector<4x96xf32>
    %223 = arith.negf %222 : vector<4x96xf32>
    %224 = math.exp %223 : vector<4x96xf32>
    %cst_68 = arith.constant 1.000000e+00 : f32
    %225 = vector.broadcast %cst_68 : f32 to vector<4x96xf32>
    %226 = arith.addf %225, %224 : vector<4x96xf32>
    %227 = arith.divf %225, %226 : vector<4x96xf32>
    %228 = vector.extract_strided_slice %227 {offsets = [0, 0], sizes = [4, 32], strides = [1, 1]} : vector<4x96xf32> to vector<4x32xf32>
    %229 = vector.extract_strided_slice %227 {offsets = [0, 32], sizes = [4, 32], strides = [1, 1]} : vector<4x96xf32> to vector<4x32xf32>
    %230 = vector.extract_strided_slice %227 {offsets = [0, 64], sizes = [4, 32], strides = [1, 1]} : vector<4x96xf32> to vector<4x32xf32>
    %231 = vector.extract_strided_slice %221 {offsets = [0, 96], sizes = [4, 32], strides = [1, 1]} : vector<4x128xf32> to vector<4x32xf32>
    %232 = math.tanh %231 : vector<4x32xf32>
    %233 = arith.mulf %229, %209 : vector<4x32xf32>
    %234 = arith.mulf %228, %232 : vector<4x32xf32>
    %235 = arith.addf %233, %234 : vector<4x32xf32>
    %236 = math.tanh %235 : vector<4x32xf32>
    %237 = arith.mulf %230, %236 : vector<4x32xf32>
    %238 = arith.index_cast %c7_i32 : i32 to index
    %c0_69 = arith.constant 0 : index
    %c0_70 = arith.constant 0 : index
    %239 = vector.load %arg8[%238, %c0_69, %c0_70] : memref<8x4x32xf32, #tpu.memory_space<vmem>>, vector<1x4x32xf32>
    %240 = vector.shape_cast %239 : vector<1x4x32xf32> to vector<4x32xf32>
    %241 = vector.shape_cast %237 : vector<4x32xf32> to vector<1x4x32xf32>
    tpu.vector_store %arg8[%238, %c0_69, %c0_70], %241 {strides = array<i32>} : memref<8x4x32xf32, #tpu.memory_space<vmem>>, vector<1x4x32xf32>,
    %c8_i32 = arith.constant 8 : i32
    %c0_71 = arith.constant 0 : index
    %c0_72 = arith.constant 0 : index
    %242 = vector.load %arg9[%c0_71, %c0_72] : memref<4x32xf32, #tpu.memory_space<vmem>>, vector<4x32xf32>
    tpu.vector_store %arg9[%c0_71, %c0_72], %237 {strides = array<i32>} : memref<4x32xf32, #tpu.memory_space<vmem>>, vector<4x32xf32>,
    %c0_73 = arith.constant 0 : index
    %c0_74 = arith.constant 0 : index
    %243 = vector.load %arg10[%c0_73, %c0_74] : memref<4x32xf32, #tpu.memory_space<vmem>>, vector<4x32xf32>
    tpu.vector_store %arg10[%c0_73, %c0_74], %235 {strides = array<i32>} : memref<4x32xf32, #tpu.memory_space<vmem>>, vector<4x32xf32>,
    %c0_75 = arith.constant 0 : index
    %c0_76 = arith.constant 0 : index
    %c0_77 = arith.constant 0 : index
    %244 = vector.load %arg8[%c0_75, %c0_76, %c0_77] : memref<8x4x32xf32, #tpu.memory_space<vmem>>, vector<8x1x32xf32>
    %245 = vector.shape_cast %244 : vector<8x1x32xf32> to vector<8x32xf32>
    %c0_78 = arith.constant 0 : index
    %c0_79 = arith.constant 0 : index
    %c128 = arith.constant 128 : index
    %246 = vector.load %arg7[%c0_78, %c0_79, %c128] : memref<8x4x160xf32, #tpu.memory_space<vmem>>, vector<8x1x32xf32>
    %247 = vector.shape_cast %246 : vector<8x1x32xf32> to vector<8x32xf32>
    %248 = arith.addf %245, %247 : vector<8x32xf32>
    %c0_80 = arith.constant 0 : index
    %c0_81 = arith.constant 0 : index
    %c0_82 = arith.constant 0 : index
    %249 = vector.load %arg6[%c0_80, %c0_81, %c0_82] : memref<4x8x32xf32, #tpu.memory_space<vmem>>, vector<1x8x32xf32>
    %250 = vector.shape_cast %249 : vector<1x8x32xf32> to vector<8x32xf32>
    %251 = vector.shape_cast %248 : vector<8x32xf32> to vector<1x8x32xf32>
    tpu.vector_store %arg6[%c0_80, %c0_81, %c0_82], %251 {strides = array<i32>} : memref<4x8x32xf32, #tpu.memory_space<vmem>>, vector<1x8x32xf32>,
    %c0_83 = arith.constant 0 : index
    %c1_84 = arith.constant 1 : index
    %c0_85 = arith.constant 0 : index
    %252 = vector.load %arg8[%c0_83, %c1_84, %c0_85] : memref<8x4x32xf32, #tpu.memory_space<vmem>>, vector<8x1x32xf32>
    %253 = vector.shape_cast %252 : vector<8x1x32xf32> to vector<8x32xf32>
    %c0_86 = arith.constant 0 : index
    %c1_87 = arith.constant 1 : index
    %c128_88 = arith.constant 128 : index
    %254 = vector.load %arg7[%c0_86, %c1_87, %c128_88] : memref<8x4x160xf32, #tpu.memory_space<vmem>>, vector<8x1x32xf32>
    %255 = vector.shape_cast %254 : vector<8x1x32xf32> to vector<8x32xf32>
    %256 = arith.addf %253, %255 : vector<8x32xf32>
    %c1_89 = arith.constant 1 : index
    %c0_90 = arith.constant 0 : index
    %c0_91 = arith.constant 0 : index
    %257 = vector.load %arg6[%c1_89, %c0_90, %c0_91] : memref<4x8x32xf32, #tpu.memory_space<vmem>>, vector<1x8x32xf32>
    %258 = vector.shape_cast %257 : vector<1x8x32xf32> to vector<8x32xf32>
    %259 = vector.shape_cast %256 : vector<8x32xf32> to vector<1x8x32xf32>
    tpu.vector_store %arg6[%c1_89, %c0_90, %c0_91], %259 {strides = array<i32>} : memref<4x8x32xf32, #tpu.memory_space<vmem>>, vector<1x8x32xf32>,
    %c0_92 = arith.constant 0 : index
    %c2_93 = arith.constant 2 : index
    %c0_94 = arith.constant 0 : index
    %260 = vector.load %arg8[%c0_92, %c2_93, %c0_94] : memref<8x4x32xf32, #tpu.memory_space<vmem>>, vector<8x1x32xf32>
    %261 = vector.shape_cast %260 : vector<8x1x32xf32> to vector<8x32xf32>
    %c0_95 = arith.constant 0 : index
    %c2_96 = arith.constant 2 : index
    %c128_97 = arith.constant 128 : index
    %262 = vector.load %arg7[%c0_95, %c2_96, %c128_97] : memref<8x4x160xf32, #tpu.memory_space<vmem>>, vector<8x1x32xf32>
    %263 = vector.shape_cast %262 : vector<8x1x32xf32> to vector<8x32xf32>
    %264 = arith.addf %261, %263 : vector<8x32xf32>
    %c2_98 = arith.constant 2 : index
    %c0_99 = arith.constant 0 : index
    %c0_100 = arith.constant 0 : index
    %265 = vector.load %arg6[%c2_98, %c0_99, %c0_100] : memref<4x8x32xf32, #tpu.memory_space<vmem>>, vector<1x8x32xf32>
    %266 = vector.shape_cast %265 : vector<1x8x32xf32> to vector<8x32xf32>
    %267 = vector.shape_cast %264 : vector<8x32xf32> to vector<1x8x32xf32>
    tpu.vector_store %arg6[%c2_98, %c0_99, %c0_100], %267 {strides = array<i32>} : memref<4x8x32xf32, #tpu.memory_space<vmem>>, vector<1x8x32xf32>,
    %c0_101 = arith.constant 0 : index
    %c3_102 = arith.constant 3 : index
    %c0_103 = arith.constant 0 : index
    %268 = vector.load %arg8[%c0_101, %c3_102, %c0_103] : memref<8x4x32xf32, #tpu.memory_space<vmem>>, vector<8x1x32xf32>
    %269 = vector.shape_cast %268 : vector<8x1x32xf32> to vector<8x32xf32>
    %c0_104 = arith.constant 0 : index
    %c3_105 = arith.constant 3 : index
    %c128_106 = arith.constant 128 : index
    %270 = vector.load %arg7[%c0_104, %c3_105, %c128_106] : memref<8x4x160xf32, #tpu.memory_space<vmem>>, vector<8x1x32xf32>
    %271 = vector.shape_cast %270 : vector<8x1x32xf32> to vector<8x32xf32>
    %272 = arith.addf %269, %271 : vector<8x32xf32>
    %c3_107 = arith.constant 3 : index
    %c0_108 = arith.constant 0 : index
    %c0_109 = arith.constant 0 : index
    %273 = vector.load %arg6[%c3_107, %c0_108, %c0_109] : memref<4x8x32xf32, #tpu.memory_space<vmem>>, vector<1x8x32xf32>
    %274 = vector.shape_cast %273 : vector<1x8x32xf32> to vector<8x32xf32>
    %275 = vector.shape_cast %272 : vector<8x32xf32> to vector<1x8x32xf32>
    tpu.vector_store %arg6[%c3_107, %c0_108, %c0_109], %275 {strides = array<i32>} : memref<4x8x32xf32, #tpu.memory_space<vmem>>, vector<1x8x32xf32>,
    return
  }
  func.func @transform_0(%arg0: i32, %arg1: i32) -> (i32, i32, i32) {
    %c0_i32 = arith.constant 0 : i32
    %c0_i32_0 = arith.constant 0 : i32
    return %arg0, %arg1, %c0_i32 : i32, i32, i32
  }
  func.func @transform_1(%arg0: i32, %arg1: i32) -> (i32, i32) {
    %c0_i32 = arith.constant 0 : i32
    %c0_i32_0 = arith.constant 0 : i32
    %c0_i32_1 = arith.constant 0 : i32
    return %c0_i32, %c0_i32_0 : i32, i32
  }
  func.func @transform_2(%arg0: i32, %arg1: i32) -> (i32, i32) {
    %c0_i32 = arith.constant 0 : i32
    %c0_i32_0 = arith.constant 0 : i32
    %c0_i32_1 = arith.constant 0 : i32
    return %c0_i32, %c0_i32_0 : i32, i32
  }
  func.func @transform_3(%arg0: i32, %arg1: i32) -> (i32, i32) {
    %c0_i32 = arith.constant 0 : i32
    %c0_i32_0 = arith.constant 0 : i32
    %c0_i32_1 = arith.constant 0 : i32
    return %c0_i32, %c0_i32_0 : i32, i32
  }
  func.func @transform_4(%arg0: i32, %arg1: i32) -> (i32, i32, i32) {
    %c0_i32 = arith.constant 0 : i32
    %c0_i32_0 = arith.constant 0 : i32
    return %arg0, %arg1, %c0_i32 : i32, i32, i32
  }
}

module attributes {stable_mosaic.version = 11 : i64} {
  func.func @lstm_residual_kernel(%arg0: i32, %arg1: i32, %arg2: memref<4x8x16xf32, #tpu.memory_space<vmem>>, %arg3: memref<16x160xf32, #tpu.memory_space<vmem>>, %arg4: memref<32x128xf32, #tpu.memory_space<vmem>>, %arg5: memref<1x160xf32, #tpu.memory_space<vmem>>, %arg6: memref<4x8x32xf32, #tpu.memory_space<vmem>>, %arg7: memref<8x4x160xf32, #tpu.memory_space<vmem>>, %arg8: memref<8x4x32xf32, #tpu.memory_space<vmem>>, %arg9: memref<4x32xf32, #tpu.memory_space<vmem>>, %arg10: memref<4x32xf32, #tpu.memory_space<vmem>>) attributes {dimension_semantics = [#tpu.dimension_semantics<parallel>, #tpu.dimension_semantics<arbitrary>], iteration_bounds = array<i64: 2, 2>, scalar_prefetch = 0 : i64, scratch_operands = 4 : i64, tpu.core_type = #tpu.core_type<tc>, window_params = [{transform_indices = @transform_0, window_bounds = array<i64: 4, 8, 16>}, {pipeline_mode = #tpu.pipeline_mode<synchronous>, transform_indices = @transform_1, window_bounds = array<i64: 16, 160>}, {pipeline_mode = #tpu.pipeline_mode<synchronous>, transform_indices = @transform_2, window_bounds = array<i64: 32, 128>}, {pipeline_mode = #tpu.pipeline_mode<synchronous>, transform_indices = @transform_3, window_bounds = array<i64: 1, 160>}, {transform_indices = @transform_4, window_bounds = array<i64: 4, 8, 32>}]} {
    %c0_i32 = arith.constant 0 : i32
    %0 = arith.cmpi eq, %arg1, %c0_i32 : i32
    %1 = arith.extui %0 : i1 to i32
    %c0_i32_0 = arith.constant 0 : i32
    %2 = arith.cmpi ne, %1, %c0_i32_0 : i32
    scf.if %2 {
      %cst_110 = arith.constant 0.000000e+00 : f32
      %276 = vector.broadcast %cst_110 : f32 to vector<4x32xf32>
      %c0_111 = arith.constant 0 : index
      %c0_112 = arith.constant 0 : index
      %277 = vector.load %arg9[%c0_111, %c0_112] : memref<4x32xf32, #tpu.memory_space<vmem>>, vector<4x32xf32>
      tpu.vector_store %arg9[%c0_111, %c0_112], %276 {strides = array<i32>} : memref<4x32xf32, #tpu.memory_space<vmem>>, vector<4x32xf32>,
      %cst_113 = arith.constant 0.000000e+00 : f32
      %278 = vector.broadcast %cst_113 : f32 to vector<4x32xf32>
      %c0_114 = arith.constant 0 : index
      %c0_115 = arith.constant 0 : index
      %279 = vector.load %arg10[%c0_114, %c0_115] : memref<4x32xf32, #tpu.memory_space<vmem>>, vector<4x32xf32>
      tpu.vector_store %arg10[%c0_114, %c0_115], %278 {strides = array<i32>} : memref<4x32xf32, #tpu.memory_space<vmem>>, vector<4x32xf32>,
    } else {
    }
    %c0 = arith.constant 0 : index
    %c0_1 = arith.constant 0 : index
    %c0_2 = arith.constant 0 : index
    %3 = vector.load %arg2[%c0, %c0_1, %c0_2] : memref<4x8x16xf32, #tpu.memory_space<vmem>>, vector<4x8x16xf32>
    %4 = vector.shape_cast %3 : vector<4x8x16xf32> to vector<32x16xf32>
    %c0_3 = arith.constant 0 : index
    %c0_4 = arith.constant 0 : index
    %5 = vector.load %arg3[%c0_3, %c0_4] : memref<16x160xf32, #tpu.memory_space<vmem>>, vector<16x160xf32>
    %cst = arith.constant dense<0.000000e+00> : vector<32x160xf32>
    %6 = tpu.matmul %4, %5, %cst {dimension_numbers = #tpu.dot_dimension_numbers<[1], [0], [0], [1], [0, 0, 1, 1], [], []>} : vector<32x16xf32>, vector<16x160xf32>, vector<32x160xf32> -> vector<32x160xf32>
    %c0_5 = arith.constant 0 : index
    %c0_6 = arith.constant 0 : index
    %7 = vector.load %arg5[%c0_5, %c0_6] : memref<1x160xf32, #tpu.memory_space<vmem>>, vector<1x160xf32>
    %8 = vector.broadcast %7 : vector<1x160xf32> to vector<32x160xf32>
    %9 = arith.addf %6, %8 : vector<32x160xf32>
    %10 = vector.shape_cast %9 : vector<32x160xf32> to vector<4x8x160xf32>
    %11 = vector.extract_strided_slice %10 {offsets = [0, 0, 0], sizes = [1, 8, 160], strides = [1, 1, 1]} : vector<4x8x160xf32> to vector<1x8x160xf32>
    %12 = vector.shape_cast %11 : vector<1x8x160xf32> to vector<8x160xf32>
    %c0_7 = arith.constant 0 : index
    %c0_8 = arith.constant 0 : index
    %c0_9 = arith.constant 0 : index
    %13 = vector.load %arg7[%c0_7, %c0_8, %c0_9] : memref<8x4x160xf32, #tpu.memory_space<vmem>>, vector<8x1x160xf32>
    %14 = vector.shape_cast %13 : vector<8x1x160xf32> to vector<8x160xf32>
    %15 = vector.shape_cast %12 : vector<8x160xf32> to vector<8x1x160xf32>
    tpu.vector_store %arg7[%c0_7, %c0_8, %c0_9], %15 {strides = array<i32>} : memref<8x4x160xf32, #tpu.memory_space<vmem>>, vector<8x1x160xf32>,
    %16 = vector.extract_strided_slice %10 {offsets = [1, 0, 0], sizes = [1, 8, 160], strides = [1, 1, 1]} : vector<4x8x160xf32> to vector<1x8x160xf32>
    %17 = vector.shape_cast %16 : vector<1x8x160xf32> to vector<8x160xf32>
    %c0_10 = arith.constant 0 : index
    %c1 = arith.constant 1 : index
    %c0_11 = arith.constant 0 : index
    %18 = vector.load %arg7[%c0_10, %c1, %c0_11] : memref<8x4x160xf32, #tpu.memory_space<vmem>>, vector<8x1x160xf32>
    %19 = vector.shape_cast %18 : vector<8x1x160xf32> to vector<8x160xf32>
    %20 = vector.shape_cast %17 : vector<8x160xf32> to vector<8x1x160xf32>
    tpu.vector_store %arg7[%c0_10, %c1, %c0_11], %20 {strides = array<i32>} : memref<8x4x160xf32, #tpu.memory_space<vmem>>, vector<8x1x160xf32>,
    %21 = vector.extract_strided_slice %10 {offsets = [2, 0, 0], sizes = [1, 8, 160], strides = [1, 1, 1]} : vector<4x8x160xf32> to vector<1x8x160xf32>
    %22 = vector.shape_cast %21 : vector<1x8x160xf32> to vector<8x160xf32>
    %c0_12 = arith.constant 0 : index
    %c2 = arith.constant 2 : index
    %c0_13 = arith.constant 0 : index
    %23 = vector.load %arg7[%c0_12, %c2, %c0_13] : memref<8x4x160xf32, #tpu.memory_space<vmem>>, vector<8x1x160xf32>
    %24 = vector.shape_cast %23 : vector<8x1x160xf32> to vector<8x160xf32>
    %25 = vector.shape_cast %22 : vector<8x160xf32> to vector<8x1x160xf32>
    tpu.vector_store %arg7[%c0_12, %c2, %c0_13], %25 {strides = array<i32>} : memref<8x4x160xf32, #tpu.memory_space<vmem>>, vector<8x1x160xf32>,
    %26 = vector.extract_strided_slice %10 {offsets = [3, 0, 0], sizes = [1, 8, 160], strides = [1, 1, 1]} : vector<4x8x160xf32> to vector<1x8x160xf32>
    %27 = vector.shape_cast %26 : vector<1x8x160xf32> to vector<8x160xf32>
    %c0_14 = arith.constant 0 : index
    %c3 = arith.constant 3 : index
    %c0_15 = arith.constant 0 : index
    %28 = vector.load %arg7[%c0_14, %c3, %c0_15] : memref<8x4x160xf32, #tpu.memory_space<vmem>>, vector<8x1x160xf32>
    %29 = vector.shape_cast %28 : vector<8x1x160xf32> to vector<8x160xf32>
    %30 = vector.shape_cast %27 : vector<8x160xf32> to vector<8x1x160xf32>
    tpu.vector_store %arg7[%c0_14, %c3, %c0_15], %30 {strides = array<i32>} : memref<8x4x160xf32, #tpu.memory_space<vmem>>, vector<8x1x160xf32>,
    %c0_16 = arith.constant 0 : index
    %c0_17 = arith.constant 0 : index
    %31 = vector.load %arg4[%c0_16, %c0_17] : memref<32x128xf32, #tpu.memory_space<vmem>>, vector<32x128xf32>
    %c0_18 = arith.constant 0 : index
    %c0_19 = arith.constant 0 : index
    %32 = vector.load %arg9[%c0_18, %c0_19] : memref<4x32xf32, #tpu.memory_space<vmem>>, vector<4x32xf32>
    %c0_20 = arith.constant 0 : index
    %c0_21 = arith.constant 0 : index
    %33 = vector.load %arg10[%c0_20, %c0_21] : memref<4x32xf32, #tpu.memory_space<vmem>>, vector<4x32xf32>
    %c0_i32_22 = arith.constant 0 : i32
    %34 = arith.index_cast %c0_i32_22 : i32 to index
    %c0_23 = arith.constant 0 : index
    %c0_24 = arith.constant 0 : index
    %35 = vector.load %arg7[%34, %c0_23, %c0_24] : memref<8x4x160xf32, #tpu.memory_space<vmem>>, vector<1x4x160xf32>
    %36 = vector.shape_cast %35 : vector<1x4x160xf32> to vector<4x160xf32>
    %37 = vector.extract_strided_slice %36 {offsets = [0, 0], sizes = [4, 128], strides = [1, 1]} : vector<4x160xf32> to vector<4x128xf32>
    %cst_25 = arith.constant dense<0.000000e+00> : vector<4x128xf32>
    %38 = tpu.matmul %32, %31, %cst_25 {dimension_numbers = #tpu.dot_dimension_numbers<[1], [0], [0], [1], [0, 0, 1, 1], [], []>} : vector<4x32xf32>, vector<32x128xf32>, vector<4x128xf32> -> vector<4x128xf32>
    %39 = arith.addf %37, %38 : vector<4x128xf32>
    %40 = vector.extract_strided_slice %39 {offsets = [0, 0], sizes = [4, 96], strides = [1, 1]} : vector<4x128xf32> to vector<4x96xf32>
    %41 = arith.negf %40 : vector<4x96xf32>
    %42 = math.exp %41 : vector<4x96xf32>
    %cst_26 = arith.constant 1.000000e+00 : f32
    %43 = vector.broadcast %cst_26 : f32 to vector<4x96xf32>
    %44 = arith.addf %43, %42 : vector<4x96xf32>
    %45 = arith.divf %43, %44 : vector<4x96xf32>
    %46 = vector.extract_strided_slice %45 {offsets = [0, 0], sizes = [4, 32], strides = [1, 1]} : vector<4x96xf32> to vector<4x32xf32>
    %47 = vector.extract_strided_slice %45 {offsets = [0, 32], sizes = [4, 32], strides = [1, 1]} : vector<4x96xf32> to vector<4x32xf32>
    %48 = vector.extract_strided_slice %45 {offsets = [0, 64], sizes = [4, 32], strides = [1, 1]} : vector<4x96xf32> to vector<4x32xf32>
    %49 = vector.extract_strided_slice %39 {offsets = [0, 96], sizes = [4, 32], strides = [1, 1]} : vector<4x128xf32> to vector<4x32xf32>
    %50 = math.tanh %49 : vector<4x32xf32>
    %51 = arith.mulf %47, %33 : vector<4x32xf32>
    %52 = arith.mulf %46, %50 : vector<4x32xf32>
    %53 = arith.addf %51, %52 : vector<4x32xf32>
    %54 = math.tanh %53 : vector<4x32xf32>
    %55 = arith.mulf %48, %54 : vector<4x32xf32>
    %56 = arith.index_cast %c0_i32_22 : i32 to index
    %c0_27 = arith.constant 0 : index
    %c0_28 = arith.constant 0 : index
    %57 = vector.load %arg8[%56, %c0_27, %c0_28] : memref<8x4x32xf32, #tpu.memory_space<vmem>>, vector<1x4x32xf32>
    %58 = vector.shape_cast %57 : vector<1x4x32xf32> to vector<4x32xf32>
    %59 = vector.shape_cast %55 : vector<4x32xf32> to vector<1x4x32xf32>
    tpu.vector_store %arg8[%56, %c0_27, %c0_28], %59 {strides = array<i32>} : memref<8x4x32xf32, #tpu.memory_space<vmem>>, vector<1x4x32xf32>,
    %c1_i32 = arith.constant 1 : i32
    %60 = arith.index_cast %c1_i32 : i32 to index
    %c0_29 = arith.constant 0 : index
    %c0_30 = arith.constant 0 : index
    %61 = vector.load %arg7[%60, %c0_29, %c0_30] : memref<8x4x160xf32, #tpu.memory_space<vmem>>, vector<1x4x160xf32>
    %62 = vector.shape_cast %61 : vector<1x4x160xf32> to vector<4x160xf32>
    %63 = vector.extract_strided_slice %62 {offsets = [0, 0], sizes = [4, 128], strides = [1, 1]} : vector<4x160xf32> to vector<4x128xf32>
    %cst_31 = arith.constant dense<0.000000e+00> : vector<4x128xf32>
    %64 = tpu.matmul %55, %31, %cst_31 {dimension_numbers = #tpu.dot_dimension_numbers<[1], [0], [0], [1], [0, 0, 1, 1], [], []>} : vector<4x32xf32>, vector<32x128xf32>, vector<4x128xf32> -> vector<4x128xf32>
    %65 = arith.addf %63, %64 : vector<4x128xf32>
    %66 = vector.extract_strided_slice %65 {offsets = [0, 0], sizes = [4, 96], strides = [1, 1]} : vector<4x128xf32> to vector<4x96xf32>
    %67 = arith.negf %66 : vector<4x96xf32>
    %68 = math.exp %67 : vector<4x96xf32>
    %cst_32 = arith.constant 1.000000e+00 : f32
    %69 = vector.broadcast %cst_32 : f32 to vector<4x96xf32>
    %70 = arith.addf %69, %68 : vector<4x96xf32>
    %71 = arith.divf %69, %70 : vector<4x96xf32>
    %72 = vector.extract_strided_slice %71 {offsets = [0, 0], sizes = [4, 32], strides = [1, 1]} : vector<4x96xf32> to vector<4x32xf32>
    %73 = vector.extract_strided_slice %71 {offsets = [0, 32], sizes = [4, 32], strides = [1, 1]} : vector<4x96xf32> to vector<4x32xf32>
    %74 = vector.extract_strided_slice %71 {offsets = [0, 64], sizes = [4, 32], strides = [1, 1]} : vector<4x96xf32> to vector<4x32xf32>
    %75 = vector.extract_strided_slice %65 {offsets = [0, 96], sizes = [4, 32], strides = [1, 1]} : vector<4x128xf32> to vector<4x32xf32>
    %76 = math.tanh %75 : vector<4x32xf32>
    %77 = arith.mulf %73, %53 : vector<4x32xf32>
    %78 = arith.mulf %72, %76 : vector<4x32xf32>
    %79 = arith.addf %77, %78 : vector<4x32xf32>
    %80 = math.tanh %79 : vector<4x32xf32>
    %81 = arith.mulf %74, %80 : vector<4x32xf32>
    %82 = arith.index_cast %c1_i32 : i32 to index
    %c0_33 = arith.constant 0 : index
    %c0_34 = arith.constant 0 : index
    %83 = vector.load %arg8[%82, %c0_33, %c0_34] : memref<8x4x32xf32, #tpu.memory_space<vmem>>, vector<1x4x32xf32>
    %84 = vector.shape_cast %83 : vector<1x4x32xf32> to vector<4x32xf32>
    %85 = vector.shape_cast %81 : vector<4x32xf32> to vector<1x4x32xf32>
    tpu.vector_store %arg8[%82, %c0_33, %c0_34], %85 {strides = array<i32>} : memref<8x4x32xf32, #tpu.memory_space<vmem>>, vector<1x4x32xf32>,
    %c2_i32 = arith.constant 2 : i32
    %86 = arith.index_cast %c2_i32 : i32 to index
    %c0_35 = arith.constant 0 : index
    %c0_36 = arith.constant 0 : index
    %87 = vector.load %arg7[%86, %c0_35, %c0_36] : memref<8x4x160xf32, #tpu.memory_space<vmem>>, vector<1x4x160xf32>
    %88 = vector.shape_cast %87 : vector<1x4x160xf32> to vector<4x160xf32>
    %89 = vector.extract_strided_slice %88 {offsets = [0, 0], sizes = [4, 128], strides = [1, 1]} : vector<4x160xf32> to vector<4x128xf32>
    %cst_37 = arith.constant dense<0.000000e+00> : vector<4x128xf32>
    %90 = tpu.matmul %81, %31, %cst_37 {dimension_numbers = #tpu.dot_dimension_numbers<[1], [0], [0], [1], [0, 0, 1, 1], [], []>} : vector<4x32xf32>, vector<32x128xf32>, vector<4x128xf32> -> vector<4x128xf32>
    %91 = arith.addf %89, %90 : vector<4x128xf32>
    %92 = vector.extract_strided_slice %91 {offsets = [0, 0], sizes = [4, 96], strides = [1, 1]} : vector<4x128xf32> to vector<4x96xf32>
    %93 = arith.negf %92 : vector<4x96xf32>
    %94 = math.exp %93 : vector<4x96xf32>
    %cst_38 = arith.constant 1.000000e+00 : f32
    %95 = vector.broadcast %cst_38 : f32 to vector<4x96xf32>
    %96 = arith.addf %95, %94 : vector<4x96xf32>
    %97 = arith.divf %95, %96 : vector<4x96xf32>
    %98 = vector.extract_strided_slice %97 {offsets = [0, 0], sizes = [4, 32], strides = [1, 1]} : vector<4x96xf32> to vector<4x32xf32>
    %99 = vector.extract_strided_slice %97 {offsets = [0, 32], sizes = [4, 32], strides = [1, 1]} : vector<4x96xf32> to vector<4x32xf32>
    %100 = vector.extract_strided_slice %97 {offsets = [0, 64], sizes = [4, 32], strides = [1, 1]} : vector<4x96xf32> to vector<4x32xf32>
    %101 = vector.extract_strided_slice %91 {offsets = [0, 96], sizes = [4, 32], strides = [1, 1]} : vector<4x128xf32> to vector<4x32xf32>
    %102 = math.tanh %101 : vector<4x32xf32>
    %103 = arith.mulf %99, %79 : vector<4x32xf32>
    %104 = arith.mulf %98, %102 : vector<4x32xf32>
    %105 = arith.addf %103, %104 : vector<4x32xf32>
    %106 = math.tanh %105 : vector<4x32xf32>
    %107 = arith.mulf %100, %106 : vector<4x32xf32>
    %108 = arith.index_cast %c2_i32 : i32 to index
    %c0_39 = arith.constant 0 : index
    %c0_40 = arith.constant 0 : index
    %109 = vector.load %arg8[%108, %c0_39, %c0_40] : memref<8x4x32xf32, #tpu.memory_space<vmem>>, vector<1x4x32xf32>
    %110 = vector.shape_cast %109 : vector<1x4x32xf32> to vector<4x32xf32>
    %111 = vector.shape_cast %107 : vector<4x32xf32> to vector<1x4x32xf32>
    tpu.vector_store %arg8[%108, %c0_39, %c0_40], %111 {strides = array<i32>} : memref<8x4x32xf32, #tpu.memory_space<vmem>>, vector<1x4x32xf32>,
    %c3_i32 = arith.constant 3 : i32
    %112 = arith.index_cast %c3_i32 : i32 to index
    %c0_41 = arith.constant 0 : index
    %c0_42 = arith.constant 0 : index
    %113 = vector.load %arg7[%112, %c0_41, %c0_42] : memref<8x4x160xf32, #tpu.memory_space<vmem>>, vector<1x4x160xf32>
    %114 = vector.shape_cast %113 : vector<1x4x160xf32> to vector<4x160xf32>
    %115 = vector.extract_strided_slice %114 {offsets = [0, 0], sizes = [4, 128], strides = [1, 1]} : vector<4x160xf32> to vector<4x128xf32>
    %cst_43 = arith.constant dense<0.000000e+00> : vector<4x128xf32>
    %116 = tpu.matmul %107, %31, %cst_43 {dimension_numbers = #tpu.dot_dimension_numbers<[1], [0], [0], [1], [0, 0, 1, 1], [], []>} : vector<4x32xf32>, vector<32x128xf32>, vector<4x128xf32> -> vector<4x128xf32>
    %117 = arith.addf %115, %116 : vector<4x128xf32>
    %118 = vector.extract_strided_slice %117 {offsets = [0, 0], sizes = [4, 96], strides = [1, 1]} : vector<4x128xf32> to vector<4x96xf32>
    %119 = arith.negf %118 : vector<4x96xf32>
    %120 = math.exp %119 : vector<4x96xf32>
    %cst_44 = arith.constant 1.000000e+00 : f32
    %121 = vector.broadcast %cst_44 : f32 to vector<4x96xf32>
    %122 = arith.addf %121, %120 : vector<4x96xf32>
    %123 = arith.divf %121, %122 : vector<4x96xf32>
    %124 = vector.extract_strided_slice %123 {offsets = [0, 0], sizes = [4, 32], strides = [1, 1]} : vector<4x96xf32> to vector<4x32xf32>
    %125 = vector.extract_strided_slice %123 {offsets = [0, 32], sizes = [4, 32], strides = [1, 1]} : vector<4x96xf32> to vector<4x32xf32>
    %126 = vector.extract_strided_slice %123 {offsets = [0, 64], sizes = [4, 32], strides = [1, 1]} : vector<4x96xf32> to vector<4x32xf32>
    %127 = vector.extract_strided_slice %117 {offsets = [0, 96], sizes = [4, 32], strides = [1, 1]} : vector<4x128xf32> to vector<4x32xf32>
    %128 = math.tanh %127 : vector<4x32xf32>
    %129 = arith.mulf %125, %105 : vector<4x32xf32>
    %130 = arith.mulf %124, %128 : vector<4x32xf32>
    %131 = arith.addf %129, %130 : vector<4x32xf32>
    %132 = math.tanh %131 : vector<4x32xf32>
    %133 = arith.mulf %126, %132 : vector<4x32xf32>
    %134 = arith.index_cast %c3_i32 : i32 to index
    %c0_45 = arith.constant 0 : index
    %c0_46 = arith.constant 0 : index
    %135 = vector.load %arg8[%134, %c0_45, %c0_46] : memref<8x4x32xf32, #tpu.memory_space<vmem>>, vector<1x4x32xf32>
    %136 = vector.shape_cast %135 : vector<1x4x32xf32> to vector<4x32xf32>
    %137 = vector.shape_cast %133 : vector<4x32xf32> to vector<1x4x32xf32>
    tpu.vector_store %arg8[%134, %c0_45, %c0_46], %137 {strides = array<i32>} : memref<8x4x32xf32, #tpu.memory_space<vmem>>, vector<1x4x32xf32>,
    %c4_i32 = arith.constant 4 : i32
    %138 = arith.index_cast %c4_i32 : i32 to index
    %c0_47 = arith.constant 0 : index
    %c0_48 = arith.constant 0 : index
    %139 = vector.load %arg7[%138, %c0_47, %c0_48] : memref<8x4x160xf32, #tpu.memory_space<vmem>>, vector<1x4x160xf32>
    %140 = vector.shape_cast %139 : vector<1x4x160xf32> to vector<4x160xf32>
    %141 = vector.extract_strided_slice %140 {offsets = [0, 0], sizes = [4, 128], strides = [1, 1]} : vector<4x160xf32> to vector<4x128xf32>
    %cst_49 = arith.constant dense<0.000000e+00> : vector<4x128xf32>
    %142 = tpu.matmul %133, %31, %cst_49 {dimension_numbers = #tpu.dot_dimension_numbers<[1], [0], [0], [1], [0, 0, 1, 1], [], []>} : vector<4x32xf32>, vector<32x128xf32>, vector<4x128xf32> -> vector<4x128xf32>
    %143 = arith.addf %141, %142 : vector<4x128xf32>
    %144 = vector.extract_strided_slice %143 {offsets = [0, 0], sizes = [4, 96], strides = [1, 1]} : vector<4x128xf32> to vector<4x96xf32>
    %145 = arith.negf %144 : vector<4x96xf32>
    %146 = math.exp %145 : vector<4x96xf32>
    %cst_50 = arith.constant 1.000000e+00 : f32
    %147 = vector.broadcast %cst_50 : f32 to vector<4x96xf32>
    %148 = arith.addf %147, %146 : vector<4x96xf32>
    %149 = arith.divf %147, %148 : vector<4x96xf32>
    %150 = vector.extract_strided_slice %149 {offsets = [0, 0], sizes = [4, 32], strides = [1, 1]} : vector<4x96xf32> to vector<4x32xf32>
    %151 = vector.extract_strided_slice %149 {offsets = [0, 32], sizes = [4, 32], strides = [1, 1]} : vector<4x96xf32> to vector<4x32xf32>
    %152 = vector.extract_strided_slice %149 {offsets = [0, 64], sizes = [4, 32], strides = [1, 1]} : vector<4x96xf32> to vector<4x32xf32>
    %153 = vector.extract_strided_slice %143 {offsets = [0, 96], sizes = [4, 32], strides = [1, 1]} : vector<4x128xf32> to vector<4x32xf32>
    %154 = math.tanh %153 : vector<4x32xf32>
    %155 = arith.mulf %151, %131 : vector<4x32xf32>
    %156 = arith.mulf %150, %154 : vector<4x32xf32>
    %157 = arith.addf %155, %156 : vector<4x32xf32>
    %158 = math.tanh %157 : vector<4x32xf32>
    %159 = arith.mulf %152, %158 : vector<4x32xf32>
    %160 = arith.index_cast %c4_i32 : i32 to index
    %c0_51 = arith.constant 0 : index
    %c0_52 = arith.constant 0 : index
    %161 = vector.load %arg8[%160, %c0_51, %c0_52] : memref<8x4x32xf32, #tpu.memory_space<vmem>>, vector<1x4x32xf32>
    %162 = vector.shape_cast %161 : vector<1x4x32xf32> to vector<4x32xf32>
    %163 = vector.shape_cast %159 : vector<4x32xf32> to vector<1x4x32xf32>
    tpu.vector_store %arg8[%160, %c0_51, %c0_52], %163 {strides = array<i32>} : memref<8x4x32xf32, #tpu.memory_space<vmem>>, vector<1x4x32xf32>,
    %c5_i32 = arith.constant 5 : i32
    %164 = arith.index_cast %c5_i32 : i32 to index
    %c0_53 = arith.constant 0 : index
    %c0_54 = arith.constant 0 : index
    %165 = vector.load %arg7[%164, %c0_53, %c0_54] : memref<8x4x160xf32, #tpu.memory_space<vmem>>, vector<1x4x160xf32>
    %166 = vector.shape_cast %165 : vector<1x4x160xf32> to vector<4x160xf32>
    %167 = vector.extract_strided_slice %166 {offsets = [0, 0], sizes = [4, 128], strides = [1, 1]} : vector<4x160xf32> to vector<4x128xf32>
    %cst_55 = arith.constant dense<0.000000e+00> : vector<4x128xf32>
    %168 = tpu.matmul %159, %31, %cst_55 {dimension_numbers = #tpu.dot_dimension_numbers<[1], [0], [0], [1], [0, 0, 1, 1], [], []>} : vector<4x32xf32>, vector<32x128xf32>, vector<4x128xf32> -> vector<4x128xf32>
    %169 = arith.addf %167, %168 : vector<4x128xf32>
    %170 = vector.extract_strided_slice %169 {offsets = [0, 0], sizes = [4, 96], strides = [1, 1]} : vector<4x128xf32> to vector<4x96xf32>
    %171 = arith.negf %170 : vector<4x96xf32>
    %172 = math.exp %171 : vector<4x96xf32>
    %cst_56 = arith.constant 1.000000e+00 : f32
    %173 = vector.broadcast %cst_56 : f32 to vector<4x96xf32>
    %174 = arith.addf %173, %172 : vector<4x96xf32>
    %175 = arith.divf %173, %174 : vector<4x96xf32>
    %176 = vector.extract_strided_slice %175 {offsets = [0, 0], sizes = [4, 32], strides = [1, 1]} : vector<4x96xf32> to vector<4x32xf32>
    %177 = vector.extract_strided_slice %175 {offsets = [0, 32], sizes = [4, 32], strides = [1, 1]} : vector<4x96xf32> to vector<4x32xf32>
    %178 = vector.extract_strided_slice %175 {offsets = [0, 64], sizes = [4, 32], strides = [1, 1]} : vector<4x96xf32> to vector<4x32xf32>
    %179 = vector.extract_strided_slice %169 {offsets = [0, 96], sizes = [4, 32], strides = [1, 1]} : vector<4x128xf32> to vector<4x32xf32>
    %180 = math.tanh %179 : vector<4x32xf32>
    %181 = arith.mulf %177, %157 : vector<4x32xf32>
    %182 = arith.mulf %176, %180 : vector<4x32xf32>
    %183 = arith.addf %181, %182 : vector<4x32xf32>
    %184 = math.tanh %183 : vector<4x32xf32>
    %185 = arith.mulf %178, %184 : vector<4x32xf32>
    %186 = arith.index_cast %c5_i32 : i32 to index
    %c0_57 = arith.constant 0 : index
    %c0_58 = arith.constant 0 : index
    %187 = vector.load %arg8[%186, %c0_57, %c0_58] : memref<8x4x32xf32, #tpu.memory_space<vmem>>, vector<1x4x32xf32>
    %188 = vector.shape_cast %187 : vector<1x4x32xf32> to vector<4x32xf32>
    %189 = vector.shape_cast %185 : vector<4x32xf32> to vector<1x4x32xf32>
    tpu.vector_store %arg8[%186, %c0_57, %c0_58], %189 {strides = array<i32>} : memref<8x4x32xf32, #tpu.memory_space<vmem>>, vector<1x4x32xf32>,
    %c6_i32 = arith.constant 6 : i32
    %190 = arith.index_cast %c6_i32 : i32 to index
    %c0_59 = arith.constant 0 : index
    %c0_60 = arith.constant 0 : index
    %191 = vector.load %arg7[%190, %c0_59, %c0_60] : memref<8x4x160xf32, #tpu.memory_space<vmem>>, vector<1x4x160xf32>
    %192 = vector.shape_cast %191 : vector<1x4x160xf32> to vector<4x160xf32>
    %193 = vector.extract_strided_slice %192 {offsets = [0, 0], sizes = [4, 128], strides = [1, 1]} : vector<4x160xf32> to vector<4x128xf32>
    %cst_61 = arith.constant dense<0.000000e+00> : vector<4x128xf32>
    %194 = tpu.matmul %185, %31, %cst_61 {dimension_numbers = #tpu.dot_dimension_numbers<[1], [0], [0], [1], [0, 0, 1, 1], [], []>} : vector<4x32xf32>, vector<32x128xf32>, vector<4x128xf32> -> vector<4x128xf32>
    %195 = arith.addf %193, %194 : vector<4x128xf32>
    %196 = vector.extract_strided_slice %195 {offsets = [0, 0], sizes = [4, 96], strides = [1, 1]} : vector<4x128xf32> to vector<4x96xf32>
    %197 = arith.negf %196 : vector<4x96xf32>
    %198 = math.exp %197 : vector<4x96xf32>
    %cst_62 = arith.constant 1.000000e+00 : f32
    %199 = vector.broadcast %cst_62 : f32 to vector<4x96xf32>
    %200 = arith.addf %199, %198 : vector<4x96xf32>
    %201 = arith.divf %199, %200 : vector<4x96xf32>
    %202 = vector.extract_strided_slice %201 {offsets = [0, 0], sizes = [4, 32], strides = [1, 1]} : vector<4x96xf32> to vector<4x32xf32>
    %203 = vector.extract_strided_slice %201 {offsets = [0, 32], sizes = [4, 32], strides = [1, 1]} : vector<4x96xf32> to vector<4x32xf32>
    %204 = vector.extract_strided_slice %201 {offsets = [0, 64], sizes = [4, 32], strides = [1, 1]} : vector<4x96xf32> to vector<4x32xf32>
    %205 = vector.extract_strided_slice %195 {offsets = [0, 96], sizes = [4, 32], strides = [1, 1]} : vector<4x128xf32> to vector<4x32xf32>
    %206 = math.tanh %205 : vector<4x32xf32>
    %207 = arith.mulf %203, %183 : vector<4x32xf32>
    %208 = arith.mulf %202, %206 : vector<4x32xf32>
    %209 = arith.addf %207, %208 : vector<4x32xf32>
    %210 = math.tanh %209 : vector<4x32xf32>
    %211 = arith.mulf %204, %210 : vector<4x32xf32>
    %212 = arith.index_cast %c6_i32 : i32 to index
    %c0_63 = arith.constant 0 : index
    %c0_64 = arith.constant 0 : index
    %213 = vector.load %arg8[%212, %c0_63, %c0_64] : memref<8x4x32xf32, #tpu.memory_space<vmem>>, vector<1x4x32xf32>
    %214 = vector.shape_cast %213 : vector<1x4x32xf32> to vector<4x32xf32>
    %215 = vector.shape_cast %211 : vector<4x32xf32> to vector<1x4x32xf32>
    tpu.vector_store %arg8[%212, %c0_63, %c0_64], %215 {strides = array<i32>} : memref<8x4x32xf32, #tpu.memory_space<vmem>>, vector<1x4x32xf32>,
    %c7_i32 = arith.constant 7 : i32
    %216 = arith.index_cast %c7_i32 : i32 to index
    %c0_65 = arith.constant 0 : index
    %c0_66 = arith.constant 0 : index
    %217 = vector.load %arg7[%216, %c0_65, %c0_66] : memref<8x4x160xf32, #tpu.memory_space<vmem>>, vector<1x4x160xf32>
    %218 = vector.shape_cast %217 : vector<1x4x160xf32> to vector<4x160xf32>
    %219 = vector.extract_strided_slice %218 {offsets = [0, 0], sizes = [4, 128], strides = [1, 1]} : vector<4x160xf32> to vector<4x128xf32>
    %cst_67 = arith.constant dense<0.000000e+00> : vector<4x128xf32>
    %220 = tpu.matmul %211, %31, %cst_67 {dimension_numbers = #tpu.dot_dimension_numbers<[1], [0], [0], [1], [0, 0, 1, 1], [], []>} : vector<4x32xf32>, vector<32x128xf32>, vector<4x128xf32> -> vector<4x128xf32>
    %221 = arith.addf %219, %220 : vector<4x128xf32>
    %222 = vector.extract_strided_slice %221 {offsets = [0, 0], sizes = [4, 96], strides = [1, 1]} : vector<4x128xf32> to vector<4x96xf32>
    %223 = arith.negf %222 : vector<4x96xf32>
    %224 = math.exp %223 : vector<4x96xf32>
    %cst_68 = arith.constant 1.000000e+00 : f32
    %225 = vector.broadcast %cst_68 : f32 to vector<4x96xf32>
    %226 = arith.addf %225, %224 : vector<4x96xf32>
    %227 = arith.divf %225, %226 : vector<4x96xf32>
    %228 = vector.extract_strided_slice %227 {offsets = [0, 0], sizes = [4, 32], strides = [1, 1]} : vector<4x96xf32> to vector<4x32xf32>
    %229 = vector.extract_strided_slice %227 {offsets = [0, 32], sizes = [4, 32], strides = [1, 1]} : vector<4x96xf32> to vector<4x32xf32>
    %230 = vector.extract_strided_slice %227 {offsets = [0, 64], sizes = [4, 32], strides = [1, 1]} : vector<4x96xf32> to vector<4x32xf32>
    %231 = vector.extract_strided_slice %221 {offsets = [0, 96], sizes = [4, 32], strides = [1, 1]} : vector<4x128xf32> to vector<4x32xf32>
    %232 = math.tanh %231 : vector<4x32xf32>
    %233 = arith.mulf %229, %209 : vector<4x32xf32>
    %234 = arith.mulf %228, %232 : vector<4x32xf32>
    %235 = arith.addf %233, %234 : vector<4x32xf32>
    %236 = math.tanh %235 : vector<4x32xf32>
    %237 = arith.mulf %230, %236 : vector<4x32xf32>
    %238 = arith.index_cast %c7_i32 : i32 to index
    %c0_69 = arith.constant 0 : index
    %c0_70 = arith.constant 0 : index
    %239 = vector.load %arg8[%238, %c0_69, %c0_70] : memref<8x4x32xf32, #tpu.memory_space<vmem>>, vector<1x4x32xf32>
    %240 = vector.shape_cast %239 : vector<1x4x32xf32> to vector<4x32xf32>
    %241 = vector.shape_cast %237 : vector<4x32xf32> to vector<1x4x32xf32>
    tpu.vector_store %arg8[%238, %c0_69, %c0_70], %241 {strides = array<i32>} : memref<8x4x32xf32, #tpu.memory_space<vmem>>, vector<1x4x32xf32>,
    %c8_i32 = arith.constant 8 : i32
    %c0_71 = arith.constant 0 : index
    %c0_72 = arith.constant 0 : index
    %242 = vector.load %arg9[%c0_71, %c0_72] : memref<4x32xf32, #tpu.memory_space<vmem>>, vector<4x32xf32>
    tpu.vector_store %arg9[%c0_71, %c0_72], %237 {strides = array<i32>} : memref<4x32xf32, #tpu.memory_space<vmem>>, vector<4x32xf32>,
    %c0_73 = arith.constant 0 : index
    %c0_74 = arith.constant 0 : index
    %243 = vector.load %arg10[%c0_73, %c0_74] : memref<4x32xf32, #tpu.memory_space<vmem>>, vector<4x32xf32>
    tpu.vector_store %arg10[%c0_73, %c0_74], %235 {strides = array<i32>} : memref<4x32xf32, #tpu.memory_space<vmem>>, vector<4x32xf32>,
    %c0_75 = arith.constant 0 : index
    %c0_76 = arith.constant 0 : index
    %c0_77 = arith.constant 0 : index
    %244 = vector.load %arg8[%c0_75, %c0_76, %c0_77] : memref<8x4x32xf32, #tpu.memory_space<vmem>>, vector<8x1x32xf32>
    %245 = vector.shape_cast %244 : vector<8x1x32xf32> to vector<8x32xf32>
    %c0_78 = arith.constant 0 : index
    %c0_79 = arith.constant 0 : index
    %c128 = arith.constant 128 : index
    %246 = vector.load %arg7[%c0_78, %c0_79, %c128] : memref<8x4x160xf32, #tpu.memory_space<vmem>>, vector<8x1x32xf32>
    %247 = vector.shape_cast %246 : vector<8x1x32xf32> to vector<8x32xf32>
    %248 = arith.addf %245, %247 : vector<8x32xf32>
    %c0_80 = arith.constant 0 : index
    %c0_81 = arith.constant 0 : index
    %c0_82 = arith.constant 0 : index
    %249 = vector.load %arg6[%c0_80, %c0_81, %c0_82] : memref<4x8x32xf32, #tpu.memory_space<vmem>>, vector<1x8x32xf32>
    %250 = vector.shape_cast %249 : vector<1x8x32xf32> to vector<8x32xf32>
    %251 = vector.shape_cast %248 : vector<8x32xf32> to vector<1x8x32xf32>
    tpu.vector_store %arg6[%c0_80, %c0_81, %c0_82], %251 {strides = array<i32>} : memref<4x8x32xf32, #tpu.memory_space<vmem>>, vector<1x8x32xf32>,
    %c0_83 = arith.constant 0 : index
    %c1_84 = arith.constant 1 : index
    %c0_85 = arith.constant 0 : index
    %252 = vector.load %arg8[%c0_83, %c1_84, %c0_85] : memref<8x4x32xf32, #tpu.memory_space<vmem>>, vector<8x1x32xf32>
    %253 = vector.shape_cast %252 : vector<8x1x32xf32> to vector<8x32xf32>
    %c0_86 = arith.constant 0 : index
    %c1_87 = arith.constant 1 : index
    %c128_88 = arith.constant 128 : index
    %254 = vector.load %arg7[%c0_86, %c1_87, %c128_88] : memref<8x4x160xf32, #tpu.memory_space<vmem>>, vector<8x1x32xf32>
    %255 = vector.shape_cast %254 : vector<8x1x32xf32> to vector<8x32xf32>
    %256 = arith.addf %253, %255 : vector<8x32xf32>
    %c1_89 = arith.constant 1 : index
    %c0_90 = arith.constant 0 : index
    %c0_91 = arith.constant 0 : index
    %257 = vector.load %arg6[%c1_89, %c0_90, %c0_91] : memref<4x8x32xf32, #tpu.memory_space<vmem>>, vector<1x8x32xf32>
    %258 = vector.shape_cast %257 : vector<1x8x32xf32> to vector<8x32xf32>
    %259 = vector.shape_cast %256 : vector<8x32xf32> to vector<1x8x32xf32>
    tpu.vector_store %arg6[%c1_89, %c0_90, %c0_91], %259 {strides = array<i32>} : memref<4x8x32xf32, #tpu.memory_space<vmem>>, vector<1x8x32xf32>,
    %c0_92 = arith.constant 0 : index
    %c2_93 = arith.constant 2 : index
    %c0_94 = arith.constant 0 : index
    %260 = vector.load %arg8[%c0_92, %c2_93, %c0_94] : memref<8x4x32xf32, #tpu.memory_space<vmem>>, vector<8x1x32xf32>
    %261 = vector.shape_cast %260 : vector<8x1x32xf32> to vector<8x32xf32>
    %c0_95 = arith.constant 0 : index
    %c2_96 = arith.constant 2 : index
    %c128_97 = arith.constant 128 : index
    %262 = vector.load %arg7[%c0_95, %c2_96, %c128_97] : memref<8x4x160xf32, #tpu.memory_space<vmem>>, vector<8x1x32xf32>
    %263 = vector.shape_cast %262 : vector<8x1x32xf32> to vector<8x32xf32>
    %264 = arith.addf %261, %263 : vector<8x32xf32>
    %c2_98 = arith.constant 2 : index
    %c0_99 = arith.constant 0 : index
    %c0_100 = arith.constant 0 : index
    %265 = vector.load %arg6[%c2_98, %c0_99, %c0_100] : memref<4x8x32xf32, #tpu.memory_space<vmem>>, vector<1x8x32xf32>
    %266 = vector.shape_cast %265 : vector<1x8x32xf32> to vector<8x32xf32>
    %267 = vector.shape_cast %264 : vector<8x32xf32> to vector<1x8x32xf32>
    tpu.vector_store %arg6[%c2_98, %c0_99, %c0_100], %267 {strides = array<i32>} : memref<4x8x32xf32, #tpu.memory_space<vmem>>, vector<1x8x32xf32>,
    %c0_101 = arith.constant 0 : index
    %c3_102 = arith.constant 3 : index
    %c0_103 = arith.constant 0 : index
    %268 = vector.load %arg8[%c0_101, %c3_102, %c0_103] : memref<8x4x32xf32, #tpu.memory_space<vmem>>, vector<8x1x32xf32>
    %269 = vector.shape_cast %268 : vector<8x1x32xf32> to vector<8x32xf32>
    %c0_104 = arith.constant 0 : index
    %c3_105 = arith.constant 3 : index
    %c128_106 = arith.constant 128 : index
    %270 = vector.load %arg7[%c0_104, %c3_105, %c128_106] : memref<8x4x160xf32, #tpu.memory_space<vmem>>, vector<8x1x32xf32>
    %271 = vector.shape_cast %270 : vector<8x1x32xf32> to vector<8x32xf32>
    %272 = arith.addf %269, %271 : vector<8x32xf32>
    %c3_107 = arith.constant 3 : index
    %c0_108 = arith.constant 0 : index
    %c0_109 = arith.constant 0 : index
    %273 = vector.load %arg6[%c3_107, %c0_108, %c0_109] : memref<4x8x32xf32, #tpu.memory_space<vmem>>, vector<1x8x32xf32>
    %274 = vector.shape_cast %273 : vector<1x8x32xf32> to vector<8x32xf32>
    %275 = vector.shape_cast %272 : vector<8x32xf32> to vector<1x8x32xf32>
    tpu.vector_store %arg6[%c3_107, %c0_108, %c0_109], %275 {strides = array<i32>} : memref<4x8x32xf32, #tpu.memory_space<vmem>>, vector<1x8x32xf32>,
    return
  }
  func.func @transform_0(%arg0: i32, %arg1: i32) -> (i32, i32, i32) {
    %c0_i32 = arith.constant 0 : i32
    %c0_i32_0 = arith.constant 0 : i32
    return %arg0, %arg1, %c0_i32 : i32, i32, i32
  }
  func.func @transform_1(%arg0: i32, %arg1: i32) -> (i32, i32) {
    %c0_i32 = arith.constant 0 : i32
    %c0_i32_0 = arith.constant 0 : i32
    %c0_i32_1 = arith.constant 0 : i32
    return %c0_i32, %c0_i32_0 : i32, i32
  }
  func.func @transform_2(%arg0: i32, %arg1: i32) -> (i32, i32) {
    %c0_i32 = arith.constant 0 : i32
    %c0_i32_0 = arith.constant 0 : i32
    %c0_i32_1 = arith.constant 0 : i32
    return %c0_i32, %c0_i32_0 : i32, i32
  }
  func.func @transform_3(%arg0: i32, %arg1: i32) -> (i32, i32) {
    %c0_i32 = arith.constant 0 : i32
    %c0_i32_0 = arith.constant 0 : i32
    %c0_i32_1 = arith.constant 0 : i32
    return %c0_i32, %c0_i32_0 : i32, i32
  }
  func.func @transform_4(%arg0: i32, %arg1: i32) -> (i32, i32, i32) {
    %c0_i32 = arith.constant 0 : i32
    %c0_i32_0 = arith.constant 0 : i32
    return %arg0, %arg1, %c0_i32 : i32, i32, i32
  }
}

</mosaic_0001>

<llo_original>
// kernel: tpu_custom_call.1
$region0: #{tpu_custom_call.1}
  #allocation0 [shape = 'u32[]', space=smem, size = 0x4, offset = 0x4, fixed_abs, tag = 'smem constant byte address 0x4 - core index']
  #allocation1 [shape = 'u32[72,128]{1,0:T(1,128)}', space=vmem, size = 0x9000, scoped, tag = 'internal scratch']
  #allocation2 [shape = 'f32[8,4,160]{2,1,0:T(4,128)}', space=vmem, size = 0x8000, scoped, tag = 'scratch operand']
  #allocation3 [shape = 'f32[8,4,32]{2,1,0:T(4,128)}', space=vmem, size = 0x4000, scoped, tag = 'scratch operand']
  #allocation4 [shape = 'f32[4,32]{1,0:T(4,128)}', space=vmem, size = 0x800, scoped, tag = 'scratch operand']
  #allocation5 [shape = 'f32[4,32]{1,0:T(4,128)}', space=vmem, size = 0x800, scoped, tag = 'scratch operand']
  %s0 = inlined_call_operand.hbm [shape: f32[8,16,16], index: 0, kind: input, shape index: {}]
  %s1 = inlined_call_operand.hbm [shape: f32[16,160], index: 1, kind: input, shape index: {}]
  %s2 = inlined_call_operand.hbm [shape: f32[32,128], index: 2, kind: input, shape index: {}]
  %s3 = inlined_call_operand.vmem [shape: f32[1,160], index: 3, kind: input, shape index: {}]
  %s4 = inlined_call_operand.hbm [shape: f32[8,16,32], index: 4, kind: output, shape index: {}]
  %s5 = sld [smem:[#allocation0]]
  $region65: #{tpu_custom_call.1} parent=0
    _
  %s7 = ssub.s32 1, %s5
  %s8 = scalar_select 0, %s7, %s5
  $region1: #{tpu_custom_call.1} parent=0
    #allocation6 [shape = 'u8[32768]{0}', space=vmem, size = 0x8000, scoped, tag = 'input window, operand 0']
    #allocation7 [shape = 's32[2]{0}', space=sflag, size = 0x8, scoped, tag = 'scoped memory for tpu_custom_call.1']
    #allocation8 [shape = 's32[2]{0}', space=sflag, size = 0x8, scoped, tag = 'scoped memory for tpu_custom_call.1']
    #allocation9 [shape = 'u8[16384]{0}', space=vmem, size = 0x4000, scoped, tag = 'input window, operand 1, single buffered']
    #allocation10 [shape = 's32[1]{0}', space=sflag, size = 0x4, scoped, tag = 'scoped memory for tpu_custom_call.1']
    #allocation11 [shape = 'u8[16384]{0}', space=vmem, size = 0x4000, scoped, tag = 'input window, operand 2, single buffered']
    #allocation12 [shape = 'u8[32768]{0}', space=vmem, size = 0x8000, scoped, tag = 'output window, operand 0']
    %9 = vsyncpa [#allocation7], 0
    %s10 = scalar_lea.sflag [#allocation7], 1
    %11 = vsyncpa %s10, 0
    %12 = vsyncpa [#allocation10], 0
    %13 = vsyncpa [#allocation8], 0
    %s14 = scalar_lea.sflag [#allocation8], 1
    %15 = vsyncpa %s14, 0
    loop: start=0, step=1, limit=6
    $region2: #{tpu_custom_call.1} parent=1 // loop_pre_header
      _
    $region3: #{tpu_custom_call.1} parent=1 // loop_header
      %s17 = sphi 0, %s21
      %p18 = scmp.ge.s32.totalorder %s17, 6
      %s24 = sphi 0, %s36
      %s25 = sphi 0, %s32
      %s26 = sphi 0, %s24
      %s27 = sphi 0, %s25
      %s28 = sphi 0, %s26
      %s29 = sphi 0, %s27
      %s41 = sphi 0, %s43
      %s44 = sphi 0, %s41
      %s45 = sphi 0, %s44
      %s61 = sphi 0, %s45
      %s65 = sphi 0, %s65
      %s67 = sphi 0, %s65
      %s68 = sphi 0, %s67
      %s82 = sphi 0, %s68
      %s86 = sphi 0, %s86
      %s88 = sphi 0, %s86
      %s89 = sphi 0, %s88
      %s103 = sphi 0, %s89
      %s107 = sphi 0, %s107
      %s109 = sphi 0, %s107
      %s110 = sphi 0, %s109
      %s124 = sphi 0, %s110
      %s132 = sphi 0, %s134
      %s135 = sphi 0, %s132
      %s136 = sphi 0, %s135
      %s152 = sphi 0, %s136
    $region4: #{tpu_custom_call.1} parent=1 // loop_header_branch
      %20 = sbr.rel (%p18) target = $region8
    $region5: #{tpu_custom_call.1} parent=1 // loop_body
      %s22 = ssub.s32 %s17, 1
      %s23 = ssub.s32 %s17, 2
      %s30 = sadd.s32 1, %s25
      %p31 = scmp.ge.s32.totalorder %s30, 2
      %s32 = scalar_select %p31, 0, %s30
      %s33 = sadd.s32 1, %s24
      %s34 = scalar_select %p31, %s33, %s24
      %p35 = scmp.ge.s32.totalorder %s34, 2
      %s36 = scalar_select %p35, 0, %s34
      %s37 = ssub.s32 %s24, %s36
      %s38 = ssub.s32 %s25, %s32
      %s39 = sor.u32 %s37, %s38
      %p40 = scmp.eq.s32.totalorder %s39, 0
      %s42 = sadd.s32 %s41, 1
      %s43 = scalar_select %p40, %s41, %s42
      %p46 = pneg %p40
      %p47 = scmp.eq.s32.totalorder %s17, 3
      %p48 = por %p46, %p47
      %p49 = scmp.ne.s32.totalorder %s41, %s44
      %p50 = scmp.eq.s32.totalorder %s17, 0
      %p51 = por %p49, %p50
      %p52 = scmp.ne.s32.totalorder %s41, %s44
      %p53 = scmp.eq.s32.totalorder %s22, 3
      %p54 = por %p52, %p53
      %p55 = scmp.ne.s32.totalorder %s44, %s45
      %p56 = scmp.eq.s32.totalorder %s22, 0
      %p57 = por %p55, %p56
      %p58 = scmp.ne.s32.totalorder %s44, %s45
      %p59 = scmp.eq.s32.totalorder %s23, 3
      %p60 = por %p58, %p59
      %p62 = scmp.ne.s32.totalorder %s45, %s61
      %p63 = scmp.eq.s32.totalorder %s23, 0
      %p64 = por %p62, %p63
      %s66 = sadd.s32 %s65, 1
      %p69 = scmp.eq.s32.totalorder %s17, 3
      %p70 = scmp.ne.s32.totalorder %s65, %s67
      %p71 = scmp.eq.s32.totalorder %s17, 0
      %p72 = por %p70, %p71
      %p73 = scmp.ne.s32.totalorder %s65, %s67
      %p74 = scmp.eq.s32.totalorder %s22, 3
      %p75 = por %p73, %p74
      %p76 = scmp.ne.s32.totalorder %s67, %s68
      %p77 = scmp.eq.s32.totalorder %s22, 0
      %p78 = por %p76, %p77
      %p79 = scmp.ne.s32.totalorder %s67, %s68
      %p80 = scmp.eq.s32.totalorder %s23, 3
      %p81 = por %p79, %p80
      %p83 = scmp.ne.s32.totalorder %s68, %s82
      %p84 = scmp.eq.s32.totalorder %s23, 0
      %p85 = por %p83, %p84
      %s87 = sadd.s32 %s86, 1
      %p90 = scmp.eq.s32.totalorder %s17, 3
      %p91 = scmp.ne.s32.totalorder %s86, %s88
      %p92 = scmp.eq.s32.totalorder %s17, 0
      %p93 = por %p91, %p92
      %p94 = scmp.ne.s32.totalorder %s86, %s88
      %p95 = scmp.eq.s32.totalorder %s22, 3
      %p96 = por %p94, %p95
      %p97 = scmp.ne.s32.totalorder %s88, %s89
      %p98 = scmp.eq.s32.totalorder %s22, 0
      %p99 = por %p97, %p98
      %p100 = scmp.ne.s32.totalorder %s88, %s89
      %p101 = scmp.eq.s32.totalorder %s23, 3
      %p102 = por %p100, %p101
      %p104 = scmp.ne.s32.totalorder %s89, %s103
      %p105 = scmp.eq.s32.totalorder %s23, 0
      %p106 = por %p104, %p105
      %s108 = sadd.s32 %s107, 1
      %p111 = scmp.eq.s32.totalorder %s17, 3
      %p112 = scmp.ne.s32.totalorder %s107, %s109
      %p113 = scmp.eq.s32.totalorder %s17, 0
      %p114 = por %p112, %p113
      %p115 = scmp.ne.s32.totalorder %s107, %s109
      %p116 = scmp.eq.s32.totalorder %s22, 3
      %p117 = por %p115, %p116
      %p118 = scmp.ne.s32.totalorder %s109, %s110
      %p119 = scmp.eq.s32.totalorder %s22, 0
      %p120 = por %p118, %p119
      %p121 = scmp.ne.s32.totalorder %s109, %s110
      %p122 = scmp.eq.s32.totalorder %s23, 3
      %p123 = por %p121, %p122
      %p125 = scmp.ne.s32.totalorder %s110, %s124
      %p126 = scmp.eq.s32.totalorder %s23, 0
      %p127 = por %p125, %p126
      %s128 = ssub.s32 %s24, %s36
      %s129 = ssub.s32 %s25, %s32
      %s130 = sor.u32 %s128, %s129
      %p131 = scmp.eq.s32.totalorder %s130, 0
      %s133 = sadd.s32 %s132, 1
      %s134 = scalar_select %p131, %s132, %s133
      %p137 = pneg %p131
      %p138 = scmp.eq.s32.totalorder %s17, 3
      %p139 = por %p137, %p138
      %p140 = scmp.ne.s32.totalorder %s132, %s135
      %p141 = scmp.eq.s32.totalorder %s17, 0
      %p142 = por %p140, %p141
      %p143 = scmp.ne.s32.totalorder %s132, %s135
      %p144 = scmp.eq.s32.totalorder %s22, 3
      %p145 = por %p143, %p144
      %p146 = scmp.ne.s32.totalorder %s135, %s136
      %p147 = scmp.eq.s32.totalorder %s22, 0
      %p148 = por %p146, %p147
      %p149 = scmp.ne.s32.totalorder %s135, %s136
      %p150 = scmp.eq.s32.totalorder %s23, 3
      %p151 = por %p149, %p150
      %p153 = scmp.ne.s32.totalorder %s136, %s152
      %p154 = scmp.eq.s32.totalorder %s23, 0
      %p155 = por %p153, %p154
      %p156 = scmp.le.s32.totalorder 1, %s17
      %p157 = scmp.lt.s32.totalorder %s17, 5
      %p158 = pnand %p156, %p157
      %p159 = pneg %p158
      // Predicated region
      $region9: #{tpu_custom_call.1} parent=5 // pred_check
        _
      $region10: #{tpu_custom_call.1} parent=5 // pred_check_branch
        %161 = sbr.rel (%p158) target = $region12
      $region11: #{tpu_custom_call.1} parent=5 // pred_region
        %s162 = ssub.s32 %s17, 1
        // Predicated region
        $region13: #{tpu_custom_call.1} parent=11 // pred_check
          %p163 = pneg %p78
        $region14: #{tpu_custom_call.1} parent=11 // pred_check_branch
          %165 = sbr.rel (%p163) target = $region16
        $region15: #{tpu_custom_call.1} parent=11 // pred_region
          %167 = vsyncadd [#allocation10], 0
          %s168 = sshll.u32 %s1, 4
          %s169 = int_to_ptr.hbm [resolvable:$true] %s168
          %s170 = sshll.u32 [#allocation9], 4
          %s171 = int_to_ptr.vmem [resolvable:$true] %s170
          %176 = dma.hbm_to_vmem [thread:$0]  %s169, 512, %s171, [#allocation10], 256, 256, 16
        $region16: #{tpu_custom_call.1} parent=11 // pred_fallthru
          _
        // Predicated region
        $region17: #{tpu_custom_call.1} parent=11 // pred_check
          %p177 = pneg %p99
        $region18: #{tpu_custom_call.1} parent=11 // pred_check_branch
          %179 = sbr.rel (%p177) target = $region20
        $region19: #{tpu_custom_call.1} parent=11 // pred_region
          %181 = vsyncadd [#allocation10], 0
          %s182 = sshll.u32 %s2, 4
          %s183 = int_to_ptr.hbm [resolvable:$true] %s182
          %s184 = sshll.u32 [#allocation11], 4
          %s185 = int_to_ptr.vmem [resolvable:$true] %s184
          %190 = dma.hbm_to_vmem [thread:$0]  %s183, 512, %s185, [#allocation10], 128, 128, 8
        $region20: #{tpu_custom_call.1} parent=11 // pred_fallthru
          _
        // Predicated region
        $region21: #{tpu_custom_call.1} parent=11 // pred_check
          %p191 = pneg %p120
        $region22: #{tpu_custom_call.1} parent=11 // pred_check_branch
          %193 = sbr.rel (%p191) target = $region24
        $region23: #{tpu_custom_call.1} parent=11 // pred_region
          _
        $region24: #{tpu_custom_call.1} parent=11 // pred_fallthru
          _
      $region12: #{tpu_custom_call.1} parent=5 // pred_fallthru
        _
      %p194 = scmp.lt.s32.totalorder %s17, 4
      // Predicated region
      $region25: #{tpu_custom_call.1} parent=5 // pred_check
        %p195 = pneg %p194
      $region26: #{tpu_custom_call.1} parent=5 // pred_check_branch
        %197 = sbr.rel (%p195) target = $region28
      $region27: #{tpu_custom_call.1} parent=5 // pred_region
        // Predicated region
        $region29: #{tpu_custom_call.1} parent=27 // pred_check
          %p198 = pneg %p51
        $region30: #{tpu_custom_call.1} parent=27 // pred_check_branch
          %200 = sbr.rel (%p198) target = $region32
        $region31: #{tpu_custom_call.1} parent=27 // pred_region
          %s201 = sand.u32 %s41, 1
          %s202 = scalar_lea.sflag [#allocation7], %s201
          %s203 = sand.u32 %s41, 1
          %s204 = smul.addr %s203, 32
          %s205 = scalar_lea.vmem [#allocation6], %s204
          %s206 = smul.u32 4, %s24
          %208 = vsyncadd %s202, 0
          %s209 = smul.addr %s206, 2
          %s210 = sadd.s32 %s25, %s209
          %s211 = smul.addr %s210, 8
          %s212 = scalar_lea.hbm %s0, %s211
          %s213 = sshll.u32 %s212, 4
          %s214 = int_to_ptr.hbm [resolvable:$true] %s213
          %s215 = sshll.u32 %s205, 4
          %s216 = int_to_ptr.vmem [resolvable:$true] %s215
          %221 = dma.hbm_to_vmem [thread:$0]  %s214, 512, %s216, %s202, 256, 128, 8
        $region32: #{tpu_custom_call.1} parent=27 // pred_fallthru
          _
      $region28: #{tpu_custom_call.1} parent=5 // pred_fallthru
        _
      %p222 = scmp.le.s32.totalorder 1, %s17
      %p223 = scmp.lt.s32.totalorder %s17, 5
      %p224 = pnand %p222, %p223
      %p225 = pneg %p224
      // Predicated region
      $region33: #{tpu_custom_call.1} parent=5 // pred_check
        _
      $region34: #{tpu_custom_call.1} parent=5 // pred_check_branch
        %227 = sbr.rel (%p224) target = $region36
      $region35: #{tpu_custom_call.1} parent=5 // pred_region
        %s228 = ssub.s32 %s17, 1
        %s229 = sand.u32 %s44, 1
        %s230 = scalar_lea.sflag [#allocation7], %s229
        %s231 = sand.u32 %s44, 1
        %s232 = smul.addr %s231, 32
        %s233 = scalar_lea.vmem [#allocation6], %s232
        // Predicated region
        $region37: #{tpu_custom_call.1} parent=35 // pred_check
          %p234 = pneg %p57
        $region38: #{tpu_custom_call.1} parent=35 // pred_check_branch
          %236 = sbr.rel (%p234) target = $region40
        $region39: #{tpu_custom_call.1} parent=35 // pred_region
          %238 = dma.done %s230, 512
        $region40: #{tpu_custom_call.1} parent=35 // pred_fallthru
          _
        // Predicated region
        $region41: #{tpu_custom_call.1} parent=35 // pred_check
          %p239 = pneg %p78
        $region42: #{tpu_custom_call.1} parent=35 // pred_check_branch
          %241 = sbr.rel (%p239) target = $region44
        $region43: #{tpu_custom_call.1} parent=35 // pred_region
          %243 = dma.done [#allocation10], 512
        $region44: #{tpu_custom_call.1} parent=35 // pred_fallthru
          _
        // Predicated region
        $region45: #{tpu_custom_call.1} parent=35 // pred_check
          %p244 = pneg %p99
        $region46: #{tpu_custom_call.1} parent=35 // pred_check_branch
          %246 = sbr.rel (%p244) target = $region48
        $region47: #{tpu_custom_call.1} parent=35 // pred_region
          %248 = dma.done [#allocation10], 512
        $region48: #{tpu_custom_call.1} parent=35 // pred_fallthru
          _
        %s249 = sand.u32 %s44, 1
        %s250 = scalar_lea.sflag [#allocation7], %s249
        %s251 = sand.u32 %s44, 1
        %s252 = smul.addr %s251, 32
        %s253 = scalar_lea.vmem [#allocation6], %s252
        %p254 = pneg %p57
        %p255 = pneg %p54
        %p256 = pneg %p78
        %p257 = pneg %p75
        %p258 = pneg %p99
        %p259 = pneg %p96
        %p260 = pneg %p120
        %p261 = pneg %p117
        %p262 = pneg %p148
        %p263 = pneg %p145
        %s264 = sand.u32 %s135, 1
        %s265 = scalar_lea.sflag [#allocation8], %s264
        %s266 = sand.u32 %s135, 1
        %s267 = smul.addr %s266, 32
        %s268 = scalar_lea.vmem [#allocation12], %s267
        %s269 = smul.u32 4, %s26
        %s270 = smul.u32 4, %s26
        %p271 = scmp.eq.s32.totalorder %s27, 0
        // Predicated region
        $region49: #{tpu_custom_call.1} parent=35 // pred_check
          %p272 = pneg %p271
        $region50: #{tpu_custom_call.1} parent=35 // pred_check_branch
          %274 = sbr.rel (%p272) target = $region52
        $region51: #{tpu_custom_call.1} parent=35 // pred_region
          %vm275 = vcmask 257024
          %276 = vst.msk [vmem:[#allocation4] sm:$0xf] %vm275, 0.0
          %277 = vst.msk [vmem:[#allocation5] sm:$0xf] %vm275, 0.0
        $region52: #{tpu_custom_call.1} parent=35 // pred_fallthru
          _
        %v278 = vld [vmem:[%s233] sm:$0xff]
        %v279 = vld [vmem:[%s233 + $0x8] sm:$0xff]
        %v280 = vld [vmem:[%s233 + $0x10] sm:$0xff]
        %v281 = vld [vmem:[%s233 + $0x18] sm:$0xff]
        %v282 = vld [vmem:[#allocation9] sm:$0xff]
        %v283 = vld [vmem:[#allocation9 + $0x8] sm:$0xff]
        %v284 = vld [vmem:[#allocation9 + $0x10] sm:$0xff]
        %v285 = vld [vmem:[#allocation9 + $0x18] sm:$0xff]
        %v286 = vld [vmem:[%s3] sm:$0x3]
        %v288 = vperm.slane %v286, 0
        %v289 = vperm.slane %v286, 1
        %vm292 = vcmask 130048
        %v294 = vsel %vm292, %v278, 0
        %v297 = vsel %vm292, %v279, 0
        %v300 = vsel %vm292, %v280, 0
        %v303 = vsel %vm292, %v281, 0
        %305 = vmatpush.msra.mxu0 0.0
        %306 = vmatpush.msra.mxu0 0.0
        %307 = vmatpush.msra.mxu0 0.0
        %308 = vmatpush.msra.mxu0 0.0
        %309 = vmatpush.msra.mxu0 0.0
        %310 = vmatpush.msra.mxu0 0.0
        %311 = vmatpush.msra.mxu0 0.0
        %312 = vmatpush.msra.mxu0 0.0
        %313 = vmatpush.msra.mxu0 0.0
        %314 = vmatpush.msra.mxu0 0.0
        %315 = vmatpush.msra.mxu0 0.0
        %316 = vmatpush.msra.mxu0 0.0
        %317 = vmatpush.msra.mxu0 0.0
        %318 = vmatpush.msra.mxu0 0.0
        %319 = vmatpush.msra.mxu0 %v284
        %320 = vmatpush.msra.mxu0 %v282
        %321 = vmatmul.f32.gmra.mxu0 %v294
        %v322 = vpop.f32.mrf.mxu0
        %v323 = vadd.f32 %v288, %v322
        %324 = vmatmul.f32.gmra.mxu0 %v297
        %v325 = vpop.f32.mrf.mxu0
        %v326 = vadd.f32 %v288, %v325
        %327 = vmatmul.f32.gmra.mxu0 %v300
        %v328 = vpop.f32.mrf.mxu0
        %v329 = vadd.f32 %v288, %v328
        %330 = vmatmul.f32.gmra.mxu0 %v303
        %v331 = vpop.f32.mrf.mxu0
        %v332 = vadd.f32 %v288, %v331
        %333 = vdwg.mxu0
        %334 = vmatpush.msra.mxu0 0.0
        %335 = vmatpush.msra.mxu0 0.0
        %336 = vmatpush.msra.mxu0 0.0
        %337 = vmatpush.msra.mxu0 0.0
        %338 = vmatpush.msra.mxu0 0.0
        %339 = vmatpush.msra.mxu0 0.0
        %340 = vmatpush.msra.mxu0 0.0
        %341 = vmatpush.msra.mxu0 0.0
        %342 = vmatpush.msra.mxu0 0.0
        %343 = vmatpush.msra.mxu0 0.0
        %344 = vmatpush.msra.mxu0 0.0
        %345 = vmatpush.msra.mxu0 0.0
        %346 = vmatpush.msra.mxu0 0.0
        %347 = vmatpush.msra.mxu0 0.0
        %348 = vmatpush.msra.mxu0 %v285
        %349 = vmatpush.msra.mxu0 %v283
        %350 = vmatmul.f32.gmra.mxu0 %v294
        %v351 = vpop.f32.mrf.mxu0
        %v352 = vadd.f32 %v289, %v351
        %353 = vmatmul.f32.gmra.mxu0 %v297
        %v354 = vpop.f32.mrf.mxu0
        %v355 = vadd.f32 %v289, %v354
        %356 = vmatmul.f32.gmra.mxu0 %v300
        %v357 = vpop.f32.mrf.mxu0
        %v358 = vadd.f32 %v289, %v357
        %359 = vmatmul.f32.gmra.mxu0 %v303
        %v360 = vpop.f32.mrf.mxu0
        %v361 = vadd.f32 %v289, %v360
        %362 = vdwg.mxu0
        %v365 = vrot.slane %v352, 7
        %vm366 = vcmask 1040384
        %v367 = vsel %vm366, %v323, %v365
        %vm368 = vcmask 1041409
        %v369 = vsel %vm368, %v323, %v365
        %v370 = vrot.slane %v369, 1
        %vm371 = vcmask 1042434
        %v372 = vsel %vm371, %v323, %v365
        %v373 = vrot.slane %v372, 2
        %vm374 = vcmask 1043459
        %v375 = vsel %vm374, %v323, %v365
        %v376 = vrot.slane %v375, 3
        %vm377 = vcmask 1044484
        %v378 = vsel %vm377, %v323, %v365
        %v379 = vrot.slane %v378, 4
        %vm380 = vcmask 1045509
        %v381 = vsel %vm380, %v323, %v365
        %v382 = vrot.slane %v381, 5
        %vm383 = vcmask 1046534
        %v384 = vsel %vm383, %v323, %v365
        %v385 = vrot.slane %v384, 6
        %vm386 = vcmask 1046528
        %v387 = vsel %vm386, %v365, %v323
        %v388 = vrot.slane %v387, 7
        %v397 = vlaneseq
        %vm398 = vcmp.ge.s32.totalorder %v397, 0
        %vm399 = vcmp.lt.s32.totalorder %v397, 160
        %vm400 = vmand %vm398, %vm399
        %401 = vst.msk [vmem:[#allocation2] ss:$4 sm:$0x3] %vm400, %v367
        %s402 = scalar_lea.vmem [#allocation2], 8
        %403 = vst.msk [vmem:[%s402] ss:$4 sm:$0x3] %vm400, %v370
        %s404 = scalar_lea.vmem [#allocation2], 16
        %405 = vst.msk [vmem:[%s404] ss:$4 sm:$0x3] %vm400, %v373
        %s406 = scalar_lea.vmem [#allocation2], 24
        %407 = vst.msk [vmem:[%s406] ss:$4 sm:$0x3] %vm400, %v376
        %s408 = scalar_lea.vmem [#allocation2], 32
        %409 = vst.msk [vmem:[%s408] ss:$4 sm:$0x3] %vm400, %v379
        %s410 = scalar_lea.vmem [#allocation2], 40
        %411 = vst.msk [vmem:[%s410] ss:$4 sm:$0x3] %vm400, %v382
        %s412 = scalar_lea.vmem [#allocation2], 48
        %413 = vst.msk [vmem:[%s412] ss:$4 sm:$0x3] %vm400, %v385
        %s414 = scalar_lea.vmem [#allocation2], 56
        %415 = vst.msk [vmem:[%s414] ss:$4 sm:$0x3] %vm400, %v388
        %v418 = vrot.slane %v355, 7
        %v419 = vsel %vm366, %v326, %v418
        %v420 = vsel %vm368, %v326, %v418
        %v421 = vrot.slane %v420, 1
        %v422 = vsel %vm371, %v326, %v418
        %v423 = vrot.slane %v422, 2
        %v424 = vsel %vm374, %v326, %v418
        %v425 = vrot.slane %v424, 3
        %v426 = vsel %vm377, %v326, %v418
        %v427 = vrot.slane %v426, 4
        %v428 = vsel %vm380, %v326, %v418
        %v429 = vrot.slane %v428, 5
        %v430 = vsel %vm383, %v326, %v418
        %v431 = vrot.slane %v430, 6
        %v432 = vsel %vm386, %v418, %v326
        %v433 = vrot.slane %v432, 7
        %s442 = scalar_lea.vmem [#allocation2], 1
        %443 = vst.msk [vmem:[%s442] ss:$4 sm:$0x3] %vm400, %v419
        %s444 = scalar_lea.vmem [#allocation2], 9
        %445 = vst.msk [vmem:[%s444] ss:$4 sm:$0x3] %vm400, %v421
        %s446 = scalar_lea.vmem [#allocation2], 17
        %447 = vst.msk [vmem:[%s446] ss:$4 sm:$0x3] %vm400, %v423
        %s448 = scalar_lea.vmem [#allocation2], 25
        %449 = vst.msk [vmem:[%s448] ss:$4 sm:$0x3] %vm400, %v425
        %s450 = scalar_lea.vmem [#allocation2], 33
        %451 = vst.msk [vmem:[%s450] ss:$4 sm:$0x3] %vm400, %v427
        %s452 = scalar_lea.vmem [#allocation2], 41
        %453 = vst.msk [vmem:[%s452] ss:$4 sm:$0x3] %vm400, %v429
        %s454 = scalar_lea.vmem [#allocation2], 49
        %455 = vst.msk [vmem:[%s454] ss:$4 sm:$0x3] %vm400, %v431
        %s456 = scalar_lea.vmem [#allocation2], 57
        %457 = vst.msk [vmem:[%s456] ss:$4 sm:$0x3] %vm400, %v433
        %v460 = vrot.slane %v358, 7
        %v461 = vsel %vm366, %v329, %v460
        %v462 = vsel %vm368, %v329, %v460
        %v463 = vrot.slane %v462, 1
        %v464 = vsel %vm371, %v329, %v460
        %v465 = vrot.slane %v464, 2
        %v466 = vsel %vm374, %v329, %v460
        %v467 = vrot.slane %v466, 3
        %v468 = vsel %vm377, %v329, %v460
        %v469 = vrot.slane %v468, 4
        %v470 = vsel %vm380, %v329, %v460
        %v471 = vrot.slane %v470, 5
        %v472 = vsel %vm383, %v329, %v460
        %v473 = vrot.slane %v472, 6
        %v474 = vsel %vm386, %v460, %v329
        %v475 = vrot.slane %v474, 7
        %s484 = scalar_lea.vmem [#allocation2], 2
        %485 = vst.msk [vmem:[%s484] ss:$4 sm:$0x3] %vm400, %v461
        %s486 = scalar_lea.vmem [#allocation2], 10
        %487 = vst.msk [vmem:[%s486] ss:$4 sm:$0x3] %vm400, %v463
        %s488 = scalar_lea.vmem [#allocation2], 18
        %489 = vst.msk [vmem:[%s488] ss:$4 sm:$0x3] %vm400, %v465
        %s490 = scalar_lea.vmem [#allocation2], 26
        %491 = vst.msk [vmem:[%s490] ss:$4 sm:$0x3] %vm400, %v467
        %s492 = scalar_lea.vmem [#allocation2], 34
        %493 = vst.msk [vmem:[%s492] ss:$4 sm:$0x3] %vm400, %v469
        %s494 = scalar_lea.vmem [#allocation2], 42
        %495 = vst.msk [vmem:[%s494] ss:$4 sm:$0x3] %vm400, %v471
        %s496 = scalar_lea.vmem [#allocation2], 50
        %497 = vst.msk [vmem:[%s496] ss:$4 sm:$0x3] %vm400, %v473
        %s498 = scalar_lea.vmem [#allocation2], 58
        %499 = vst.msk [vmem:[%s498] ss:$4 sm:$0x3] %vm400, %v475
        %v502 = vrot.slane %v361, 7
        %v503 = vsel %vm366, %v332, %v502
        %v504 = vsel %vm368, %v332, %v502
        %v505 = vrot.slane %v504, 1
        %v506 = vsel %vm371, %v332, %v502
        %v507 = vrot.slane %v506, 2
        %v508 = vsel %vm374, %v332, %v502
        %v509 = vrot.slane %v508, 3
        %v510 = vsel %vm377, %v332, %v502
        %v511 = vrot.slane %v510, 4
        %v512 = vsel %vm380, %v332, %v502
        %v513 = vrot.slane %v512, 5
        %v514 = vsel %vm383, %v332, %v502
        %v515 = vrot.slane %v514, 6
        %v516 = vsel %vm386, %v502, %v332
        %v517 = vrot.slane %v516, 7
        %s526 = scalar_lea.vmem [#allocation2], 3
        %527 = vst.msk [vmem:[%s526] ss:$4 sm:$0x3] %vm400, %v503
        %s528 = scalar_lea.vmem [#allocation2], 11
        %529 = vst.msk [vmem:[%s528] ss:$4 sm:$0x3] %vm400, %v505
        %s530 = scalar_lea.vmem [#allocation2], 19
        %531 = vst.msk [vmem:[%s530] ss:$4 sm:$0x3] %vm400, %v507
        %s532 = scalar_lea.vmem [#allocation2], 27
        %533 = vst.msk [vmem:[%s532] ss:$4 sm:$0x3] %vm400, %v509
        %s534 = scalar_lea.vmem [#allocation2], 35
        %535 = vst.msk [vmem:[%s534] ss:$4 sm:$0x3] %vm400, %v511
        %s536 = scalar_lea.vmem [#allocation2], 43
        %537 = vst.msk [vmem:[%s536] ss:$4 sm:$0x3] %vm400, %v513
        %s538 = scalar_lea.vmem [#allocation2], 51
        %539 = vst.msk [vmem:[%s538] ss:$4 sm:$0x3] %vm400, %v515
        %s540 = scalar_lea.vmem [#allocation2], 59
        %541 = vst.msk [vmem:[%s540] ss:$4 sm:$0x3] %vm400, %v517
        %v542 = vld [vmem:[#allocation11] sm:$0xff]
        %v543 = vld [vmem:[#allocation11 + $0x8] sm:$0xff]
        %v544 = vld [vmem:[#allocation11 + $0x10] sm:$0xff]
        %v545 = vld [vmem:[#allocation11 + $0x18] sm:$0xff]
        %v546 = vld [vmem:[#allocation4] sm:$0xf]
        %v547 = vld [vmem:[#allocation5] sm:$0xf]
        %v548 = vld [vmem:[#allocation2] sm:$0xff]
        %vm549 = vcmask 261120
        %v551 = vsel %vm549, %v546, 0
        %553 = vmatpush.msra.mxu0 0.0
        %554 = vmatpush.msra.mxu0 0.0
        %555 = vmatpush.msra.mxu0 0.0
        %556 = vmatpush.msra.mxu0 0.0
        %557 = vmatpush.msra.mxu0 0.0
        %558 = vmatpush.msra.mxu0 0.0
        %559 = vmatpush.msra.mxu0 0.0
        %560 = vmatpush.msra.mxu0 0.0
        %561 = vmatpush.msra.mxu0 0.0
        %562 = vmatpush.msra.mxu0 0.0
        %563 = vmatpush.msra.mxu0 0.0
        %564 = vmatpush.msra.mxu0 0.0
        %565 = vmatpush.msra.mxu0 %v545
        %566 = vmatpush.msra.mxu0 %v544
        %567 = vmatpush.msra.mxu0 %v543
        %568 = vmatpush.msra.mxu0 %v542
        %569 = vmatmul.f32.gmra.mxu0 %v551
        %v570 = vpop.f32.mrf.mxu0
        %v571 = vadd.f32 0.0, %v570
        %572 = vdwg.mxu0
        %v573 = vadd.f32 %v548, %v571
        %v574 = vxor.u32 %v573, 2147483648
        %v575 = vmul.f32 %v574, 1.442695
        %v576 = vpow.pop %v575
        %v577 = vadd.f32 %v576, 1.0
        %v578 = vrcp.pop %v577
        %v579 = vmul.f32 %v577, %v578
        %v580 = vsub.f32 1.0, %v579
        %v581 = vmul.f32 %v578, %v580
        %v582 = vadd.f32 %v578, %v581
        %vm583 = vweird.f32 %v577
        %vm584 = vweird.f32 %v578
        %vm585 = vmor %vm583, %vm584
        %v586 = vsel %vm585, %v578, %v582
        %v587 = vand.u32 2147483647, %v577
        %vm588 = vcmp.eq.f32.partialorder %v587, 8.507059e+37
        %v589 = vand.u32 %v577, 2147483648
        %v590 = vor.u32 1.1754944e-38, %v589
        %v591 = vsel %vm588, %v590, %v586
        %v592 = vmul.f32 1.0, %v591
        %v593 = vtanh.pop %v573
        %595 = vrot.lane.b32.xlu0 %v547, 32
        %v596 = vpop.permute.xlu0 %595
        %v598 = vmul.f32 %v592, %v596
        %600 = vrot.lane.b32.xlu0 %v593, 32
        %v601 = vpop.permute.xlu0 %600
        %v603 = vmul.f32 %v592, %v601
        %605 = vrot.lane.b32.xlu0 %v603, 32
        %v606 = vpop.permute.xlu0 %605
        %v608 = vadd.f32 %v598, %v606
        %v609 = vtanh.pop %v608
        %611 = vrot.lane.b32.xlu0 %v609, 32
        %v612 = vpop.permute.xlu0 %611
        %v614 = vmul.f32 %v592, %v612
        %616 = vst [vmem:[#allocation1] ss:$2 sm:$0xff] %v614
        %v617 = vld.sshfl [vmem:[#allocation1] sm:$0xff pattern:$0x75316420]
        %618 = vrot.lane.b32.xlu0 %v617, 64
        %v619 = vpop.permute.xlu0 %618
        %vm621 = vcmask 257024
        %622 = vst.msk [vmem:[#allocation3] sm:$0xf] %vm621, %v619
        %s623 = scalar_lea.vmem [#allocation2], 8
        %v624 = vld [vmem:[%s623] sm:$0xff]
        %625 = vst [vmem:[#allocation1] ss:$2 sm:$0xff] %v614
        %v626 = vld.sshfl [vmem:[#allocation1] sm:$0xff pattern:$0x75316420]
        %627 = vrot.lane.b32.xlu0 %v626, 64
        %v628 = vpop.permute.xlu0 %627
        %v629 = vsel %vm549, %v628, 0
        %631 = vmatpush.msra.mxu0 0.0
        %632 = vmatpush.msra.mxu0 0.0
        %633 = vmatpush.msra.mxu0 0.0
        %634 = vmatpush.msra.mxu0 0.0
        %635 = vmatpush.msra.mxu0 0.0
        %636 = vmatpush.msra.mxu0 0.0
        %637 = vmatpush.msra.mxu0 0.0
        %638 = vmatpush.msra.mxu0 0.0
        %639 = vmatpush.msra.mxu0 0.0
        %640 = vmatpush.msra.mxu0 0.0
        %641 = vmatpush.msra.mxu0 0.0
        %642 = vmatpush.msra.mxu0 0.0
        %643 = vmatpush.msra.mxu0 %v545
        %644 = vmatpush.msra.mxu0 %v544
        %645 = vmatpush.msra.mxu0 %v543
        %646 = vmatpush.msra.mxu0 %v542
        %647 = vmatmul.f32.gmra.mxu0 %v629
        %v648 = vpop.f32.mrf.mxu0
        %v649 = vadd.f32 0.0, %v648
        %650 = vdwg.mxu0
        %v651 = vadd.f32 %v624, %v649
        %v652 = vxor.u32 %v651, 2147483648
        %v653 = vmul.f32 %v652, 1.442695
        %v654 = vpow.pop %v653
        %v655 = vadd.f32 %v654, 1.0
        %v656 = vrcp.pop %v655
        %v657 = vmul.f32 %v655, %v656
        %v658 = vsub.f32 1.0, %v657
        %v659 = vmul.f32 %v656, %v658
        %v660 = vadd.f32 %v656, %v659
        %vm661 = vweird.f32 %v655
        %vm662 = vweird.f32 %v656
        %vm663 = vmor %vm661, %vm662
        %v664 = vsel %vm663, %v656, %v660
        %v665 = vand.u32 2147483647, %v655
        %vm666 = vcmp.eq.f32.partialorder %v665, 8.507059e+37
        %v667 = vand.u32 %v655, 2147483648
        %v668 = vor.u32 1.1754944e-38, %v667
        %v669 = vsel %vm666, %v668, %v664
        %v670 = vmul.f32 1.0, %v669
        %v671 = vtanh.pop %v651
        %v672 = vmul.f32 %v670, %v608
        %674 = vrot.lane.b32.xlu0 %v671, 32
        %v675 = vpop.permute.xlu0 %674
        %v677 = vmul.f32 %v670, %v675
        %679 = vrot.lane.b32.xlu0 %v677, 32
        %v680 = vpop.permute.xlu0 %679
        %v682 = vadd.f32 %v672, %v680
        %v683 = vtanh.pop %v682
        %685 = vrot.lane.b32.xlu0 %v683, 32
        %v686 = vpop.permute.xlu0 %685
        %v688 = vmul.f32 %v670, %v686
        %690 = vst [vmem:[#allocation1] ss:$2 sm:$0xff] %v688
        %v691 = vld.sshfl [vmem:[#allocation1] sm:$0xff pattern:$0x75316420]
        %692 = vrot.lane.b32.xlu0 %v691, 64
        %v693 = vpop.permute.xlu0 %692
        %s695 = scalar_lea.vmem [#allocation3], 4
        %696 = vst.msk [vmem:[%s695] sm:$0xf] %vm621, %v693
        %s697 = scalar_lea.vmem [#allocation2], 16
        %v698 = vld [vmem:[%s697] sm:$0xff]
        %699 = vst [vmem:[#allocation1] ss:$2 sm:$0xff] %v688
        %v700 = vld.sshfl [vmem:[#allocation1] sm:$0xff pattern:$0x75316420]
        %701 = vrot.lane.b32.xlu0 %v700, 64
        %v702 = vpop.permute.xlu0 %701
        %v703 = vsel %vm549, %v702, 0
        %705 = vmatpush.msra.mxu0 0.0
        %706 = vmatpush.msra.mxu0 0.0
        %707 = vmatpush.msra.mxu0 0.0
        %708 = vmatpush.msra.mxu0 0.0
        %709 = vmatpush.msra.mxu0 0.0
        %710 = vmatpush.msra.mxu0 0.0
        %711 = vmatpush.msra.mxu0 0.0
        %712 = vmatpush.msra.mxu0 0.0
        %713 = vmatpush.msra.mxu0 0.0
        %714 = vmatpush.msra.mxu0 0.0
        %715 = vmatpush.msra.mxu0 0.0
        %716 = vmatpush.msra.mxu0 0.0
        %717 = vmatpush.msra.mxu0 %v545
        %718 = vmatpush.msra.mxu0 %v544
        %719 = vmatpush.msra.mxu0 %v543
        %720 = vmatpush.msra.mxu0 %v542
        %721 = vmatmul.f32.gmra.mxu0 %v703
        %v722 = vpop.f32.mrf.mxu0
        %v723 = vadd.f32 0.0, %v722
        %724 = vdwg.mxu0
        %v725 = vadd.f32 %v698, %v723
        %v726 = vxor.u32 %v725, 2147483648
        %v727 = vmul.f32 %v726, 1.442695
        %v728 = vpow.pop %v727
        %v729 = vadd.f32 %v728, 1.0
        %v730 = vrcp.pop %v729
        %v731 = vmul.f32 %v729, %v730
        %v732 = vsub.f32 1.0, %v731
        %v733 = vmul.f32 %v730, %v732
        %v734 = vadd.f32 %v730, %v733
        %vm735 = vweird.f32 %v729
        %vm736 = vweird.f32 %v730
        %vm737 = vmor %vm735, %vm736
        %v738 = vsel %vm737, %v730, %v734
        %v739 = vand.u32 2147483647, %v729
        %vm740 = vcmp.eq.f32.partialorder %v739, 8.507059e+37
        %v741 = vand.u32 %v729, 2147483648
        %v742 = vor.u32 1.1754944e-38, %v741
        %v743 = vsel %vm740, %v742, %v738
        %v744 = vmul.f32 1.0, %v743
        %v745 = vtanh.pop %v725
        %v746 = vmul.f32 %v744, %v682
        %748 = vrot.lane.b32.xlu0 %v745, 32
        %v749 = vpop.permute.xlu0 %748
        %v751 = vmul.f32 %v744, %v749
        %753 = vrot.lane.b32.xlu0 %v751, 32
        %v754 = vpop.permute.xlu0 %753
        %v756 = vadd.f32 %v746, %v754
        %v757 = vtanh.pop %v756
        %759 = vrot.lane.b32.xlu0 %v757, 32
        %v760 = vpop.permute.xlu0 %759
        %v762 = vmul.f32 %v744, %v760
        %764 = vst [vmem:[#allocation1] ss:$2 sm:$0xff] %v762
        %v765 = vld.sshfl [vmem:[#allocation1] sm:$0xff pattern:$0x75316420]
        %766 = vrot.lane.b32.xlu0 %v765, 64
        %v767 = vpop.permute.xlu0 %766
        %s769 = scalar_lea.vmem [#allocation3], 8
        %770 = vst.msk [vmem:[%s769] sm:$0xf] %vm621, %v767
        %s771 = scalar_lea.vmem [#allocation2], 24
        %v772 = vld [vmem:[%s771] sm:$0xff]
        %773 = vst [vmem:[#allocation1] ss:$2 sm:$0xff] %v762
        %v774 = vld.sshfl [vmem:[#allocation1] sm:$0xff pattern:$0x75316420]
        %775 = vrot.lane.b32.xlu0 %v774, 64
        %v776 = vpop.permute.xlu0 %775
        %v777 = vsel %vm549, %v776, 0
        %779 = vmatpush.msra.mxu0 0.0
        %780 = vmatpush.msra.mxu0 0.0
        %781 = vmatpush.msra.mxu0 0.0
        %782 = vmatpush.msra.mxu0 0.0
        %783 = vmatpush.msra.mxu0 0.0
        %784 = vmatpush.msra.mxu0 0.0
        %785 = vmatpush.msra.mxu0 0.0
        %786 = vmatpush.msra.mxu0 0.0
        %787 = vmatpush.msra.mxu0 0.0
        %788 = vmatpush.msra.mxu0 0.0
        %789 = vmatpush.msra.mxu0 0.0
        %790 = vmatpush.msra.mxu0 0.0
        %791 = vmatpush.msra.mxu0 %v545
        %792 = vmatpush.msra.mxu0 %v544
        %793 = vmatpush.msra.mxu0 %v543
        %794 = vmatpush.msra.mxu0 %v542
        %795 = vmatmul.f32.gmra.mxu0 %v777
        %v796 = vpop.f32.mrf.mxu0
        %v797 = vadd.f32 0.0, %v796
        %798 = vdwg.mxu0
        %v799 = vadd.f32 %v772, %v797
        %v800 = vxor.u32 %v799, 2147483648
        %v801 = vmul.f32 %v800, 1.442695
        %v802 = vpow.pop %v801
        %v803 = vadd.f32 %v802, 1.0
        %v804 = vrcp.pop %v803
        %v805 = vmul.f32 %v803, %v804
        %v806 = vsub.f32 1.0, %v805
        %v807 = vmul.f32 %v804, %v806
        %v808 = vadd.f32 %v804, %v807
        %vm809 = vweird.f32 %v803
        %vm810 = vweird.f32 %v804
        %vm811 = vmor %vm809, %vm810
        %v812 = vsel %vm811, %v804, %v808
        %v813 = vand.u32 2147483647, %v803
        %vm814 = vcmp.eq.f32.partialorder %v813, 8.507059e+37
        %v815 = vand.u32 %v803, 2147483648
        %v816 = vor.u32 1.1754944e-38, %v815
        %v817 = vsel %vm814, %v816, %v812
        %v818 = vmul.f32 1.0, %v817
        %v819 = vtanh.pop %v799
        %v820 = vmul.f32 %v818, %v756
        %822 = vrot.lane.b32.xlu0 %v819, 32
        %v823 = vpop.permute.xlu0 %822
        %v825 = vmul.f32 %v818, %v823
        %827 = vrot.lane.b32.xlu0 %v825, 32
        %v828 = vpop.permute.xlu0 %827
        %v830 = vadd.f32 %v820, %v828
        %v831 = vtanh.pop %v830
        %833 = vrot.lane.b32.xlu0 %v831, 32
        %v834 = vpop.permute.xlu0 %833
        %v836 = vmul.f32 %v818, %v834
        %838 = vst [vmem:[#allocation1] ss:$2 sm:$0xff] %v836
        %v839 = vld.sshfl [vmem:[#allocation1] sm:$0xff pattern:$0x75316420]
        %840 = vrot.lane.b32.xlu0 %v839, 64
        %v841 = vpop.permute.xlu0 %840
        %s843 = scalar_lea.vmem [#allocation3], 12
        %844 = vst.msk [vmem:[%s843] sm:$0xf] %vm621, %v841
        %s845 = scalar_lea.vmem [#allocation2], 32
        %v846 = vld [vmem:[%s845] sm:$0xff]
        %847 = vst [vmem:[#allocation1] ss:$2 sm:$0xff] %v836
        %v848 = vld.sshfl [vmem:[#allocation1] sm:$0xff pattern:$0x75316420]
        %849 = vrot.lane.b32.xlu0 %v848, 64
        %v850 = vpop.permute.xlu0 %849
        %v851 = vsel %vm549, %v850, 0
        %853 = vmatpush.msra.mxu0 0.0
        %854 = vmatpush.msra.mxu0 0.0
        %855 = vmatpush.msra.mxu0 0.0
        %856 = vmatpush.msra.mxu0 0.0
        %857 = vmatpush.msra.mxu0 0.0
        %858 = vmatpush.msra.mxu0 0.0
        %859 = vmatpush.msra.mxu0 0.0
        %860 = vmatpush.msra.mxu0 0.0
        %861 = vmatpush.msra.mxu0 0.0
        %862 = vmatpush.msra.mxu0 0.0
        %863 = vmatpush.msra.mxu0 0.0
        %864 = vmatpush.msra.mxu0 0.0
        %865 = vmatpush.msra.mxu0 %v545
        %866 = vmatpush.msra.mxu0 %v544
        %867 = vmatpush.msra.mxu0 %v543
        %868 = vmatpush.msra.mxu0 %v542
        %869 = vmatmul.f32.gmra.mxu0 %v851
        %v870 = vpop.f32.mrf.mxu0
        %v871 = vadd.f32 0.0, %v870
        %872 = vdwg.mxu0
        %v873 = vadd.f32 %v846, %v871
        %v874 = vxor.u32 %v873, 2147483648
        %v875 = vmul.f32 %v874, 1.442695
        %v876 = vpow.pop %v875
        %v877 = vadd.f32 %v876, 1.0
        %v878 = vrcp.pop %v877
        %v879 = vmul.f32 %v877, %v878
        %v880 = vsub.f32 1.0, %v879
        %v881 = vmul.f32 %v878, %v880
        %v882 = vadd.f32 %v878, %v881
        %vm883 = vweird.f32 %v877
        %vm884 = vweird.f32 %v878
        %vm885 = vmor %vm883, %vm884
        %v886 = vsel %vm885, %v878, %v882
        %v887 = vand.u32 2147483647, %v877
        %vm888 = vcmp.eq.f32.partialorder %v887, 8.507059e+37
        %v889 = vand.u32 %v877, 2147483648
        %v890 = vor.u32 1.1754944e-38, %v889
        %v891 = vsel %vm888, %v890, %v886
        %v892 = vmul.f32 1.0, %v891
        %v893 = vtanh.pop %v873
        %v894 = vmul.f32 %v892, %v830
        %896 = vrot.lane.b32.xlu0 %v893, 32
        %v897 = vpop.permute.xlu0 %896
        %v899 = vmul.f32 %v892, %v897
        %901 = vrot.lane.b32.xlu0 %v899, 32
        %v902 = vpop.permute.xlu0 %901
        %v904 = vadd.f32 %v894, %v902
        %v905 = vtanh.pop %v904
        %907 = vrot.lane.b32.xlu0 %v905, 32
        %v908 = vpop.permute.xlu0 %907
        %v910 = vmul.f32 %v892, %v908
        %912 = vst [vmem:[#allocation1] ss:$2 sm:$0xff] %v910
        %v913 = vld.sshfl [vmem:[#allocation1] sm:$0xff pattern:$0x75316420]
        %914 = vrot.lane.b32.xlu0 %v913, 64
        %v915 = vpop.permute.xlu0 %914
        %s917 = scalar_lea.vmem [#allocation3], 16
        %918 = vst.msk [vmem:[%s917] sm:$0xf] %vm621, %v915
        %s919 = scalar_lea.vmem [#allocation2], 40
        %v920 = vld [vmem:[%s919] sm:$0xff]
        %921 = vst [vmem:[#allocation1] ss:$2 sm:$0xff] %v910
        %v922 = vld.sshfl [vmem:[#allocation1] sm:$0xff pattern:$0x75316420]
        %923 = vrot.lane.b32.xlu0 %v922, 64
        %v924 = vpop.permute.xlu0 %923
        %v925 = vsel %vm549, %v924, 0
        %927 = vmatpush.msra.mxu0 0.0
        %928 = vmatpush.msra.mxu0 0.0
        %929 = vmatpush.msra.mxu0 0.0
        %930 = vmatpush.msra.mxu0 0.0
        %931 = vmatpush.msra.mxu0 0.0
        %932 = vmatpush.msra.mxu0 0.0
        %933 = vmatpush.msra.mxu0 0.0
        %934 = vmatpush.msra.mxu0 0.0
        %935 = vmatpush.msra.mxu0 0.0
        %936 = vmatpush.msra.mxu0 0.0
        %937 = vmatpush.msra.mxu0 0.0
        %938 = vmatpush.msra.mxu0 0.0
        %939 = vmatpush.msra.mxu0 %v545
        %940 = vmatpush.msra.mxu0 %v544
        %941 = vmatpush.msra.mxu0 %v543
        %942 = vmatpush.msra.mxu0 %v542
        %943 = vmatmul.f32.gmra.mxu0 %v925
        %v944 = vpop.f32.mrf.mxu0
        %v945 = vadd.f32 0.0, %v944
        %946 = vdwg.mxu0
        %v947 = vadd.f32 %v920, %v945
        %v948 = vxor.u32 %v947, 2147483648
        %v949 = vmul.f32 %v948, 1.442695
        %v950 = vpow.pop %v949
        %v951 = vadd.f32 %v950, 1.0
        %v952 = vrcp.pop %v951
        %v953 = vmul.f32 %v951, %v952
        %v954 = vsub.f32 1.0, %v953
        %v955 = vmul.f32 %v952, %v954
        %v956 = vadd.f32 %v952, %v955
        %vm957 = vweird.f32 %v951
        %vm958 = vweird.f32 %v952
        %vm959 = vmor %vm957, %vm958
        %v960 = vsel %vm959, %v952, %v956
        %v961 = vand.u32 2147483647, %v951
        %vm962 = vcmp.eq.f32.partialorder %v961, 8.507059e+37
        %v963 = vand.u32 %v951, 2147483648
        %v964 = vor.u32 1.1754944e-38, %v963
        %v965 = vsel %vm962, %v964, %v960
        %v966 = vmul.f32 1.0, %v965
        %v967 = vtanh.pop %v947
        %v968 = vmul.f32 %v966, %v904
        %970 = vrot.lane.b32.xlu0 %v967, 32
        %v971 = vpop.permute.xlu0 %970
        %v973 = vmul.f32 %v966, %v971
        %975 = vrot.lane.b32.xlu0 %v973, 32
        %v976 = vpop.permute.xlu0 %975
        %v978 = vadd.f32 %v968, %v976
        %v979 = vtanh.pop %v978
        %981 = vrot.lane.b32.xlu0 %v979, 32
        %v982 = vpop.permute.xlu0 %981
        %v984 = vmul.f32 %v966, %v982
        %986 = vst [vmem:[#allocation1] ss:$2 sm:$0xff] %v984
        %v987 = vld.sshfl [vmem:[#allocation1] sm:$0xff pattern:$0x75316420]
        %988 = vrot.lane.b32.xlu0 %v987, 64
        %v989 = vpop.permute.xlu0 %988
        %s991 = scalar_lea.vmem [#allocation3], 20
        %992 = vst.msk [vmem:[%s991] sm:$0xf] %vm621, %v989
        %s993 = scalar_lea.vmem [#allocation2], 48
        %v994 = vld [vmem:[%s993] sm:$0xff]
        %995 = vst [vmem:[#allocation1] ss:$2 sm:$0xff] %v984
        %v996 = vld.sshfl [vmem:[#allocation1] sm:$0xff pattern:$0x75316420]
        %997 = vrot.lane.b32.xlu0 %v996, 64
        %v998 = vpop.permute.xlu0 %997
        %v999 = vsel %vm549, %v998, 0
        %1001 = vmatpush.msra.mxu0 0.0
        %1002 = vmatpush.msra.mxu0 0.0
        %1003 = vmatpush.msra.mxu0 0.0
        %1004 = vmatpush.msra.mxu0 0.0
        %1005 = vmatpush.msra.mxu0 0.0
        %1006 = vmatpush.msra.mxu0 0.0
        %1007 = vmatpush.msra.mxu0 0.0
        %1008 = vmatpush.msra.mxu0 0.0
        %1009 = vmatpush.msra.mxu0 0.0
        %1010 = vmatpush.msra.mxu0 0.0
        %1011 = vmatpush.msra.mxu0 0.0
        %1012 = vmatpush.msra.mxu0 0.0
        %1013 = vmatpush.msra.mxu0 %v545
        %1014 = vmatpush.msra.mxu0 %v544
        %1015 = vmatpush.msra.mxu0 %v543
        %1016 = vmatpush.msra.mxu0 %v542
        %1017 = vmatmul.f32.gmra.mxu0 %v999
        %v1018 = vpop.f32.mrf.mxu0
        %v1019 = vadd.f32 0.0, %v1018
        %1020 = vdwg.mxu0
        %v1021 = vadd.f32 %v994, %v1019
        %v1022 = vxor.u32 %v1021, 2147483648
        %v1023 = vmul.f32 %v1022, 1.442695
        %v1024 = vpow.pop %v1023
        %v1025 = vadd.f32 %v1024, 1.0
        %v1026 = vrcp.pop %v1025
        %v1027 = vmul.f32 %v1025, %v1026
        %v1028 = vsub.f32 1.0, %v1027
        %v1029 = vmul.f32 %v1026, %v1028
        %v1030 = vadd.f32 %v1026, %v1029
        %vm1031 = vweird.f32 %v1025
        %vm1032 = vweird.f32 %v1026
        %vm1033 = vmor %vm1031, %vm1032
        %v1034 = vsel %vm1033, %v1026, %v1030
        %v1035 = vand.u32 2147483647, %v1025
        %vm1036 = vcmp.eq.f32.partialorder %v1035, 8.507059e+37
        %v1037 = vand.u32 %v1025, 2147483648
        %v1038 = vor.u32 1.1754944e-38, %v1037
        %v1039 = vsel %vm1036, %v1038, %v1034
        %v1040 = vmul.f32 1.0, %v1039
        %v1041 = vtanh.pop %v1021
        %v1042 = vmul.f32 %v1040, %v978
        %1044 = vrot.lane.b32.xlu0 %v1041, 32
        %v1045 = vpop.permute.xlu0 %1044
        %v1047 = vmul.f32 %v1040, %v1045
        %1049 = vrot.lane.b32.xlu0 %v1047, 32
        %v1050 = vpop.permute.xlu0 %1049
        %v1052 = vadd.f32 %v1042, %v1050
        %v1053 = vtanh.pop %v1052
        %1055 = vrot.lane.b32.xlu0 %v1053, 32
        %v1056 = vpop.permute.xlu0 %1055
        %v1058 = vmul.f32 %v1040, %v1056
        %1060 = vst [vmem:[#allocation1] ss:$2 sm:$0xff] %v1058
        %v1061 = vld.sshfl [vmem:[#allocation1] sm:$0xff pattern:$0x75316420]
        %1062 = vrot.lane.b32.xlu0 %v1061, 64
        %v1063 = vpop.permute.xlu0 %1062
        %s1065 = scalar_lea.vmem [#allocation3], 24
        %1066 = vst.msk [vmem:[%s1065] sm:$0xf] %vm621, %v1063
        %s1067 = scalar_lea.vmem [#allocation2], 56
        %v1068 = vld [vmem:[%s1067] sm:$0xff]
        %1069 = vst [vmem:[#allocation1] ss:$2 sm:$0xff] %v1058
        %v1070 = vld.sshfl [vmem:[#allocation1] sm:$0xff pattern:$0x75316420]
        %1071 = vrot.lane.b32.xlu0 %v1070, 64
        %v1072 = vpop.permute.xlu0 %1071
        %v1073 = vsel %vm549, %v1072, 0
        %1075 = vmatpush.msra.mxu0 0.0
        %1076 = vmatpush.msra.mxu0 0.0
        %1077 = vmatpush.msra.mxu0 0.0
        %1078 = vmatpush.msra.mxu0 0.0
        %1079 = vmatpush.msra.mxu0 0.0
        %1080 = vmatpush.msra.mxu0 0.0
        %1081 = vmatpush.msra.mxu0 0.0
        %1082 = vmatpush.msra.mxu0 0.0
        %1083 = vmatpush.msra.mxu0 0.0
        %1084 = vmatpush.msra.mxu0 0.0
        %1085 = vmatpush.msra.mxu0 0.0
        %1086 = vmatpush.msra.mxu0 0.0
        %1087 = vmatpush.msra.mxu0 %v545
        %1088 = vmatpush.msra.mxu0 %v544
        %1089 = vmatpush.msra.mxu0 %v543
        %1090 = vmatpush.msra.mxu0 %v542
        %1091 = vmatmul.f32.gmra.mxu0 %v1073
        %v1092 = vpop.f32.mrf.mxu0
        %v1093 = vadd.f32 0.0, %v1092
        %1094 = vdwg.mxu0
        %v1095 = vadd.f32 %v1068, %v1093
        %v1096 = vxor.u32 %v1095, 2147483648
        %v1097 = vmul.f32 %v1096, 1.442695
        %v1098 = vpow.pop %v1097
        %v1099 = vadd.f32 %v1098, 1.0
        %v1100 = vrcp.pop %v1099
        %v1101 = vmul.f32 %v1099, %v1100
        %v1102 = vsub.f32 1.0, %v1101
        %v1103 = vmul.f32 %v1100, %v1102
        %v1104 = vadd.f32 %v1100, %v1103
        %vm1105 = vweird.f32 %v1099
        %vm1106 = vweird.f32 %v1100
        %vm1107 = vmor %vm1105, %vm1106
        %v1108 = vsel %vm1107, %v1100, %v1104
        %v1109 = vand.u32 2147483647, %v1099
        %vm1110 = vcmp.eq.f32.partialorder %v1109, 8.507059e+37
        %v1111 = vand.u32 %v1099, 2147483648
        %v1112 = vor.u32 1.1754944e-38, %v1111
        %v1113 = vsel %vm1110, %v1112, %v1108
        %v1114 = vmul.f32 1.0, %v1113
        %v1115 = vtanh.pop %v1095
        %v1116 = vmul.f32 %v1114, %v1052
        %1118 = vrot.lane.b32.xlu0 %v1115, 32
        %v1119 = vpop.permute.xlu0 %1118
        %v1121 = vmul.f32 %v1114, %v1119
        %1123 = vrot.lane.b32.xlu0 %v1121, 32
        %v1124 = vpop.permute.xlu0 %1123
        %v1126 = vadd.f32 %v1116, %v1124
        %v1127 = vtanh.pop %v1126
        %1129 = vrot.lane.b32.xlu0 %v1127, 32
        %v1130 = vpop.permute.xlu0 %1129
        %v1132 = vmul.f32 %v1114, %v1130
        %1134 = vst [vmem:[#allocation1] ss:$2 sm:$0xff] %v1132
        %v1135 = vld.sshfl [vmem:[#allocation1] sm:$0xff pattern:$0x75316420]
        %1136 = vrot.lane.b32.xlu0 %v1135, 64
        %v1137 = vpop.permute.xlu0 %1136
        %s1139 = scalar_lea.vmem [#allocation3], 28
        %1140 = vst.msk [vmem:[%s1139] sm:$0xf] %vm621, %v1137
        %1141 = vst [vmem:[#allocation1] ss:$2 sm:$0xff] %v1132
        %v1142 = vld.sshfl [vmem:[#allocation1] sm:$0xff pattern:$0x75316420]
        %1143 = vrot.lane.b32.xlu0 %v1142, 64
        %v1144 = vpop.permute.xlu0 %1143
        %1146 = vst.msk [vmem:[#allocation4] sm:$0xf] %vm621, %v1144
        %1148 = vst [vmem:[#allocation1] ss:$2 sm:$0xff] %v1126
        %v1149 = vld.sshfl [vmem:[#allocation1] sm:$0xff pattern:$0x75316420]
        %1150 = vrot.lane.b32.xlu0 %v1149, 96
        %v1151 = vpop.permute.xlu0 %1150
        %1153 = vst.msk [vmem:[#allocation5] sm:$0xf] %vm621, %v1151
        %v1154 = vld [vmem:[#allocation3] sm:$0x1]
        %v1155 = vld [vmem:[#allocation3 + $0x4] sm:$0x1]
        %v1156 = vld [vmem:[#allocation3 + $0x8] sm:$0x1]
        %v1157 = vld [vmem:[#allocation3 + $0xc] sm:$0x1]
        %v1158 = vld [vmem:[#allocation3 + $0x10] sm:$0x1]
        %v1159 = vld [vmem:[#allocation3 + $0x14] sm:$0x1]
        %v1160 = vld [vmem:[#allocation3 + $0x18] sm:$0x1]
        %v1161 = vld [vmem:[#allocation3 + $0x1c] sm:$0x1]
        %v1162 = vld [vmem:[#allocation2 + $0x4] sm:$0x1]
        %v1163 = vld [vmem:[#allocation2 + $0xc] sm:$0x1]
        %v1164 = vld [vmem:[#allocation2 + $0x14] sm:$0x1]
        %v1165 = vld [vmem:[#allocation2 + $0x1c] sm:$0x1]
        %v1166 = vld [vmem:[#allocation2 + $0x24] sm:$0x1]
        %v1167 = vld [vmem:[#allocation2 + $0x2c] sm:$0x1]
        %v1168 = vld [vmem:[#allocation2 + $0x34] sm:$0x1]
        %v1169 = vld [vmem:[#allocation2 + $0x3c] sm:$0x1]
        %v1170 = vadd.f32 %v1154, %v1162
        %v1171 = vadd.f32 %v1155, %v1163
        %v1172 = vadd.f32 %v1156, %v1164
        %v1173 = vadd.f32 %v1157, %v1165
        %v1174 = vadd.f32 %v1158, %v1166
        %v1175 = vadd.f32 %v1159, %v1167
        %v1176 = vadd.f32 %v1160, %v1168
        %v1177 = vadd.f32 %v1161, %v1169
        %v1186 = vrot.slane %v1171, 7
        %v1187 = vsel %vm368, %v1186, %v1170
        %v1188 = vrot.slane %v1172, 6
        %v1189 = vsel %vm371, %v1188, %v1187
        %v1190 = vrot.slane %v1173, 5
        %v1191 = vsel %vm374, %v1190, %v1189
        %v1192 = vrot.slane %v1174, 4
        %v1193 = vsel %vm377, %v1192, %v1191
        %v1194 = vrot.slane %v1175, 3
        %v1195 = vsel %vm380, %v1194, %v1193
        %v1196 = vrot.slane %v1176, 2
        %v1197 = vsel %vm383, %v1196, %v1195
        %v1198 = vrot.slane %v1177, 1
        %vm1199 = vcmask 1047559
        %v1200 = vsel %vm1199, %v1198, %v1197
        %1202 = vst.msk [vmem:[%s268] sm:$0xff] %vm549, %v1200
        %v1203 = vld [vmem:[#allocation3 + $0x1] sm:$0x1]
        %v1204 = vld [vmem:[#allocation3 + $0x5] sm:$0x1]
        %v1205 = vld [vmem:[#allocation3 + $0x9] sm:$0x1]
        %v1206 = vld [vmem:[#allocation3 + $0xd] sm:$0x1]
        %v1207 = vld [vmem:[#allocation3 + $0x11] sm:$0x1]
        %v1208 = vld [vmem:[#allocation3 + $0x15] sm:$0x1]
        %v1209 = vld [vmem:[#allocation3 + $0x19] sm:$0x1]
        %v1210 = vld [vmem:[#allocation3 + $0x1d] sm:$0x1]
        %v1211 = vld [vmem:[#allocation2 + $0x5] sm:$0x1]
        %v1212 = vld [vmem:[#allocation2 + $0xd] sm:$0x1]
        %v1213 = vld [vmem:[#allocation2 + $0x15] sm:$0x1]
        %v1214 = vld [vmem:[#allocation2 + $0x1d] sm:$0x1]
        %v1215 = vld [vmem:[#allocation2 + $0x25] sm:$0x1]
        %v1216 = vld [vmem:[#allocation2 + $0x2d] sm:$0x1]
        %v1217 = vld [vmem:[#allocation2 + $0x35] sm:$0x1]
        %v1218 = vld [vmem:[#allocation2 + $0x3d] sm:$0x1]
        %v1219 = vadd.f32 %v1203, %v1211
        %v1220 = vadd.f32 %v1204, %v1212
        %v1221 = vadd.f32 %v1205, %v1213
        %v1222 = vadd.f32 %v1206, %v1214
        %v1223 = vadd.f32 %v1207, %v1215
        %v1224 = vadd.f32 %v1208, %v1216
        %v1225 = vadd.f32 %v1209, %v1217
        %v1226 = vadd.f32 %v1210, %v1218
        %v1235 = vrot.slane %v1220, 7
        %v1236 = vsel %vm368, %v1235, %v1219
        %v1237 = vrot.slane %v1221, 6
        %v1238 = vsel %vm371, %v1237, %v1236
        %v1239 = vrot.slane %v1222, 5
        %v1240 = vsel %vm374, %v1239, %v1238
        %v1241 = vrot.slane %v1223, 4
        %v1242 = vsel %vm377, %v1241, %v1240
        %v1243 = vrot.slane %v1224, 3
        %v1244 = vsel %vm380, %v1243, %v1242
        %v1245 = vrot.slane %v1225, 2
        %v1246 = vsel %vm383, %v1245, %v1244
        %v1247 = vrot.slane %v1226, 1
        %v1248 = vsel %vm1199, %v1247, %v1246
        %s1250 = scalar_lea.vmem %s268, 8 [#allocation12]
        %1251 = vst.msk [vmem:[%s1250] sm:$0xff] %vm549, %v1248
        %v1252 = vld [vmem:[#allocation3 + $0x2] sm:$0x1]
        %v1253 = vld [vmem:[#allocation3 + $0x6] sm:$0x1]
        %v1254 = vld [vmem:[#allocation3 + $0xa] sm:$0x1]
        %v1255 = vld [vmem:[#allocation3 + $0xe] sm:$0x1]
        %v1256 = vld [vmem:[#allocation3 + $0x12] sm:$0x1]
        %v1257 = vld [vmem:[#allocation3 + $0x16] sm:$0x1]
        %v1258 = vld [vmem:[#allocation3 + $0x1a] sm:$0x1]
        %v1259 = vld [vmem:[#allocation3 + $0x1e] sm:$0x1]
        %v1260 = vld [vmem:[#allocation2 + $0x6] sm:$0x1]
        %v1261 = vld [vmem:[#allocation2 + $0xe] sm:$0x1]
        %v1262 = vld [vmem:[#allocation2 + $0x16] sm:$0x1]
        %v1263 = vld [vmem:[#allocation2 + $0x1e] sm:$0x1]
        %v1264 = vld [vmem:[#allocation2 + $0x26] sm:$0x1]
        %v1265 = vld [vmem:[#allocation2 + $0x2e] sm:$0x1]
        %v1266 = vld [vmem:[#allocation2 + $0x36] sm:$0x1]
        %v1267 = vld [vmem:[#allocation2 + $0x3e] sm:$0x1]
        %v1268 = vadd.f32 %v1252, %v1260
        %v1269 = vadd.f32 %v1253, %v1261
        %v1270 = vadd.f32 %v1254, %v1262
        %v1271 = vadd.f32 %v1255, %v1263
        %v1272 = vadd.f32 %v1256, %v1264
        %v1273 = vadd.f32 %v1257, %v1265
        %v1274 = vadd.f32 %v1258, %v1266
        %v1275 = vadd.f32 %v1259, %v1267
        %v1284 = vrot.slane %v1269, 7
        %v1285 = vsel %vm368, %v1284, %v1268
        %v1286 = vrot.slane %v1270, 6
        %v1287 = vsel %vm371, %v1286, %v1285
        %v1288 = vrot.slane %v1271, 5
        %v1289 = vsel %vm374, %v1288, %v1287
        %v1290 = vrot.slane %v1272, 4
        %v1291 = vsel %vm377, %v1290, %v1289
        %v1292 = vrot.slane %v1273, 3
        %v1293 = vsel %vm380, %v1292, %v1291
        %v1294 = vrot.slane %v1274, 2
        %v1295 = vsel %vm383, %v1294, %v1293
        %v1296 = vrot.slane %v1275, 1
        %v1297 = vsel %vm1199, %v1296, %v1295
        %s1299 = scalar_lea.vmem %s268, 16 [#allocation12]
        %1300 = vst.msk [vmem:[%s1299] sm:$0xff] %vm549, %v1297
        %v1301 = vld [vmem:[#allocation3 + $0x3] sm:$0x1]
        %v1302 = vld [vmem:[#allocation3 + $0x7] sm:$0x1]
        %v1303 = vld [vmem:[#allocation3 + $0xb] sm:$0x1]
        %v1304 = vld [vmem:[#allocation3 + $0xf] sm:$0x1]
        %v1305 = vld [vmem:[#allocation3 + $0x13] sm:$0x1]
        %v1306 = vld [vmem:[#allocation3 + $0x17] sm:$0x1]
        %v1307 = vld [vmem:[#allocation3 + $0x1b] sm:$0x1]
        %v1308 = vld [vmem:[#allocation3 + $0x1f] sm:$0x1]
        %v1309 = vld [vmem:[#allocation2 + $0x7] sm:$0x1]
        %v1310 = vld [vmem:[#allocation2 + $0xf] sm:$0x1]
        %v1311 = vld [vmem:[#allocation2 + $0x17] sm:$0x1]
        %v1312 = vld [vmem:[#allocation2 + $0x1f] sm:$0x1]
        %v1313 = vld [vmem:[#allocation2 + $0x27] sm:$0x1]
        %v1314 = vld [vmem:[#allocation2 + $0x2f] sm:$0x1]
        %v1315 = vld [vmem:[#allocation2 + $0x37] sm:$0x1]
        %v1316 = vld [vmem:[#allocation2 + $0x3f] sm:$0x1]
        %v1317 = vadd.f32 %v1301, %v1309
        %v1318 = vadd.f32 %v1302, %v1310
        %v1319 = vadd.f32 %v1303, %v1311
        %v1320 = vadd.f32 %v1304, %v1312
        %v1321 = vadd.f32 %v1305, %v1313
        %v1322 = vadd.f32 %v1306, %v1314
        %v1323 = vadd.f32 %v1307, %v1315
        %v1324 = vadd.f32 %v1308, %v1316
        %v1333 = vrot.slane %v1318, 7
        %v1334 = vsel %vm368, %v1333, %v1317
        %v1335 = vrot.slane %v1319, 6
        %v1336 = vsel %vm371, %v1335, %v1334
        %v1337 = vrot.slane %v1320, 5
        %v1338 = vsel %vm374, %v1337, %v1336
        %v1339 = vrot.slane %v1321, 4
        %v1340 = vsel %vm377, %v1339, %v1338
        %v1341 = vrot.slane %v1322, 3
        %v1342 = vsel %vm380, %v1341, %v1340
        %v1343 = vrot.slane %v1323, 2
        %v1344 = vsel %vm383, %v1343, %v1342
        %v1345 = vrot.slane %v1324, 1
        %v1346 = vsel %vm1199, %v1345, %v1344
        %s1348 = scalar_lea.vmem %s268, 24 [#allocation12]
        %1349 = vst.msk [vmem:[%s1348] sm:$0xff] %vm549, %v1346
        %s1350 = sand.u32 %s135, 1
        %s1351 = scalar_lea.sflag [#allocation8], %s1350
        %s1352 = sand.u32 %s135, 1
        %s1353 = smul.addr %s1352, 32
        %s1354 = scalar_lea.vmem [#allocation12], %s1353
        // Predicated region
        $region53: #{tpu_custom_call.1} parent=35 // pred_check
          %p1355 = pneg %p145
        $region54: #{tpu_custom_call.1} parent=35 // pred_check_branch
          %1357 = sbr.rel (%p1355) target = $region56
        $region55: #{tpu_custom_call.1} parent=35 // pred_region
          %s1358 = smul.u32 4, %s26
          %1360 = vsyncadd %s1351, 0
          %s1361 = smul.addr %s1358, 2
          %s1362 = sadd.s32 %s27, %s1361
          %s1363 = smul.addr %s1362, 8
          %s1364 = scalar_lea.hbm %s4, %s1363
          %s1365 = sshll.u32 %s1354, 4
          %s1366 = int_to_ptr.vmem [resolvable:$true] %s1365
          %s1367 = sshll.u32 %s1364, 4
          %s1368 = int_to_ptr.hbm [resolvable:$true] %s1367
          %1373 = dma.vmem_to_hbm [thread:$0]  %s1366, 512, %s1368, %s1351, 128, 256, 8
        $region56: #{tpu_custom_call.1} parent=35 // pred_fallthru
          _
      $region36: #{tpu_custom_call.1} parent=5 // pred_fallthru
        _
      %p1374 = scmp.le.s32.totalorder 2, %s17
      // Predicated region
      $region57: #{tpu_custom_call.1} parent=5 // pred_check
        %p1375 = pneg %p1374
      $region58: #{tpu_custom_call.1} parent=5 // pred_check_branch
        %1377 = sbr.rel (%p1375) target = $region60
      $region59: #{tpu_custom_call.1} parent=5 // pred_region
        %s1378 = ssub.s32 %s17, 2
        // Predicated region
        $region61: #{tpu_custom_call.1} parent=59 // pred_check
          %p1379 = pneg %p151
        $region62: #{tpu_custom_call.1} parent=59 // pred_check_branch
          %1381 = sbr.rel (%p1379) target = $region64
        $region63: #{tpu_custom_call.1} parent=59 // pred_region
          %s1382 = sand.u32 %s136, 1
          %s1383 = scalar_lea.sflag [#allocation8], %s1382
          %s1384 = sand.u32 %s136, 1
          %s1385 = smul.addr %s1384, 32
          %s1386 = scalar_lea.vmem [#allocation12], %s1385
          %1388 = dma.done %s1383, 512
        $region64: #{tpu_custom_call.1} parent=59 // pred_fallthru
          _
      $region60: #{tpu_custom_call.1} parent=5 // pred_fallthru
        _
    $region6: #{tpu_custom_call.1} parent=1 // loop_footer
      %s21 = sadd.s32 1, %s17
    $region7: #{tpu_custom_call.1} parent=1 // loop_footer_branch
      %16 = sbr.rel target = $region3
    $region8: #{tpu_custom_call.1} parent=1 // loop_exit
      _
    %1389 = vsyncpa [#allocation7], 1
    %s1390 = scalar_lea.sflag [#allocation7], 1
    %1391 = vsyncpa %s1390, 1
    %1392 = vsyncpa [#allocation10], 1
    %1393 = vsyncpa [#allocation8], 1
    %s1394 = scalar_lea.sflag [#allocation8], 1
    %1395 = vsyncpa %s1394, 1

// kernel: tpu_custom_call.1
$region0: #{tpu_custom_call.1}
  #allocation0 [shape = 'u32[]', space=smem, size = 0x4, offset = 0x4, fixed_abs, tag = 'smem constant byte address 0x4 - core index']
  #allocation1 [shape = 'u32[72,128]{1,0:T(1,128)}', space=vmem, size = 0x9000, scoped, tag = 'internal scratch']
  #allocation2 [shape = 'f32[8,4,160]{2,1,0:T(4,128)}', space=vmem, size = 0x8000, scoped, tag = 'scratch operand']
  #allocation3 [shape = 'f32[8,4,32]{2,1,0:T(4,128)}', space=vmem, size = 0x4000, scoped, tag = 'scratch operand']
  #allocation4 [shape = 'f32[4,32]{1,0:T(4,128)}', space=vmem, size = 0x800, scoped, tag = 'scratch operand']
  #allocation5 [shape = 'f32[4,32]{1,0:T(4,128)}', space=vmem, size = 0x800, scoped, tag = 'scratch operand']
  %s0 = inlined_call_operand.hbm [shape: f32[8,16,16], index: 0, kind: input, shape index: {}]
  %s1 = inlined_call_operand.hbm [shape: f32[16,160], index: 1, kind: input, shape index: {}]
  %s2 = inlined_call_operand.hbm [shape: f32[32,128], index: 2, kind: input, shape index: {}]
  %s3 = inlined_call_operand.vmem [shape: f32[1,160], index: 3, kind: input, shape index: {}]
  %s4 = inlined_call_operand.hbm [shape: f32[8,16,32], index: 4, kind: output, shape index: {}]
  %s5 = sld [smem:[#allocation0]]
  $region65: #{tpu_custom_call.1} parent=0
    _
  %s7 = ssub.s32 1, %s5
  %s8 = scalar_select 0, %s7, %s5
  $region1: #{tpu_custom_call.1} parent=0
    #allocation6 [shape = 'u8[32768]{0}', space=vmem, size = 0x8000, scoped, tag = 'input window, operand 0']
    #allocation7 [shape = 's32[2]{0}', space=sflag, size = 0x8, scoped, tag = 'scoped memory for tpu_custom_call.1']
    #allocation8 [shape = 's32[2]{0}', space=sflag, size = 0x8, scoped, tag = 'scoped memory for tpu_custom_call.1']
    #allocation9 [shape = 'u8[16384]{0}', space=vmem, size = 0x4000, scoped, tag = 'input window, operand 1, single buffered']
    #allocation10 [shape = 's32[1]{0}', space=sflag, size = 0x4, scoped, tag = 'scoped memory for tpu_custom_call.1']
    #allocation11 [shape = 'u8[16384]{0}', space=vmem, size = 0x4000, scoped, tag = 'input window, operand 2, single buffered']
    #allocation12 [shape = 'u8[32768]{0}', space=vmem, size = 0x8000, scoped, tag = 'output window, operand 0']
    %9 = vsyncpa [#allocation7], 0
    %s10 = scalar_lea.sflag [#allocation7], 1
    %11 = vsyncpa %s10, 0
    %12 = vsyncpa [#allocation10], 0
    %13 = vsyncpa [#allocation8], 0
    %s14 = scalar_lea.sflag [#allocation8], 1
    %15 = vsyncpa %s14, 0
    loop: start=0, step=1, limit=6
    $region2: #{tpu_custom_call.1} parent=1 // loop_pre_header
      _
    $region3: #{tpu_custom_call.1} parent=1 // loop_header
      %s17 = sphi 0, %s21
      %p18 = scmp.ge.s32.totalorder %s17, 6
      %s24 = sphi 0, %s36
      %s25 = sphi 0, %s32
      %s26 = sphi 0, %s24
      %s27 = sphi 0, %s25
      %s28 = sphi 0, %s26
      %s29 = sphi 0, %s27
      %s41 = sphi 0, %s43
      %s44 = sphi 0, %s41
      %s45 = sphi 0, %s44
      %s61 = sphi 0, %s45
      %s65 = sphi 0, %s65
      %s67 = sphi 0, %s65
      %s68 = sphi 0, %s67
      %s82 = sphi 0, %s68
      %s86 = sphi 0, %s86
      %s88 = sphi 0, %s86
      %s89 = sphi 0, %s88
      %s103 = sphi 0, %s89
      %s107 = sphi 0, %s107
      %s109 = sphi 0, %s107
      %s110 = sphi 0, %s109
      %s124 = sphi 0, %s110
      %s132 = sphi 0, %s134
      %s135 = sphi 0, %s132
      %s136 = sphi 0, %s135
      %s152 = sphi 0, %s136
    $region4: #{tpu_custom_call.1} parent=1 // loop_header_branch
      %20 = sbr.rel (%p18) target = $region8
    $region5: #{tpu_custom_call.1} parent=1 // loop_body
      %s22 = ssub.s32 %s17, 1
      %s23 = ssub.s32 %s17, 2
      %s30 = sadd.s32 1, %s25
      %p31 = scmp.ge.s32.totalorder %s30, 2
      %s32 = scalar_select %p31, 0, %s30
      %s33 = sadd.s32 1, %s24
      %s34 = scalar_select %p31, %s33, %s24
      %p35 = scmp.ge.s32.totalorder %s34, 2
      %s36 = scalar_select %p35, 0, %s34
      %s37 = ssub.s32 %s24, %s36
      %s38 = ssub.s32 %s25, %s32
      %s39 = sor.u32 %s37, %s38
      %p40 = scmp.eq.s32.totalorder %s39, 0
      %s42 = sadd.s32 %s41, 1
      %s43 = scalar_select %p40, %s41, %s42
      %p46 = pneg %p40
      %p47 = scmp.eq.s32.totalorder %s17, 3
      %p48 = por %p46, %p47
      %p49 = scmp.ne.s32.totalorder %s41, %s44
      %p50 = scmp.eq.s32.totalorder %s17, 0
      %p51 = por %p49, %p50
      %p52 = scmp.ne.s32.totalorder %s41, %s44
      %p53 = scmp.eq.s32.totalorder %s22, 3
      %p54 = por %p52, %p53
      %p55 = scmp.ne.s32.totalorder %s44, %s45
      %p56 = scmp.eq.s32.totalorder %s22, 0
      %p57 = por %p55, %p56
      %p58 = scmp.ne.s32.totalorder %s44, %s45
      %p59 = scmp.eq.s32.totalorder %s23, 3
      %p60 = por %p58, %p59
      %p62 = scmp.ne.s32.totalorder %s45, %s61
      %p63 = scmp.eq.s32.totalorder %s23, 0
      %p64 = por %p62, %p63
      %s66 = sadd.s32 %s65, 1
      %p69 = scmp.eq.s32.totalorder %s17, 3
      %p70 = scmp.ne.s32.totalorder %s65, %s67
      %p71 = scmp.eq.s32.totalorder %s17, 0
      %p72 = por %p70, %p71
      %p73 = scmp.ne.s32.totalorder %s65, %s67
      %p74 = scmp.eq.s32.totalorder %s22, 3
      %p75 = por %p73, %p74
      %p76 = scmp.ne.s32.totalorder %s67, %s68
      %p77 = scmp.eq.s32.totalorder %s22, 0
      %p78 = por %p76, %p77
      %p79 = scmp.ne.s32.totalorder %s67, %s68
      %p80 = scmp.eq.s32.totalorder %s23, 3
      %p81 = por %p79, %p80
      %p83 = scmp.ne.s32.totalorder %s68, %s82
      %p84 = scmp.eq.s32.totalorder %s23, 0
      %p85 = por %p83, %p84
      %s87 = sadd.s32 %s86, 1
      %p90 = scmp.eq.s32.totalorder %s17, 3
      %p91 = scmp.ne.s32.totalorder %s86, %s88
      %p92 = scmp.eq.s32.totalorder %s17, 0
      %p93 = por %p91, %p92
      %p94 = scmp.ne.s32.totalorder %s86, %s88
      %p95 = scmp.eq.s32.totalorder %s22, 3
      %p96 = por %p94, %p95
      %p97 = scmp.ne.s32.totalorder %s88, %s89
      %p98 = scmp.eq.s32.totalorder %s22, 0
      %p99 = por %p97, %p98
      %p100 = scmp.ne.s32.totalorder %s88, %s89
      %p101 = scmp.eq.s32.totalorder %s23, 3
      %p102 = por %p100, %p101
      %p104 = scmp.ne.s32.totalorder %s89, %s103
      %p105 = scmp.eq.s32.totalorder %s23, 0
      %p106 = por %p104, %p105
      %s108 = sadd.s32 %s107, 1
      %p111 = scmp.eq.s32.totalorder %s17, 3
      %p112 = scmp.ne.s32.totalorder %s107, %s109
      %p113 = scmp.eq.s32.totalorder %s17, 0
      %p114 = por %p112, %p113
      %p115 = scmp.ne.s32.totalorder %s107, %s109
      %p116 = scmp.eq.s32.totalorder %s22, 3
      %p117 = por %p115, %p116
      %p118 = scmp.ne.s32.totalorder %s109, %s110
      %p119 = scmp.eq.s32.totalorder %s22, 0
      %p120 = por %p118, %p119
      %p121 = scmp.ne.s32.totalorder %s109, %s110
      %p122 = scmp.eq.s32.totalorder %s23, 3
      %p123 = por %p121, %p122
      %p125 = scmp.ne.s32.totalorder %s110, %s124
      %p126 = scmp.eq.s32.totalorder %s23, 0
      %p127 = por %p125, %p126
      %s128 = ssub.s32 %s24, %s36
      %s129 = ssub.s32 %s25, %s32
      %s130 = sor.u32 %s128, %s129
      %p131 = scmp.eq.s32.totalorder %s130, 0
      %s133 = sadd.s32 %s132, 1
      %s134 = scalar_select %p131, %s132, %s133
      %p137 = pneg %p131
      %p138 = scmp.eq.s32.totalorder %s17, 3
      %p139 = por %p137, %p138
      %p140 = scmp.ne.s32.totalorder %s132, %s135
      %p141 = scmp.eq.s32.totalorder %s17, 0
      %p142 = por %p140, %p141
      %p143 = scmp.ne.s32.totalorder %s132, %s135
      %p144 = scmp.eq.s32.totalorder %s22, 3
      %p145 = por %p143, %p144
      %p146 = scmp.ne.s32.totalorder %s135, %s136
      %p147 = scmp.eq.s32.totalorder %s22, 0
      %p148 = por %p146, %p147
      %p149 = scmp.ne.s32.totalorder %s135, %s136
      %p150 = scmp.eq.s32.totalorder %s23, 3
      %p151 = por %p149, %p150
      %p153 = scmp.ne.s32.totalorder %s136, %s152
      %p154 = scmp.eq.s32.totalorder %s23, 0
      %p155 = por %p153, %p154
      %p156 = scmp.le.s32.totalorder 1, %s17
      %p157 = scmp.lt.s32.totalorder %s17, 5
      %p158 = pnand %p156, %p157
      %p159 = pneg %p158
      // Predicated region
      $region9: #{tpu_custom_call.1} parent=5 // pred_check
        _
      $region10: #{tpu_custom_call.1} parent=5 // pred_check_branch
        %161 = sbr.rel (%p158) target = $region12
      $region11: #{tpu_custom_call.1} parent=5 // pred_region
        %s162 = ssub.s32 %s17, 1
        // Predicated region
        $region13: #{tpu_custom_call.1} parent=11 // pred_check
          %p163 = pneg %p78
        $region14: #{tpu_custom_call.1} parent=11 // pred_check_branch
          %165 = sbr.rel (%p163) target = $region16
        $region15: #{tpu_custom_call.1} parent=11 // pred_region
          %167 = vsyncadd [#allocation10], 0
          %s168 = sshll.u32 %s1, 4
          %s169 = int_to_ptr.hbm [resolvable:$true] %s168
          %s170 = sshll.u32 [#allocation9], 4
          %s171 = int_to_ptr.vmem [resolvable:$true] %s170
          %176 = dma.hbm_to_vmem [thread:$0]  %s169, 512, %s171, [#allocation10], 256, 256, 16
        $region16: #{tpu_custom_call.1} parent=11 // pred_fallthru
          _
        // Predicated region
        $region17: #{tpu_custom_call.1} parent=11 // pred_check
          %p177 = pneg %p99
        $region18: #{tpu_custom_call.1} parent=11 // pred_check_branch
          %179 = sbr.rel (%p177) target = $region20
        $region19: #{tpu_custom_call.1} parent=11 // pred_region
          %181 = vsyncadd [#allocation10], 0
          %s182 = sshll.u32 %s2, 4
          %s183 = int_to_ptr.hbm [resolvable:$true] %s182
          %s184 = sshll.u32 [#allocation11], 4
          %s185 = int_to_ptr.vmem [resolvable:$true] %s184
          %190 = dma.hbm_to_vmem [thread:$0]  %s183, 512, %s185, [#allocation10], 128, 128, 8
        $region20: #{tpu_custom_call.1} parent=11 // pred_fallthru
          _
        // Predicated region
        $region21: #{tpu_custom_call.1} parent=11 // pred_check
          %p191 = pneg %p120
        $region22: #{tpu_custom_call.1} parent=11 // pred_check_branch
          %193 = sbr.rel (%p191) target = $region24
        $region23: #{tpu_custom_call.1} parent=11 // pred_region
          _
        $region24: #{tpu_custom_call.1} parent=11 // pred_fallthru
          _
      $region12: #{tpu_custom_call.1} parent=5 // pred_fallthru
        _
      %p194 = scmp.lt.s32.totalorder %s17, 4
      // Predicated region
      $region25: #{tpu_custom_call.1} parent=5 // pred_check
        %p195 = pneg %p194
      $region26: #{tpu_custom_call.1} parent=5 // pred_check_branch
        %197 = sbr.rel (%p195) target = $region28
      $region27: #{tpu_custom_call.1} parent=5 // pred_region
        // Predicated region
        $region29: #{tpu_custom_call.1} parent=27 // pred_check
          %p198 = pneg %p51
        $region30: #{tpu_custom_call.1} parent=27 // pred_check_branch
          %200 = sbr.rel (%p198) target = $region32
        $region31: #{tpu_custom_call.1} parent=27 // pred_region
          %s201 = sand.u32 %s41, 1
          %s202 = scalar_lea.sflag [#allocation7], %s201
          %s203 = sand.u32 %s41, 1
          %s204 = smul.addr %s203, 32
          %s205 = scalar_lea.vmem [#allocation6], %s204
          %s206 = smul.u32 4, %s24
          %208 = vsyncadd %s202, 0
          %s209 = smul.addr %s206, 2
          %s210 = sadd.s32 %s25, %s209
          %s211 = smul.addr %s210, 8
          %s212 = scalar_lea.hbm %s0, %s211
          %s213 = sshll.u32 %s212, 4
          %s214 = int_to_ptr.hbm [resolvable:$true] %s213
          %s215 = sshll.u32 %s205, 4
          %s216 = int_to_ptr.vmem [resolvable:$true] %s215
          %221 = dma.hbm_to_vmem [thread:$0]  %s214, 512, %s216, %s202, 256, 128, 8
        $region32: #{tpu_custom_call.1} parent=27 // pred_fallthru
          _
      $region28: #{tpu_custom_call.1} parent=5 // pred_fallthru
        _
      %p222 = scmp.le.s32.totalorder 1, %s17
      %p223 = scmp.lt.s32.totalorder %s17, 5
      %p224 = pnand %p222, %p223
      %p225 = pneg %p224
      // Predicated region
      $region33: #{tpu_custom_call.1} parent=5 // pred_check
        _
      $region34: #{tpu_custom_call.1} parent=5 // pred_check_branch
        %227 = sbr.rel (%p224) target = $region36
      $region35: #{tpu_custom_call.1} parent=5 // pred_region
        %s228 = ssub.s32 %s17, 1
        %s229 = sand.u32 %s44, 1
        %s230 = scalar_lea.sflag [#allocation7], %s229
        %s231 = sand.u32 %s44, 1
        %s232 = smul.addr %s231, 32
        %s233 = scalar_lea.vmem [#allocation6], %s232
        // Predicated region
        $region37: #{tpu_custom_call.1} parent=35 // pred_check
          %p234 = pneg %p57
        $region38: #{tpu_custom_call.1} parent=35 // pred_check_branch
          %236 = sbr.rel (%p234) target = $region40
        $region39: #{tpu_custom_call.1} parent=35 // pred_region
          %238 = dma.done %s230, 512
        $region40: #{tpu_custom_call.1} parent=35 // pred_fallthru
          _
        // Predicated region
        $region41: #{tpu_custom_call.1} parent=35 // pred_check
          %p239 = pneg %p78
        $region42: #{tpu_custom_call.1} parent=35 // pred_check_branch
          %241 = sbr.rel (%p239) target = $region44
        $region43: #{tpu_custom_call.1} parent=35 // pred_region
          %243 = dma.done [#allocation10], 512
        $region44: #{tpu_custom_call.1} parent=35 // pred_fallthru
          _
        // Predicated region
        $region45: #{tpu_custom_call.1} parent=35 // pred_check
          %p244 = pneg %p99
        $region46: #{tpu_custom_call.1} parent=35 // pred_check_branch
          %246 = sbr.rel (%p244) target = $region48
        $region47: #{tpu_custom_call.1} parent=35 // pred_region
          %248 = dma.done [#allocation10], 512
        $region48: #{tpu_custom_call.1} parent=35 // pred_fallthru
          _
        %s249 = sand.u32 %s44, 1
        %s250 = scalar_lea.sflag [#allocation7], %s249
        %s251 = sand.u32 %s44, 1
        %s252 = smul.addr %s251, 32
        %s253 = scalar_lea.vmem [#allocation6], %s252
        %p254 = pneg %p57
        %p255 = pneg %p54
        %p256 = pneg %p78
        %p257 = pneg %p75
        %p258 = pneg %p99
        %p259 = pneg %p96
        %p260 = pneg %p120
        %p261 = pneg %p117
        %p262 = pneg %p148
        %p263 = pneg %p145
        %s264 = sand.u32 %s135, 1
        %s265 = scalar_lea.sflag [#allocation8], %s264
        %s266 = sand.u32 %s135, 1
        %s267 = smul.addr %s266, 32
        %s268 = scalar_lea.vmem [#allocation12], %s267
        %s269 = smul.u32 4, %s26
        %s270 = smul.u32 4, %s26
        %p271 = scmp.eq.s32.totalorder %s27, 0
        // Predicated region
        $region49: #{tpu_custom_call.1} parent=35 // pred_check
          %p272 = pneg %p271
        $region50: #{tpu_custom_call.1} parent=35 // pred_check_branch
          %274 = sbr.rel (%p272) target = $region52
        $region51: #{tpu_custom_call.1} parent=35 // pred_region
          %vm275 = vcmask 257024
          %276 = vst.msk [vmem:[#allocation4] sm:$0xf] %vm275, 0.0
          %277 = vst.msk [vmem:[#allocation5] sm:$0xf] %vm275, 0.0
        $region52: #{tpu_custom_call.1} parent=35 // pred_fallthru
          _
        %v278 = vld [vmem:[%s233] sm:$0xff]
        %v279 = vld [vmem:[%s233 + $0x8] sm:$0xff]
        %v280 = vld [vmem:[%s233 + $0x10] sm:$0xff]
        %v281 = vld [vmem:[%s233 + $0x18] sm:$0xff]
        %v282 = vld [vmem:[#allocation9] sm:$0xff]
        %v283 = vld [vmem:[#allocation9 + $0x8] sm:$0xff]
        %v284 = vld [vmem:[#allocation9 + $0x10] sm:$0xff]
        %v285 = vld [vmem:[#allocation9 + $0x18] sm:$0xff]
        %v286 = vld [vmem:[%s3] sm:$0x3]
        %v288 = vperm.slane %v286, 0
        %v289 = vperm.slane %v286, 1
        %vm292 = vcmask 130048
        %v294 = vsel %vm292, %v278, 0
        %v297 = vsel %vm292, %v279, 0
        %v300 = vsel %vm292, %v280, 0
        %v303 = vsel %vm292, %v281, 0
        %305 = vmatpush.msra.mxu0 0.0
        %306 = vmatpush.msra.mxu0 0.0
        %307 = vmatpush.msra.mxu0 0.0
        %308 = vmatpush.msra.mxu0 0.0
        %309 = vmatpush.msra.mxu0 0.0
        %310 = vmatpush.msra.mxu0 0.0
        %311 = vmatpush.msra.mxu0 0.0
        %312 = vmatpush.msra.mxu0 0.0
        %313 = vmatpush.msra.mxu0 0.0
        %314 = vmatpush.msra.mxu0 0.0
        %315 = vmatpush.msra.mxu0 0.0
        %316 = vmatpush.msra.mxu0 0.0
        %317 = vmatpush.msra.mxu0 0.0
        %318 = vmatpush.msra.mxu0 0.0
        %319 = vmatpush.msra.mxu0 %v284
        %320 = vmatpush.msra.mxu0 %v282
        %321 = vmatmul.f32.gmra.mxu0 %v294
        %v322 = vpop.f32.mrf.mxu0
        %v323 = vadd.f32 %v288, %v322
        %324 = vmatmul.f32.gmra.mxu0 %v297
        %v325 = vpop.f32.mrf.mxu0
        %v326 = vadd.f32 %v288, %v325
        %327 = vmatmul.f32.gmra.mxu0 %v300
        %v328 = vpop.f32.mrf.mxu0
        %v329 = vadd.f32 %v288, %v328
        %330 = vmatmul.f32.gmra.mxu0 %v303
        %v331 = vpop.f32.mrf.mxu0
        %v332 = vadd.f32 %v288, %v331
        %333 = vdwg.mxu0
        %334 = vmatpush.msra.mxu0 0.0
        %335 = vmatpush.msra.mxu0 0.0
        %336 = vmatpush.msra.mxu0 0.0
        %337 = vmatpush.msra.mxu0 0.0
        %338 = vmatpush.msra.mxu0 0.0
        %339 = vmatpush.msra.mxu0 0.0
        %340 = vmatpush.msra.mxu0 0.0
        %341 = vmatpush.msra.mxu0 0.0
        %342 = vmatpush.msra.mxu0 0.0
        %343 = vmatpush.msra.mxu0 0.0
        %344 = vmatpush.msra.mxu0 0.0
        %345 = vmatpush.msra.mxu0 0.0
        %346 = vmatpush.msra.mxu0 0.0
        %347 = vmatpush.msra.mxu0 0.0
        %348 = vmatpush.msra.mxu0 %v285
        %349 = vmatpush.msra.mxu0 %v283
        %350 = vmatmul.f32.gmra.mxu0 %v294
        %v351 = vpop.f32.mrf.mxu0
        %v352 = vadd.f32 %v289, %v351
        %353 = vmatmul.f32.gmra.mxu0 %v297
        %v354 = vpop.f32.mrf.mxu0
        %v355 = vadd.f32 %v289, %v354
        %356 = vmatmul.f32.gmra.mxu0 %v300
        %v357 = vpop.f32.mrf.mxu0
        %v358 = vadd.f32 %v289, %v357
        %359 = vmatmul.f32.gmra.mxu0 %v303
        %v360 = vpop.f32.mrf.mxu0
        %v361 = vadd.f32 %v289, %v360
        %362 = vdwg.mxu0
        %v365 = vrot.slane %v352, 7
        %vm366 = vcmask 1040384
        %v367 = vsel %vm366, %v323, %v365
        %vm368 = vcmask 1041409
        %v369 = vsel %vm368, %v323, %v365
        %v370 = vrot.slane %v369, 1
        %vm371 = vcmask 1042434
        %v372 = vsel %vm371, %v323, %v365
        %v373 = vrot.slane %v372, 2
        %vm374 = vcmask 1043459
        %v375 = vsel %vm374, %v323, %v365
        %v376 = vrot.slane %v375, 3
        %vm377 = vcmask 1044484
        %v378 = vsel %vm377, %v323, %v365
        %v379 = vrot.slane %v378, 4
        %vm380 = vcmask 1045509
        %v381 = vsel %vm380, %v323, %v365
        %v382 = vrot.slane %v381, 5
        %vm383 = vcmask 1046534
        %v384 = vsel %vm383, %v323, %v365
        %v385 = vrot.slane %v384, 6
        %vm386 = vcmask 1046528
        %v387 = vsel %vm386, %v365, %v323
        %v388 = vrot.slane %v387, 7
        %v397 = vlaneseq
        %vm398 = vcmp.ge.s32.totalorder %v397, 0
        %vm399 = vcmp.lt.s32.totalorder %v397, 160
        %vm400 = vmand %vm398, %vm399
        %401 = vst.msk [vmem:[#allocation2] ss:$4 sm:$0x3] %vm400, %v367
        %s402 = scalar_lea.vmem [#allocation2], 8
        %403 = vst.msk [vmem:[%s402] ss:$4 sm:$0x3] %vm400, %v370
        %s404 = scalar_lea.vmem [#allocation2], 16
        %405 = vst.msk [vmem:[%s404] ss:$4 sm:$0x3] %vm400, %v373
        %s406 = scalar_lea.vmem [#allocation2], 24
        %407 = vst.msk [vmem:[%s406] ss:$4 sm:$0x3] %vm400, %v376
        %s408 = scalar_lea.vmem [#allocation2], 32
        %409 = vst.msk [vmem:[%s408] ss:$4 sm:$0x3] %vm400, %v379
        %s410 = scalar_lea.vmem [#allocation2], 40
        %411 = vst.msk [vmem:[%s410] ss:$4 sm:$0x3] %vm400, %v382
        %s412 = scalar_lea.vmem [#allocation2], 48
        %413 = vst.msk [vmem:[%s412] ss:$4 sm:$0x3] %vm400, %v385
        %s414 = scalar_lea.vmem [#allocation2], 56
        %415 = vst.msk [vmem:[%s414] ss:$4 sm:$0x3] %vm400, %v388
        %v418 = vrot.slane %v355, 7
        %v419 = vsel %vm366, %v326, %v418
        %v420 = vsel %vm368, %v326, %v418
        %v421 = vrot.slane %v420, 1
        %v422 = vsel %vm371, %v326, %v418
        %v423 = vrot.slane %v422, 2
        %v424 = vsel %vm374, %v326, %v418
        %v425 = vrot.slane %v424, 3
        %v426 = vsel %vm377, %v326, %v418
        %v427 = vrot.slane %v426, 4
        %v428 = vsel %vm380, %v326, %v418
        %v429 = vrot.slane %v428, 5
        %v430 = vsel %vm383, %v326, %v418
        %v431 = vrot.slane %v430, 6
        %v432 = vsel %vm386, %v418, %v326
        %v433 = vrot.slane %v432, 7
        %s442 = scalar_lea.vmem [#allocation2], 1
        %443 = vst.msk [vmem:[%s442] ss:$4 sm:$0x3] %vm400, %v419
        %s444 = scalar_lea.vmem [#allocation2], 9
        %445 = vst.msk [vmem:[%s444] ss:$4 sm:$0x3] %vm400, %v421
        %s446 = scalar_lea.vmem [#allocation2], 17
        %447 = vst.msk [vmem:[%s446] ss:$4 sm:$0x3] %vm400, %v423
        %s448 = scalar_lea.vmem [#allocation2], 25
        %449 = vst.msk [vmem:[%s448] ss:$4 sm:$0x3] %vm400, %v425
        %s450 = scalar_lea.vmem [#allocation2], 33
        %451 = vst.msk [vmem:[%s450] ss:$4 sm:$0x3] %vm400, %v427
        %s452 = scalar_lea.vmem [#allocation2], 41
        %453 = vst.msk [vmem:[%s452] ss:$4 sm:$0x3] %vm400, %v429
        %s454 = scalar_lea.vmem [#allocation2], 49
        %455 = vst.msk [vmem:[%s454] ss:$4 sm:$0x3] %vm400, %v431
        %s456 = scalar_lea.vmem [#allocation2], 57
        %457 = vst.msk [vmem:[%s456] ss:$4 sm:$0x3] %vm400, %v433
        %v460 = vrot.slane %v358, 7
        %v461 = vsel %vm366, %v329, %v460
        %v462 = vsel %vm368, %v329, %v460
        %v463 = vrot.slane %v462, 1
        %v464 = vsel %vm371, %v329, %v460
        %v465 = vrot.slane %v464, 2
        %v466 = vsel %vm374, %v329, %v460
        %v467 = vrot.slane %v466, 3
        %v468 = vsel %vm377, %v329, %v460
        %v469 = vrot.slane %v468, 4
        %v470 = vsel %vm380, %v329, %v460
        %v471 = vrot.slane %v470, 5
        %v472 = vsel %vm383, %v329, %v460
        %v473 = vrot.slane %v472, 6
        %v474 = vsel %vm386, %v460, %v329
        %v475 = vrot.slane %v474, 7
        %s484 = scalar_lea.vmem [#allocation2], 2
        %485 = vst.msk [vmem:[%s484] ss:$4 sm:$0x3] %vm400, %v461
        %s486 = scalar_lea.vmem [#allocation2], 10
        %487 = vst.msk [vmem:[%s486] ss:$4 sm:$0x3] %vm400, %v463
        %s488 = scalar_lea.vmem [#allocation2], 18
        %489 = vst.msk [vmem:[%s488] ss:$4 sm:$0x3] %vm400, %v465
        %s490 = scalar_lea.vmem [#allocation2], 26
        %491 = vst.msk [vmem:[%s490] ss:$4 sm:$0x3] %vm400, %v467
        %s492 = scalar_lea.vmem [#allocation2], 34
        %493 = vst.msk [vmem:[%s492] ss:$4 sm:$0x3] %vm400, %v469
        %s494 = scalar_lea.vmem [#allocation2], 42
        %495 = vst.msk [vmem:[%s494] ss:$4 sm:$0x3] %vm400, %v471
        %s496 = scalar_lea.vmem [#allocation2], 50
        %497 = vst.msk [vmem:[%s496] ss:$4 sm:$0x3] %vm400, %v473
        %s498 = scalar_lea.vmem [#allocation2], 58
        %499 = vst.msk [vmem:[%s498] ss:$4 sm:$0x3] %vm400, %v475
        %v502 = vrot.slane %v361, 7
        %v503 = vsel %vm366, %v332, %v502
        %v504 = vsel %vm368, %v332, %v502
        %v505 = vrot.slane %v504, 1
        %v506 = vsel %vm371, %v332, %v502
        %v507 = vrot.slane %v506, 2
        %v508 = vsel %vm374, %v332, %v502
        %v509 = vrot.slane %v508, 3
        %v510 = vsel %vm377, %v332, %v502
        %v511 = vrot.slane %v510, 4
        %v512 = vsel %vm380, %v332, %v502
        %v513 = vrot.slane %v512, 5
        %v514 = vsel %vm383, %v332, %v502
        %v515 = vrot.slane %v514, 6
        %v516 = vsel %vm386, %v502, %v332
        %v517 = vrot.slane %v516, 7
        %s526 = scalar_lea.vmem [#allocation2], 3
        %527 = vst.msk [vmem:[%s526] ss:$4 sm:$0x3] %vm400, %v503
        %s528 = scalar_lea.vmem [#allocation2], 11
        %529 = vst.msk [vmem:[%s528] ss:$4 sm:$0x3] %vm400, %v505
        %s530 = scalar_lea.vmem [#allocation2], 19
        %531 = vst.msk [vmem:[%s530] ss:$4 sm:$0x3] %vm400, %v507
        %s532 = scalar_lea.vmem [#allocation2], 27
        %533 = vst.msk [vmem:[%s532] ss:$4 sm:$0x3] %vm400, %v509
        %s534 = scalar_lea.vmem [#allocation2], 35
        %535 = vst.msk [vmem:[%s534] ss:$4 sm:$0x3] %vm400, %v511
        %s536 = scalar_lea.vmem [#allocation2], 43
        %537 = vst.msk [vmem:[%s536] ss:$4 sm:$0x3] %vm400, %v513
        %s538 = scalar_lea.vmem [#allocation2], 51
        %539 = vst.msk [vmem:[%s538] ss:$4 sm:$0x3] %vm400, %v515
        %s540 = scalar_lea.vmem [#allocation2], 59
        %541 = vst.msk [vmem:[%s540] ss:$4 sm:$0x3] %vm400, %v517
        %v542 = vld [vmem:[#allocation11] sm:$0xff]
        %v543 = vld [vmem:[#allocation11 + $0x8] sm:$0xff]
        %v544 = vld [vmem:[#allocation11 + $0x10] sm:$0xff]
        %v545 = vld [vmem:[#allocation11 + $0x18] sm:$0xff]
        %v546 = vld [vmem:[#allocation4] sm:$0xf]
        %v547 = vld [vmem:[#allocation5] sm:$0xf]
        %v548 = vld [vmem:[#allocation2] sm:$0xff]
        %vm549 = vcmask 261120
        %v551 = vsel %vm549, %v546, 0
        %553 = vmatpush.msra.mxu0 0.0
        %554 = vmatpush.msra.mxu0 0.0
        %555 = vmatpush.msra.mxu0 0.0
        %556 = vmatpush.msra.mxu0 0.0
        %557 = vmatpush.msra.mxu0 0.0
        %558 = vmatpush.msra.mxu0 0.0
        %559 = vmatpush.msra.mxu0 0.0
        %560 = vmatpush.msra.mxu0 0.0
        %561 = vmatpush.msra.mxu0 0.0
        %562 = vmatpush.msra.mxu0 0.0
        %563 = vmatpush.msra.mxu0 0.0
        %564 = vmatpush.msra.mxu0 0.0
        %565 = vmatpush.msra.mxu0 %v545
        %566 = vmatpush.msra.mxu0 %v544
        %567 = vmatpush.msra.mxu0 %v543
        %568 = vmatpush.msra.mxu0 %v542
        %569 = vmatmul.f32.gmra.mxu0 %v551
        %v570 = vpop.f32.mrf.mxu0
        %v571 = vadd.f32 0.0, %v570
        %572 = vdwg.mxu0
        %v573 = vadd.f32 %v548, %v571
        %v574 = vxor.u32 %v573, 2147483648
        %v575 = vmul.f32 %v574, 1.442695
        %v576 = vpow.pop %v575
        %v577 = vadd.f32 %v576, 1.0
        %v578 = vrcp.pop %v577
        %v579 = vmul.f32 %v577, %v578
        %v580 = vsub.f32 1.0, %v579
        %v581 = vmul.f32 %v578, %v580
        %v582 = vadd.f32 %v578, %v581
        %vm583 = vweird.f32 %v577
        %vm584 = vweird.f32 %v578
        %vm585 = vmor %vm583, %vm584
        %v586 = vsel %vm585, %v578, %v582
        %v587 = vand.u32 2147483647, %v577
        %vm588 = vcmp.eq.f32.partialorder %v587, 8.507059e+37
        %v589 = vand.u32 %v577, 2147483648
        %v590 = vor.u32 1.1754944e-38, %v589
        %v591 = vsel %vm588, %v590, %v586
        %v592 = vmul.f32 1.0, %v591
        %v593 = vtanh.pop %v573
        %595 = vrot.lane.b32.xlu0 %v547, 32
        %v596 = vpop.permute.xlu0 %595
        %v598 = vmul.f32 %v592, %v596
        %600 = vrot.lane.b32.xlu0 %v593, 32
        %v601 = vpop.permute.xlu0 %600
        %v603 = vmul.f32 %v592, %v601
        %605 = vrot.lane.b32.xlu0 %v603, 32
        %v606 = vpop.permute.xlu0 %605
        %v608 = vadd.f32 %v598, %v606
        %v609 = vtanh.pop %v608
        %611 = vrot.lane.b32.xlu0 %v609, 32
        %v612 = vpop.permute.xlu0 %611
        %v614 = vmul.f32 %v592, %v612
        %616 = vst [vmem:[#allocation1] ss:$2 sm:$0xff] %v614
        %v617 = vld.sshfl [vmem:[#allocation1] sm:$0xff pattern:$0x75316420]
        %618 = vrot.lane.b32.xlu0 %v617, 64
        %v619 = vpop.permute.xlu0 %618
        %vm621 = vcmask 257024
        %622 = vst.msk [vmem:[#allocation3] sm:$0xf] %vm621, %v619
        %s623 = scalar_lea.vmem [#allocation2], 8
        %v624 = vld [vmem:[%s623] sm:$0xff]
        %625 = vst [vmem:[#allocation1] ss:$2 sm:$0xff] %v614
        %v626 = vld.sshfl [vmem:[#allocation1] sm:$0xff pattern:$0x75316420]
        %627 = vrot.lane.b32.xlu0 %v626, 64
        %v628 = vpop.permute.xlu0 %627
        %v629 = vsel %vm549, %v628, 0
        %631 = vmatpush.msra.mxu0 0.0
        %632 = vmatpush.msra.mxu0 0.0
        %633 = vmatpush.msra.mxu0 0.0
        %634 = vmatpush.msra.mxu0 0.0
        %635 = vmatpush.msra.mxu0 0.0
        %636 = vmatpush.msra.mxu0 0.0
        %637 = vmatpush.msra.mxu0 0.0
        %638 = vmatpush.msra.mxu0 0.0
        %639 = vmatpush.msra.mxu0 0.0
        %640 = vmatpush.msra.mxu0 0.0
        %641 = vmatpush.msra.mxu0 0.0
        %642 = vmatpush.msra.mxu0 0.0
        %643 = vmatpush.msra.mxu0 %v545
        %644 = vmatpush.msra.mxu0 %v544
        %645 = vmatpush.msra.mxu0 %v543
        %646 = vmatpush.msra.mxu0 %v542
        %647 = vmatmul.f32.gmra.mxu0 %v629
        %v648 = vpop.f32.mrf.mxu0
        %v649 = vadd.f32 0.0, %v648
        %650 = vdwg.mxu0
        %v651 = vadd.f32 %v624, %v649
        %v652 = vxor.u32 %v651, 2147483648
        %v653 = vmul.f32 %v652, 1.442695
        %v654 = vpow.pop %v653
        %v655 = vadd.f32 %v654, 1.0
        %v656 = vrcp.pop %v655
        %v657 = vmul.f32 %v655, %v656
        %v658 = vsub.f32 1.0, %v657
        %v659 = vmul.f32 %v656, %v658
        %v660 = vadd.f32 %v656, %v659
        %vm661 = vweird.f32 %v655
        %vm662 = vweird.f32 %v656
        %vm663 = vmor %vm661, %vm662
        %v664 = vsel %vm663, %v656, %v660
        %v665 = vand.u32 2147483647, %v655
        %vm666 = vcmp.eq.f32.partialorder %v665, 8.507059e+37
        %v667 = vand.u32 %v655, 2147483648
        %v668 = vor.u32 1.1754944e-38, %v667
        %v669 = vsel %vm666, %v668, %v664
        %v670 = vmul.f32 1.0, %v669
        %v671 = vtanh.pop %v651
        %v672 = vmul.f32 %v670, %v608
        %674 = vrot.lane.b32.xlu0 %v671, 32
        %v675 = vpop.permute.xlu0 %674
        %v677 = vmul.f32 %v670, %v675
        %679 = vrot.lane.b32.xlu0 %v677, 32
        %v680 = vpop.permute.xlu0 %679
        %v682 = vadd.f32 %v672, %v680
        %v683 = vtanh.pop %v682
        %685 = vrot.lane.b32.xlu0 %v683, 32
        %v686 = vpop.permute.xlu0 %685
        %v688 = vmul.f32 %v670, %v686
        %690 = vst [vmem:[#allocation1] ss:$2 sm:$0xff] %v688
        %v691 = vld.sshfl [vmem:[#allocation1] sm:$0xff pattern:$0x75316420]
        %692 = vrot.lane.b32.xlu0 %v691, 64
        %v693 = vpop.permute.xlu0 %692
        %s695 = scalar_lea.vmem [#allocation3], 4
        %696 = vst.msk [vmem:[%s695] sm:$0xf] %vm621, %v693
        %s697 = scalar_lea.vmem [#allocation2], 16
        %v698 = vld [vmem:[%s697] sm:$0xff]
        %699 = vst [vmem:[#allocation1] ss:$2 sm:$0xff] %v688
        %v700 = vld.sshfl [vmem:[#allocation1] sm:$0xff pattern:$0x75316420]
        %701 = vrot.lane.b32.xlu0 %v700, 64
        %v702 = vpop.permute.xlu0 %701
        %v703 = vsel %vm549, %v702, 0
        %705 = vmatpush.msra.mxu0 0.0
        %706 = vmatpush.msra.mxu0 0.0
        %707 = vmatpush.msra.mxu0 0.0
        %708 = vmatpush.msra.mxu0 0.0
        %709 = vmatpush.msra.mxu0 0.0
        %710 = vmatpush.msra.mxu0 0.0
        %711 = vmatpush.msra.mxu0 0.0
        %712 = vmatpush.msra.mxu0 0.0
        %713 = vmatpush.msra.mxu0 0.0
        %714 = vmatpush.msra.mxu0 0.0
        %715 = vmatpush.msra.mxu0 0.0
        %716 = vmatpush.msra.mxu0 0.0
        %717 = vmatpush.msra.mxu0 %v545
        %718 = vmatpush.msra.mxu0 %v544
        %719 = vmatpush.msra.mxu0 %v543
        %720 = vmatpush.msra.mxu0 %v542
        %721 = vmatmul.f32.gmra.mxu0 %v703
        %v722 = vpop.f32.mrf.mxu0
        %v723 = vadd.f32 0.0, %v722
        %724 = vdwg.mxu0
        %v725 = vadd.f32 %v698, %v723
        %v726 = vxor.u32 %v725, 2147483648
        %v727 = vmul.f32 %v726, 1.442695
        %v728 = vpow.pop %v727
        %v729 = vadd.f32 %v728, 1.0
        %v730 = vrcp.pop %v729
        %v731 = vmul.f32 %v729, %v730
        %v732 = vsub.f32 1.0, %v731
        %v733 = vmul.f32 %v730, %v732
        %v734 = vadd.f32 %v730, %v733
        %vm735 = vweird.f32 %v729
        %vm736 = vweird.f32 %v730
        %vm737 = vmor %vm735, %vm736
        %v738 = vsel %vm737, %v730, %v734
        %v739 = vand.u32 2147483647, %v729
        %vm740 = vcmp.eq.f32.partialorder %v739, 8.507059e+37
        %v741 = vand.u32 %v729, 2147483648
        %v742 = vor.u32 1.1754944e-38, %v741
        %v743 = vsel %vm740, %v742, %v738
        %v744 = vmul.f32 1.0, %v743
        %v745 = vtanh.pop %v725
        %v746 = vmul.f32 %v744, %v682
        %748 = vrot.lane.b32.xlu0 %v745, 32
        %v749 = vpop.permute.xlu0 %748
        %v751 = vmul.f32 %v744, %v749
        %753 = vrot.lane.b32.xlu0 %v751, 32
        %v754 = vpop.permute.xlu0 %753
        %v756 = vadd.f32 %v746, %v754
        %v757 = vtanh.pop %v756
        %759 = vrot.lane.b32.xlu0 %v757, 32
        %v760 = vpop.permute.xlu0 %759
        %v762 = vmul.f32 %v744, %v760
        %764 = vst [vmem:[#allocation1] ss:$2 sm:$0xff] %v762
        %v765 = vld.sshfl [vmem:[#allocation1] sm:$0xff pattern:$0x75316420]
        %766 = vrot.lane.b32.xlu0 %v765, 64
        %v767 = vpop.permute.xlu0 %766
        %s769 = scalar_lea.vmem [#allocation3], 8
        %770 = vst.msk [vmem:[%s769] sm:$0xf] %vm621, %v767
        %s771 = scalar_lea.vmem [#allocation2], 24
        %v772 = vld [vmem:[%s771] sm:$0xff]
        %773 = vst [vmem:[#allocation1] ss:$2 sm:$0xff] %v762
        %v774 = vld.sshfl [vmem:[#allocation1] sm:$0xff pattern:$0x75316420]
        %775 = vrot.lane.b32.xlu0 %v774, 64
        %v776 = vpop.permute.xlu0 %775
        %v777 = vsel %vm549, %v776, 0
        %779 = vmatpush.msra.mxu0 0.0
        %780 = vmatpush.msra.mxu0 0.0
        %781 = vmatpush.msra.mxu0 0.0
        %782 = vmatpush.msra.mxu0 0.0
        %783 = vmatpush.msra.mxu0 0.0
        %784 = vmatpush.msra.mxu0 0.0
        %785 = vmatpush.msra.mxu0 0.0
        %786 = vmatpush.msra.mxu0 0.0
        %787 = vmatpush.msra.mxu0 0.0
        %788 = vmatpush.msra.mxu0 0.0
        %789 = vmatpush.msra.mxu0 0.0
        %790 = vmatpush.msra.mxu0 0.0
        %791 = vmatpush.msra.mxu0 %v545
        %792 = vmatpush.msra.mxu0 %v544
        %793 = vmatpush.msra.mxu0 %v543
        %794 = vmatpush.msra.mxu0 %v542
        %795 = vmatmul.f32.gmra.mxu0 %v777
        %v796 = vpop.f32.mrf.mxu0
        %v797 = vadd.f32 0.0, %v796
        %798 = vdwg.mxu0
        %v799 = vadd.f32 %v772, %v797
        %v800 = vxor.u32 %v799, 2147483648
        %v801 = vmul.f32 %v800, 1.442695
        %v802 = vpow.pop %v801
        %v803 = vadd.f32 %v802, 1.0
        %v804 = vrcp.pop %v803
        %v805 = vmul.f32 %v803, %v804
        %v806 = vsub.f32 1.0, %v805
        %v807 = vmul.f32 %v804, %v806
        %v808 = vadd.f32 %v804, %v807
        %vm809 = vweird.f32 %v803
        %vm810 = vweird.f32 %v804
        %vm811 = vmor %vm809, %vm810
        %v812 = vsel %vm811, %v804, %v808
        %v813 = vand.u32 2147483647, %v803
        %vm814 = vcmp.eq.f32.partialorder %v813, 8.507059e+37
        %v815 = vand.u32 %v803, 2147483648
        %v816 = vor.u32 1.1754944e-38, %v815
        %v817 = vsel %vm814, %v816, %v812
        %v818 = vmul.f32 1.0, %v817
        %v819 = vtanh.pop %v799
        %v820 = vmul.f32 %v818, %v756
        %822 = vrot.lane.b32.xlu0 %v819, 32
        %v823 = vpop.permute.xlu0 %822
        %v825 = vmul.f32 %v818, %v823
        %827 = vrot.lane.b32.xlu0 %v825, 32
        %v828 = vpop.permute.xlu0 %827
        %v830 = vadd.f32 %v820, %v828
        %v831 = vtanh.pop %v830
        %833 = vrot.lane.b32.xlu0 %v831, 32
        %v834 = vpop.permute.xlu0 %833
        %v836 = vmul.f32 %v818, %v834
        %838 = vst [vmem:[#allocation1] ss:$2 sm:$0xff] %v836
        %v839 = vld.sshfl [vmem:[#allocation1] sm:$0xff pattern:$0x75316420]
        %840 = vrot.lane.b32.xlu0 %v839, 64
        %v841 = vpop.permute.xlu0 %840
        %s843 = scalar_lea.vmem [#allocation3], 12
        %844 = vst.msk [vmem:[%s843] sm:$0xf] %vm621, %v841
        %s845 = scalar_lea.vmem [#allocation2], 32
        %v846 = vld [vmem:[%s845] sm:$0xff]
        %847 = vst [vmem:[#allocation1] ss:$2 sm:$0xff] %v836
        %v848 = vld.sshfl [vmem:[#allocation1] sm:$0xff pattern:$0x75316420]
        %849 = vrot.lane.b32.xlu0 %v848, 64
        %v850 = vpop.permute.xlu0 %849
        %v851 = vsel %vm549, %v850, 0
        %853 = vmatpush.msra.mxu0 0.0
        %854 = vmatpush.msra.mxu0 0.0
        %855 = vmatpush.msra.mxu0 0.0
        %856 = vmatpush.msra.mxu0 0.0
        %857 = vmatpush.msra.mxu0 0.0
        %858 = vmatpush.msra.mxu0 0.0
        %859 = vmatpush.msra.mxu0 0.0
        %860 = vmatpush.msra.mxu0 0.0
        %861 = vmatpush.msra.mxu0 0.0
        %862 = vmatpush.msra.mxu0 0.0
        %863 = vmatpush.msra.mxu0 0.0
        %864 = vmatpush.msra.mxu0 0.0
        %865 = vmatpush.msra.mxu0 %v545
        %866 = vmatpush.msra.mxu0 %v544
        %867 = vmatpush.msra.mxu0 %v543
        %868 = vmatpush.msra.mxu0 %v542
        %869 = vmatmul.f32.gmra.mxu0 %v851
        %v870 = vpop.f32.mrf.mxu0
        %v871 = vadd.f32 0.0, %v870
        %872 = vdwg.mxu0
        %v873 = vadd.f32 %v846, %v871
        %v874 = vxor.u32 %v873, 2147483648
        %v875 = vmul.f32 %v874, 1.442695
        %v876 = vpow.pop %v875
        %v877 = vadd.f32 %v876, 1.0
        %v878 = vrcp.pop %v877
        %v879 = vmul.f32 %v877, %v878
        %v880 = vsub.f32 1.0, %v879
        %v881 = vmul.f32 %v878, %v880
        %v882 = vadd.f32 %v878, %v881
        %vm883 = vweird.f32 %v877
        %vm884 = vweird.f32 %v878
        %vm885 = vmor %vm883, %vm884
        %v886 = vsel %vm885, %v878, %v882
        %v887 = vand.u32 2147483647, %v877
        %vm888 = vcmp.eq.f32.partialorder %v887, 8.507059e+37
        %v889 = vand.u32 %v877, 2147483648
        %v890 = vor.u32 1.1754944e-38, %v889
        %v891 = vsel %vm888, %v890, %v886
        %v892 = vmul.f32 1.0, %v891
        %v893 = vtanh.pop %v873
        %v894 = vmul.f32 %v892, %v830
        %896 = vrot.lane.b32.xlu0 %v893, 32
        %v897 = vpop.permute.xlu0 %896
        %v899 = vmul.f32 %v892, %v897
        %901 = vrot.lane.b32.xlu0 %v899, 32
        %v902 = vpop.permute.xlu0 %901
        %v904 = vadd.f32 %v894, %v902
        %v905 = vtanh.pop %v904
        %907 = vrot.lane.b32.xlu0 %v905, 32
        %v908 = vpop.permute.xlu0 %907
        %v910 = vmul.f32 %v892, %v908
        %912 = vst [vmem:[#allocation1] ss:$2 sm:$0xff] %v910
        %v913 = vld.sshfl [vmem:[#allocation1] sm:$0xff pattern:$0x75316420]
        %914 = vrot.lane.b32.xlu0 %v913, 64
        %v915 = vpop.permute.xlu0 %914
        %s917 = scalar_lea.vmem [#allocation3], 16
        %918 = vst.msk [vmem:[%s917] sm:$0xf] %vm621, %v915
        %s919 = scalar_lea.vmem [#allocation2], 40
        %v920 = vld [vmem:[%s919] sm:$0xff]
        %921 = vst [vmem:[#allocation1] ss:$2 sm:$0xff] %v910
        %v922 = vld.sshfl [vmem:[#allocation1] sm:$0xff pattern:$0x75316420]
        %923 = vrot.lane.b32.xlu0 %v922, 64
        %v924 = vpop.permute.xlu0 %923
        %v925 = vsel %vm549, %v924, 0
        %927 = vmatpush.msra.mxu0 0.0
        %928 = vmatpush.msra.mxu0 0.0
        %929 = vmatpush.msra.mxu0 0.0
        %930 = vmatpush.msra.mxu0 0.0
        %931 = vmatpush.msra.mxu0 0.0
        %932 = vmatpush.msra.mxu0 0.0
        %933 = vmatpush.msra.mxu0 0.0
        %934 = vmatpush.msra.mxu0 0.0
        %935 = vmatpush.msra.mxu0 0.0
        %936 = vmatpush.msra.mxu0 0.0
        %937 = vmatpush.msra.mxu0 0.0
        %938 = vmatpush.msra.mxu0 0.0
        %939 = vmatpush.msra.mxu0 %v545
        %940 = vmatpush.msra.mxu0 %v544
        %941 = vmatpush.msra.mxu0 %v543
        %942 = vmatpush.msra.mxu0 %v542
        %943 = vmatmul.f32.gmra.mxu0 %v925
        %v944 = vpop.f32.mrf.mxu0
        %v945 = vadd.f32 0.0, %v944
        %946 = vdwg.mxu0
        %v947 = vadd.f32 %v920, %v945
        %v948 = vxor.u32 %v947, 2147483648
        %v949 = vmul.f32 %v948, 1.442695
        %v950 = vpow.pop %v949
        %v951 = vadd.f32 %v950, 1.0
        %v952 = vrcp.pop %v951
        %v953 = vmul.f32 %v951, %v952
        %v954 = vsub.f32 1.0, %v953
        %v955 = vmul.f32 %v952, %v954
        %v956 = vadd.f32 %v952, %v955
        %vm957 = vweird.f32 %v951
        %vm958 = vweird.f32 %v952
        %vm959 = vmor %vm957, %vm958
        %v960 = vsel %vm959, %v952, %v956
        %v961 = vand.u32 2147483647, %v951
        %vm962 = vcmp.eq.f32.partialorder %v961, 8.507059e+37
        %v963 = vand.u32 %v951, 2147483648
        %v964 = vor.u32 1.1754944e-38, %v963
        %v965 = vsel %vm962, %v964, %v960
        %v966 = vmul.f32 1.0, %v965
        %v967 = vtanh.pop %v947
        %v968 = vmul.f32 %v966, %v904
        %970 = vrot.lane.b32.xlu0 %v967, 32
        %v971 = vpop.permute.xlu0 %970
        %v973 = vmul.f32 %v966, %v971
        %975 = vrot.lane.b32.xlu0 %v973, 32
        %v976 = vpop.permute.xlu0 %975
        %v978 = vadd.f32 %v968, %v976
        %v979 = vtanh.pop %v978
        %981 = vrot.lane.b32.xlu0 %v979, 32
        %v982 = vpop.permute.xlu0 %981
        %v984 = vmul.f32 %v966, %v982
        %986 = vst [vmem:[#allocation1] ss:$2 sm:$0xff] %v984
        %v987 = vld.sshfl [vmem:[#allocation1] sm:$0xff pattern:$0x75316420]
        %988 = vrot.lane.b32.xlu0 %v987, 64
        %v989 = vpop.permute.xlu0 %988
        %s991 = scalar_lea.vmem [#allocation3], 20
        %992 = vst.msk [vmem:[%s991] sm:$0xf] %vm621, %v989
        %s993 = scalar_lea.vmem [#allocation2], 48
        %v994 = vld [vmem:[%s993] sm:$0xff]
        %995 = vst [vmem:[#allocation1] ss:$2 sm:$0xff] %v984
        %v996 = vld.sshfl [vmem:[#allocation1] sm:$0xff pattern:$0x75316420]
        %997 = vrot.lane.b32.xlu0 %v996, 64
        %v998 = vpop.permute.xlu0 %997
        %v999 = vsel %vm549, %v998, 0
        %1001 = vmatpush.msra.mxu0 0.0
        %1002 = vmatpush.msra.mxu0 0.0
        %1003 = vmatpush.msra.mxu0 0.0
        %1004 = vmatpush.msra.mxu0 0.0
        %1005 = vmatpush.msra.mxu0 0.0
        %1006 = vmatpush.msra.mxu0 0.0
        %1007 = vmatpush.msra.mxu0 0.0
        %1008 = vmatpush.msra.mxu0 0.0
        %1009 = vmatpush.msra.mxu0 0.0
        %1010 = vmatpush.msra.mxu0 0.0
        %1011 = vmatpush.msra.mxu0 0.0
        %1012 = vmatpush.msra.mxu0 0.0
        %1013 = vmatpush.msra.mxu0 %v545
        %1014 = vmatpush.msra.mxu0 %v544
        %1015 = vmatpush.msra.mxu0 %v543
        %1016 = vmatpush.msra.mxu0 %v542
        %1017 = vmatmul.f32.gmra.mxu0 %v999
        %v1018 = vpop.f32.mrf.mxu0
        %v1019 = vadd.f32 0.0, %v1018
        %1020 = vdwg.mxu0
        %v1021 = vadd.f32 %v994, %v1019
        %v1022 = vxor.u32 %v1021, 2147483648
        %v1023 = vmul.f32 %v1022, 1.442695
        %v1024 = vpow.pop %v1023
        %v1025 = vadd.f32 %v1024, 1.0
        %v1026 = vrcp.pop %v1025
        %v1027 = vmul.f32 %v1025, %v1026
        %v1028 = vsub.f32 1.0, %v1027
        %v1029 = vmul.f32 %v1026, %v1028
        %v1030 = vadd.f32 %v1026, %v1029
        %vm1031 = vweird.f32 %v1025
        %vm1032 = vweird.f32 %v1026
        %vm1033 = vmor %vm1031, %vm1032
        %v1034 = vsel %vm1033, %v1026, %v1030
        %v1035 = vand.u32 2147483647, %v1025
        %vm1036 = vcmp.eq.f32.partialorder %v1035, 8.507059e+37
        %v1037 = vand.u32 %v1025, 2147483648
        %v1038 = vor.u32 1.1754944e-38, %v1037
        %v1039 = vsel %vm1036, %v1038, %v1034
        %v1040 = vmul.f32 1.0, %v1039
        %v1041 = vtanh.pop %v1021
        %v1042 = vmul.f32 %v1040, %v978
        %1044 = vrot.lane.b32.xlu0 %v1041, 32
        %v1045 = vpop.permute.xlu0 %1044
        %v1047 = vmul.f32 %v1040, %v1045
        %1049 = vrot.lane.b32.xlu0 %v1047, 32
        %v1050 = vpop.permute.xlu0 %1049
        %v1052 = vadd.f32 %v1042, %v1050
        %v1053 = vtanh.pop %v1052
        %1055 = vrot.lane.b32.xlu0 %v1053, 32
        %v1056 = vpop.permute.xlu0 %1055
        %v1058 = vmul.f32 %v1040, %v1056
        %1060 = vst [vmem:[#allocation1] ss:$2 sm:$0xff] %v1058
        %v1061 = vld.sshfl [vmem:[#allocation1] sm:$0xff pattern:$0x75316420]
        %1062 = vrot.lane.b32.xlu0 %v1061, 64
        %v1063 = vpop.permute.xlu0 %1062
        %s1065 = scalar_lea.vmem [#allocation3], 24
        %1066 = vst.msk [vmem:[%s1065] sm:$0xf] %vm621, %v1063
        %s1067 = scalar_lea.vmem [#allocation2], 56
        %v1068 = vld [vmem:[%s1067] sm:$0xff]
        %1069 = vst [vmem:[#allocation1] ss:$2 sm:$0xff] %v1058
        %v1070 = vld.sshfl [vmem:[#allocation1] sm:$0xff pattern:$0x75316420]
        %1071 = vrot.lane.b32.xlu0 %v1070, 64
        %v1072 = vpop.permute.xlu0 %1071
        %v1073 = vsel %vm549, %v1072, 0
        %1075 = vmatpush.msra.mxu0 0.0
        %1076 = vmatpush.msra.mxu0 0.0
        %1077 = vmatpush.msra.mxu0 0.0
        %1078 = vmatpush.msra.mxu0 0.0
        %1079 = vmatpush.msra.mxu0 0.0
        %1080 = vmatpush.msra.mxu0 0.0
        %1081 = vmatpush.msra.mxu0 0.0
        %1082 = vmatpush.msra.mxu0 0.0
        %1083 = vmatpush.msra.mxu0 0.0
        %1084 = vmatpush.msra.mxu0 0.0
        %1085 = vmatpush.msra.mxu0 0.0
        %1086 = vmatpush.msra.mxu0 0.0
        %1087 = vmatpush.msra.mxu0 %v545
        %1088 = vmatpush.msra.mxu0 %v544
        %1089 = vmatpush.msra.mxu0 %v543
        %1090 = vmatpush.msra.mxu0 %v542
        %1091 = vmatmul.f32.gmra.mxu0 %v1073
        %v1092 = vpop.f32.mrf.mxu0
        %v1093 = vadd.f32 0.0, %v1092
        %1094 = vdwg.mxu0
        %v1095 = vadd.f32 %v1068, %v1093
        %v1096 = vxor.u32 %v1095, 2147483648
        %v1097 = vmul.f32 %v1096, 1.442695
        %v1098 = vpow.pop %v1097
        %v1099 = vadd.f32 %v1098, 1.0
        %v1100 = vrcp.pop %v1099
        %v1101 = vmul.f32 %v1099, %v1100
        %v1102 = vsub.f32 1.0, %v1101
        %v1103 = vmul.f32 %v1100, %v1102
        %v1104 = vadd.f32 %v1100, %v1103
        %vm1105 = vweird.f32 %v1099
        %vm1106 = vweird.f32 %v1100
        %vm1107 = vmor %vm1105, %vm1106
        %v1108 = vsel %vm1107, %v1100, %v1104
        %v1109 = vand.u32 2147483647, %v1099
        %vm1110 = vcmp.eq.f32.partialorder %v1109, 8.507059e+37
        %v1111 = vand.u32 %v1099, 2147483648
        %v1112 = vor.u32 1.1754944e-38, %v1111
        %v1113 = vsel %vm1110, %v1112, %v1108
        %v1114 = vmul.f32 1.0, %v1113
        %v1115 = vtanh.pop %v1095
        %v1116 = vmul.f32 %v1114, %v1052
        %1118 = vrot.lane.b32.xlu0 %v1115, 32
        %v1119 = vpop.permute.xlu0 %1118
        %v1121 = vmul.f32 %v1114, %v1119
        %1123 = vrot.lane.b32.xlu0 %v1121, 32
        %v1124 = vpop.permute.xlu0 %1123
        %v1126 = vadd.f32 %v1116, %v1124
        %v1127 = vtanh.pop %v1126
        %1129 = vrot.lane.b32.xlu0 %v1127, 32
        %v1130 = vpop.permute.xlu0 %1129
        %v1132 = vmul.f32 %v1114, %v1130
        %1134 = vst [vmem:[#allocation1] ss:$2 sm:$0xff] %v1132
        %v1135 = vld.sshfl [vmem:[#allocation1] sm:$0xff pattern:$0x75316420]
        %1136 = vrot.lane.b32.xlu0 %v1135, 64
        %v1137 = vpop.permute.xlu0 %1136
        %s1139 = scalar_lea.vmem [#allocation3], 28
        %1140 = vst.msk [vmem:[%s1139] sm:$0xf] %vm621, %v1137
        %1141 = vst [vmem:[#allocation1] ss:$2 sm:$0xff] %v1132
        %v1142 = vld.sshfl [vmem:[#allocation1] sm:$0xff pattern:$0x75316420]
        %1143 = vrot.lane.b32.xlu0 %v1142, 64
        %v1144 = vpop.permute.xlu0 %1143
        %1146 = vst.msk [vmem:[#allocation4] sm:$0xf] %vm621, %v1144
        %1148 = vst [vmem:[#allocation1] ss:$2 sm:$0xff] %v1126
        %v1149 = vld.sshfl [vmem:[#allocation1] sm:$0xff pattern:$0x75316420]
        %1150 = vrot.lane.b32.xlu0 %v1149, 96
        %v1151 = vpop.permute.xlu0 %1150
        %1153 = vst.msk [vmem:[#allocation5] sm:$0xf] %vm621, %v1151
        %v1154 = vld [vmem:[#allocation3] sm:$0x1]
        %v1155 = vld [vmem:[#allocation3 + $0x4] sm:$0x1]
        %v1156 = vld [vmem:[#allocation3 + $0x8] sm:$0x1]
        %v1157 = vld [vmem:[#allocation3 + $0xc] sm:$0x1]
        %v1158 = vld [vmem:[#allocation3 + $0x10] sm:$0x1]
        %v1159 = vld [vmem:[#allocation3 + $0x14] sm:$0x1]
        %v1160 = vld [vmem:[#allocation3 + $0x18] sm:$0x1]
        %v1161 = vld [vmem:[#allocation3 + $0x1c] sm:$0x1]
        %v1162 = vld [vmem:[#allocation2 + $0x4] sm:$0x1]
        %v1163 = vld [vmem:[#allocation2 + $0xc] sm:$0x1]
        %v1164 = vld [vmem:[#allocation2 + $0x14] sm:$0x1]
        %v1165 = vld [vmem:[#allocation2 + $0x1c] sm:$0x1]
        %v1166 = vld [vmem:[#allocation2 + $0x24] sm:$0x1]
        %v1167 = vld [vmem:[#allocation2 + $0x2c] sm:$0x1]
        %v1168 = vld [vmem:[#allocation2 + $0x34] sm:$0x1]
        %v1169 = vld [vmem:[#allocation2 + $0x3c] sm:$0x1]
        %v1170 = vadd.f32 %v1154, %v1162
        %v1171 = vadd.f32 %v1155, %v1163
        %v1172 = vadd.f32 %v1156, %v1164
        %v1173 = vadd.f32 %v1157, %v1165
        %v1174 = vadd.f32 %v1158, %v1166
        %v1175 = vadd.f32 %v1159, %v1167
        %v1176 = vadd.f32 %v1160, %v1168
        %v1177 = vadd.f32 %v1161, %v1169
        %v1186 = vrot.slane %v1171, 7
        %v1187 = vsel %vm368, %v1186, %v1170
        %v1188 = vrot.slane %v1172, 6
        %v1189 = vsel %vm371, %v1188, %v1187
        %v1190 = vrot.slane %v1173, 5
        %v1191 = vsel %vm374, %v1190, %v1189
        %v1192 = vrot.slane %v1174, 4
        %v1193 = vsel %vm377, %v1192, %v1191
        %v1194 = vrot.slane %v1175, 3
        %v1195 = vsel %vm380, %v1194, %v1193
        %v1196 = vrot.slane %v1176, 2
        %v1197 = vsel %vm383, %v1196, %v1195
        %v1198 = vrot.slane %v1177, 1
        %vm1199 = vcmask 1047559
        %v1200 = vsel %vm1199, %v1198, %v1197
        %1202 = vst.msk [vmem:[%s268] sm:$0xff] %vm549, %v1200
        %v1203 = vld [vmem:[#allocation3 + $0x1] sm:$0x1]
        %v1204 = vld [vmem:[#allocation3 + $0x5] sm:$0x1]
        %v1205 = vld [vmem:[#allocation3 + $0x9] sm:$0x1]
        %v1206 = vld [vmem:[#allocation3 + $0xd] sm:$0x1]
        %v1207 = vld [vmem:[#allocation3 + $0x11] sm:$0x1]
        %v1208 = vld [vmem:[#allocation3 + $0x15] sm:$0x1]
        %v1209 = vld [vmem:[#allocation3 + $0x19] sm:$0x1]
        %v1210 = vld [vmem:[#allocation3 + $0x1d] sm:$0x1]
        %v1211 = vld [vmem:[#allocation2 + $0x5] sm:$0x1]
        %v1212 = vld [vmem:[#allocation2 + $0xd] sm:$0x1]
        %v1213 = vld [vmem:[#allocation2 + $0x15] sm:$0x1]
        %v1214 = vld [vmem:[#allocation2 + $0x1d] sm:$0x1]
        %v1215 = vld [vmem:[#allocation2 + $0x25] sm:$0x1]
        %v1216 = vld [vmem:[#allocation2 + $0x2d] sm:$0x1]
        %v1217 = vld [vmem:[#allocation2 + $0x35] sm:$0x1]
        %v1218 = vld [vmem:[#allocation2 + $0x3d] sm:$0x1]
        %v1219 = vadd.f32 %v1203, %v1211
        %v1220 = vadd.f32 %v1204, %v1212
        %v1221 = vadd.f32 %v1205, %v1213
        %v1222 = vadd.f32 %v1206, %v1214
        %v1223 = vadd.f32 %v1207, %v1215
        %v1224 = vadd.f32 %v1208, %v1216
        %v1225 = vadd.f32 %v1209, %v1217
        %v1226 = vadd.f32 %v1210, %v1218
        %v1235 = vrot.slane %v1220, 7
        %v1236 = vsel %vm368, %v1235, %v1219
        %v1237 = vrot.slane %v1221, 6
        %v1238 = vsel %vm371, %v1237, %v1236
        %v1239 = vrot.slane %v1222, 5
        %v1240 = vsel %vm374, %v1239, %v1238
        %v1241 = vrot.slane %v1223, 4
        %v1242 = vsel %vm377, %v1241, %v1240
        %v1243 = vrot.slane %v1224, 3
        %v1244 = vsel %vm380, %v1243, %v1242
        %v1245 = vrot.slane %v1225, 2
        %v1246 = vsel %vm383, %v1245, %v1244
        %v1247 = vrot.slane %v1226, 1
        %v1248 = vsel %vm1199, %v1247, %v1246
        %s1250 = scalar_lea.vmem %s268, 8 [#allocation12]
        %1251 = vst.msk [vmem:[%s1250] sm:$0xff] %vm549, %v1248
        %v1252 = vld [vmem:[#allocation3 + $0x2] sm:$0x1]
        %v1253 = vld [vmem:[#allocation3 + $0x6] sm:$0x1]
        %v1254 = vld [vmem:[#allocation3 + $0xa] sm:$0x1]
        %v1255 = vld [vmem:[#allocation3 + $0xe] sm:$0x1]
        %v1256 = vld [vmem:[#allocation3 + $0x12] sm:$0x1]
        %v1257 = vld [vmem:[#allocation3 + $0x16] sm:$0x1]
        %v1258 = vld [vmem:[#allocation3 + $0x1a] sm:$0x1]
        %v1259 = vld [vmem:[#allocation3 + $0x1e] sm:$0x1]
        %v1260 = vld [vmem:[#allocation2 + $0x6] sm:$0x1]
        %v1261 = vld [vmem:[#allocation2 + $0xe] sm:$0x1]
        %v1262 = vld [vmem:[#allocation2 + $0x16] sm:$0x1]
        %v1263 = vld [vmem:[#allocation2 + $0x1e] sm:$0x1]
        %v1264 = vld [vmem:[#allocation2 + $0x26] sm:$0x1]
        %v1265 = vld [vmem:[#allocation2 + $0x2e] sm:$0x1]
        %v1266 = vld [vmem:[#allocation2 + $0x36] sm:$0x1]
        %v1267 = vld [vmem:[#allocation2 + $0x3e] sm:$0x1]
        %v1268 = vadd.f32 %v1252, %v1260
        %v1269 = vadd.f32 %v1253, %v1261
        %v1270 = vadd.f32 %v1254, %v1262
        %v1271 = vadd.f32 %v1255, %v1263
        %v1272 = vadd.f32 %v1256, %v1264
        %v1273 = vadd.f32 %v1257, %v1265
        %v1274 = vadd.f32 %v1258, %v1266
        %v1275 = vadd.f32 %v1259, %v1267
        %v1284 = vrot.slane %v1269, 7
        %v1285 = vsel %vm368, %v1284, %v1268
        %v1286 = vrot.slane %v1270, 6
        %v1287 = vsel %vm371, %v1286, %v1285
        %v1288 = vrot.slane %v1271, 5
        %v1289 = vsel %vm374, %v1288, %v1287
        %v1290 = vrot.slane %v1272, 4
        %v1291 = vsel %vm377, %v1290, %v1289
        %v1292 = vrot.slane %v1273, 3
        %v1293 = vsel %vm380, %v1292, %v1291
        %v1294 = vrot.slane %v1274, 2
        %v1295 = vsel %vm383, %v1294, %v1293
        %v1296 = vrot.slane %v1275, 1
        %v1297 = vsel %vm1199, %v1296, %v1295
        %s1299 = scalar_lea.vmem %s268, 16 [#allocation12]
        %1300 = vst.msk [vmem:[%s1299] sm:$0xff] %vm549, %v1297
        %v1301 = vld [vmem:[#allocation3 + $0x3] sm:$0x1]
        %v1302 = vld [vmem:[#allocation3 + $0x7] sm:$0x1]
        %v1303 = vld [vmem:[#allocation3 + $0xb] sm:$0x1]
        %v1304 = vld [vmem:[#allocation3 + $0xf] sm:$0x1]
        %v1305 = vld [vmem:[#allocation3 + $0x13] sm:$0x1]
        %v1306 = vld [vmem:[#allocation3 + $0x17] sm:$0x1]
        %v1307 = vld [vmem:[#allocation3 + $0x1b] sm:$0x1]
        %v1308 = vld [vmem:[#allocation3 + $0x1f] sm:$0x1]
        %v1309 = vld [vmem:[#allocation2 + $0x7] sm:$0x1]
        %v1310 = vld [vmem:[#allocation2 + $0xf] sm:$0x1]
        %v1311 = vld [vmem:[#allocation2 + $0x17] sm:$0x1]
        %v1312 = vld [vmem:[#allocation2 + $0x1f] sm:$0x1]
        %v1313 = vld [vmem:[#allocation2 + $0x27] sm:$0x1]
        %v1314 = vld [vmem:[#allocation2 + $0x2f] sm:$0x1]
        %v1315 = vld [vmem:[#allocation2 + $0x37] sm:$0x1]
        %v1316 = vld [vmem:[#allocation2 + $0x3f] sm:$0x1]
        %v1317 = vadd.f32 %v1301, %v1309
        %v1318 = vadd.f32 %v1302, %v1310
        %v1319 = vadd.f32 %v1303, %v1311
        %v1320 = vadd.f32 %v1304, %v1312
        %v1321 = vadd.f32 %v1305, %v1313
        %v1322 = vadd.f32 %v1306, %v1314
        %v1323 = vadd.f32 %v1307, %v1315
        %v1324 = vadd.f32 %v1308, %v1316
        %v1333 = vrot.slane %v1318, 7
        %v1334 = vsel %vm368, %v1333, %v1317
        %v1335 = vrot.slane %v1319, 6
        %v1336 = vsel %vm371, %v1335, %v1334
        %v1337 = vrot.slane %v1320, 5
        %v1338 = vsel %vm374, %v1337, %v1336
        %v1339 = vrot.slane %v1321, 4
        %v1340 = vsel %vm377, %v1339, %v1338
        %v1341 = vrot.slane %v1322, 3
        %v1342 = vsel %vm380, %v1341, %v1340
        %v1343 = vrot.slane %v1323, 2
        %v1344 = vsel %vm383, %v1343, %v1342
        %v1345 = vrot.slane %v1324, 1
        %v1346 = vsel %vm1199, %v1345, %v1344
        %s1348 = scalar_lea.vmem %s268, 24 [#allocation12]
        %1349 = vst.msk [vmem:[%s1348] sm:$0xff] %vm549, %v1346
        %s1350 = sand.u32 %s135, 1
        %s1351 = scalar_lea.sflag [#allocation8], %s1350
        %s1352 = sand.u32 %s135, 1
        %s1353 = smul.addr %s1352, 32
        %s1354 = scalar_lea.vmem [#allocation12], %s1353
        // Predicated region
        $region53: #{tpu_custom_call.1} parent=35 // pred_check
          %p1355 = pneg %p145
        $region54: #{tpu_custom_call.1} parent=35 // pred_check_branch
          %1357 = sbr.rel (%p1355) target = $region56
        $region55: #{tpu_custom_call.1} parent=35 // pred_region
          %s1358 = smul.u32 4, %s26
          %1360 = vsyncadd %s1351, 0
          %s1361 = smul.addr %s1358, 2
          %s1362 = sadd.s32 %s27, %s1361
          %s1363 = smul.addr %s1362, 8
          %s1364 = scalar_lea.hbm %s4, %s1363
          %s1365 = sshll.u32 %s1354, 4
          %s1366 = int_to_ptr.vmem [resolvable:$true] %s1365
          %s1367 = sshll.u32 %s1364, 4
          %s1368 = int_to_ptr.hbm [resolvable:$true] %s1367
          %1373 = dma.vmem_to_hbm [thread:$0]  %s1366, 512, %s1368, %s1351, 128, 256, 8
        $region56: #{tpu_custom_call.1} parent=35 // pred_fallthru
          _
      $region36: #{tpu_custom_call.1} parent=5 // pred_fallthru
        _
      %p1374 = scmp.le.s32.totalorder 2, %s17
      // Predicated region
      $region57: #{tpu_custom_call.1} parent=5 // pred_check
        %p1375 = pneg %p1374
      $region58: #{tpu_custom_call.1} parent=5 // pred_check_branch
        %1377 = sbr.rel (%p1375) target = $region60
      $region59: #{tpu_custom_call.1} parent=5 // pred_region
        %s1378 = ssub.s32 %s17, 2
        // Predicated region
        $region61: #{tpu_custom_call.1} parent=59 // pred_check
          %p1379 = pneg %p151
        $region62: #{tpu_custom_call.1} parent=59 // pred_check_branch
          %1381 = sbr.rel (%p1379) target = $region64
        $region63: #{tpu_custom_call.1} parent=59 // pred_region
          %s1382 = sand.u32 %s136, 1
          %s1383 = scalar_lea.sflag [#allocation8], %s1382
          %s1384 = sand.u32 %s136, 1
          %s1385 = smul.addr %s1384, 32
          %s1386 = scalar_lea.vmem [#allocation12], %s1385
          %1388 = dma.done %s1383, 512
        $region64: #{tpu_custom_call.1} parent=59 // pred_fallthru
          _
      $region60: #{tpu_custom_call.1} parent=5 // pred_fallthru
        _
    $region6: #{tpu_custom_call.1} parent=1 // loop_footer
      %s21 = sadd.s32 1, %s17
    $region7: #{tpu_custom_call.1} parent=1 // loop_footer_branch
      %16 = sbr.rel target = $region3
    $region8: #{tpu_custom_call.1} parent=1 // loop_exit
      _
    %1389 = vsyncpa [#allocation7], 1
    %s1390 = scalar_lea.sflag [#allocation7], 1
    %1391 = vsyncpa %s1390, 1
    %1392 = vsyncpa [#allocation10], 1
    %1393 = vsyncpa [#allocation8], 1
    %s1394 = scalar_lea.sflag [#allocation8], 1
    %1395 = vsyncpa %s1394, 1

</llo_original>
